<compile_context>
chip_gen: v7x
topology: tpu7x:2x2x1
jax: 0.10.0
libtpu: 0.0.40
codegen_flags: <defaults>
</compile_context>

<pallas_src>
import jax
import jax.numpy as jnp
from jax.experimental import pallas as pl
from jax.experimental.pallas import tpu as pltpu

LN_EPS = 1e-5
LEAKY_SLOPE = 0.01


def _round_up(a, m):
    return ((a + m - 1) // m) * m


def _make_kernel(n_modules, use_high_precision):
    prec = jax.lax.Precision.HIGHEST if use_high_precision else None

    def kernel(x_ref, cc_ref, cct_ref, msqc_ref, gamma_ref, beta_ref,
               w_ref, b_ref, o_ref):
        x = x_ref[...].astype(jnp.float32)                          # (Bt, D)
        d = x.shape[1]
        inv_d = 1.0 / d

        # --- shared statistics: only 2 XLU reductions per batch tile ---
        mu_x = jnp.sum(x, axis=-1, keepdims=True) * inv_d           # (Bt, 1)
        xc = x - mu_x                                               # (Bt, D)
        msq_x = jnp.sum(xc * xc, axis=-1, keepdims=True) * inv_d    # (Bt, 1)

        # Cross terms for ALL modules in one tiny MXU matmul (N lanes wide).
        dots = jnp.dot(xc, cct_ref[...], precision=prec,
                       preferred_element_type=jnp.float32) * (2.0 * inv_d)

        # var_i = E[xc^2] + E[cc_i^2] - (2/D)<xc, cc_i>; clamp vs cancellation.
        var_all = jnp.maximum(msq_x + msqc_ref[...] - dots, 0.0)    # (Bt, N)
        inv_all = jax.lax.rsqrt(var_all + LN_EPS)                   # (Bt, N) EUP

        # --- per-module affine + leaky-relu + ensemble sum (N small) ---
        ew_dtype = cc_ref.dtype            # elementwise dtype picked by wrapper
        xc_e = xc.astype(ew_dtype)
        acc = jnp.zeros(xc.shape, jnp.float32)
        # TODO(synk): switch to lax.fori_loop(unroll=2) if N ever grows past ~8.
        for i in range(n_modules):
            inv_i = inv_all[:, i:i + 1].astype(ew_dtype)            # (Bt, 1)
            y = (xc_e - cc_ref[i:i + 1, :]) * inv_i                 # (Bt, D)
            y = y * gamma_ref[i:i + 1, :] + beta_ref[i:i + 1, :]
            y = jnp.maximum(y, LEAKY_SLOPE * y)                     # leaky_relu
            acc = acc + y.astype(jnp.float32)

        # 1/N of the ensemble mean is folded into w_ref by the wrapper.
        out = jnp.dot(acc, w_ref[...], precision=prec,
                      preferred_element_type=jnp.float32) + b_ref[...]
        o_ref[...] = jnp.maximum(out, 0.0).astype(o_ref.dtype)

    return kernel


def _auto_b_tile(B, D):
    # ~6 live f32 (Bt, D) arrays: double-buffered x tile + xc/acc/y + slack.
    # 24 MiB budget keeps us in the >=256-row / ~85%-of-roofline regime while
    # fitting v7x's 64 MiB-per-TC VMEM (and v5e/v6e once the scoped limit is
    # raised via vmem_limit_bytes).
    budget = 24 << 20
    per_row = 6 * D * 4
    bt = (budget // per_row) // 8 * 8
    bt = max(8, min(bt, 2048))
    # Guarantee >= 2 grid steps where possible so dimension_semantics=
    # ("parallel",) actually gives both v7x TensorCores work.
    bt = min(bt, _round_up(max(-(-B // 2), 8), 8))
    return max(bt, 8)


def norm_ensemble(x, centers, gamma, beta, fc_w, fc_b, *,
                  b_tile=None, elementwise_dtype=jnp.float32):
    B, D = x.shape
    N = centers.shape[0]
    OUT = fc_w.shape[1]
    OUT_PAD = _round_up(max(OUT, 128), 128)
    ew = jnp.dtype(elementwise_dtype)

    # --- hoisted, batch-independent preprocessing (tiny, done once) ---
    centers = centers.astype(jnp.float32)
    mu_c = jnp.mean(centers, axis=-1, keepdims=True)          # (N, 1)
    cc = centers - mu_c                                       # (N, D)
    msq_c = jnp.mean(cc * cc, axis=-1)[None, :]               # (1, N) f32
    cc_t = cc.T                                               # (D, N) f32 MXU RHS

    # Elementwise-loop operands in the loop dtype (bf16 on v6e/v7x halves their
    # VMEM + doubles packed VALU throughput); stats/matmul operands stay f32.
    cc_e = cc.astype(ew)
    gamma_e = gamma.astype(ew)
    beta_e = beta.astype(ew)

    # 1/N folded into the padded, lane-dense FC weight (exact constant fold).
    w_pad = jnp.zeros((D, OUT_PAD), jnp.float32).at[:, :OUT].set(
        fc_w.astype(jnp.float32) * (1.0 / N))
    b_pad = jnp.zeros((1, OUT_PAD), jnp.float32).at[:, :OUT].set(
        jnp.reshape(fc_b, (1, OUT)).astype(jnp.float32))

    # --- batch tiling: ragged last block, no wrapper-side pad/cast of x ---
    if b_tile is None:
        b_tile = _auto_b_tile(B, D)
    b_tile = max(8, _round_up(b_tile, 8))
    n_steps = -(-B // b_tile)

    x_bytes = jnp.dtype(x.dtype).itemsize
    const_bytes = (cc_e.size * cc_e.dtype.itemsize
                   + gamma_e.size * gamma_e.dtype.itemsize
                   + beta_e.size * beta_e.dtype.itemsize
                   + cc_t.size * 4 + msq_c.size * 4
                   + w_pad.size * 4 + b_pad.size * 4)
    est = (2 * b_tile * D * x_bytes            # double-buffered x tile
           + 2 * b_tile * OUT_PAD * 4          # double-buffered out tile
           + 4 * b_tile * D * 4                # f32 temps (cast/xc/y/acc)
           + 2 * const_bytes)                  # resident params (worst case x2)
    vmem_limit = int(min(max(est * 5 // 4 + (4 << 20), 32 << 20), 64 << 20))

    kernel_hi = _make_kernel(N, True)
    kernel_lo = _make_kernel(N, False)

    def run(single_buffer_consts, kernel):
        const_kw = dict(pipeline_mode=pl.Buffered(1)) if single_buffer_consts else {}
        in_specs = [
            pl.BlockSpec((b_tile, D), lambda i: (i, 0)),                # x (tiled)
            pl.BlockSpec((N, D), lambda i: (0, 0), **const_kw),         # cc
            pl.BlockSpec((D, N), lambda i: (0, 0), **const_kw),         # cc^T
            pl.BlockSpec((1, N), lambda i: (0, 0), **const_kw),         # E[cc^2]
            pl.BlockSpec((N, D), lambda i: (0, 0), **const_kw),         # gamma
            pl.BlockSpec((N, D), lambda i: (0, 0), **const_kw),         # beta
            pl.BlockSpec((D, OUT_PAD), lambda i: (0, 0), **const_kw),   # fc_w / N
            pl.BlockSpec((1, OUT_PAD), lambda i: (0, 0), **const_kw),   # fc_b
        ]
        return pl.pallas_call(
            kernel,
            out_shape=jax.ShapeDtypeStruct((B, OUT_PAD), jnp.float32),
            grid=(n_steps,),
            in_specs=in_specs,
            out_specs=pl.BlockSpec((b_tile, OUT_PAD), lambda i: (i, 0)),
            compiler_params=pltpu.CompilerParams(
                dimension_semantics=("parallel",),
                vmem_limit_bytes=vmem_limit),
        )(x, cc_e, cc_t, msq_c, gamma_e, beta_e, w_pad, b_pad)

    # Preferred config first (single-buffered resident params + explicit MXU
    # precision); gracefully fall back if this JAX/Mosaic build rejects either,
    # so the kernel always compiles.  The fallback is the previously validated
    # configuration.
    out, last_err = None, None
    for single_buf, kern in ((True, kernel_hi), (False, kernel_hi), (False, kernel_lo)):
        try:
            out = run(single_buf, kern)
            break
        except Exception as e:   # lowering/compile fallback only
            last_err = e
            out = None
    if out is None:
        raise last_err

    return out[:, :OUT]


def norm_ensemble_ref(x, centers, gamma, beta, fc_w, fc_b):
    """Pure-JAX reference matching the PyTorch module."""
    n = centers.shape[0]
    acc = jnp.zeros_like(x)
    for i in range(n):
        off = x - centers[i][None, :]
        mean = jnp.mean(off, axis=-1, keepdims=True)
        var = jnp.mean((off - mean) ** 2, axis=-1, keepdims=True)
        y = (off - mean) / jnp.sqrt(var + LN_EPS) * gamma[i] + beta[i]
        y = jnp.where(y > 0, y, LEAKY_SLOPE * y)
        acc = acc + y
    feats = acc / n
    out = feats @ fc_w + jnp.reshape(fc_b, (1, -1))
    return jnp.maximum(out, 0.0)


if __name__ == "__main__":
    # Small shapes consistent with the module; b_tile=8 in test (2) forces
    # multiple grid steps and a ragged last block.
    B, D, N, OUT = 20, 128, 4, 32

    key = jax.random.PRNGKey(0)
    k_x, k_c, k_g, k_be, k_w, k_b = jax.random.split(key, 6)

    x = jax.random.normal(k_x, (B, D), dtype=jnp.float32)
    field_centers = jax.random.normal(k_c, (N, D), dtype=jnp.float32)

    # LayerNorm affine params (perturbed from default init to exercise the path).
    ln_gamma = 1.0 + 0.1 * jax.random.normal(k_g, (N, D), dtype=jnp.float32)
    ln_beta = 0.1 * jax.random.normal(k_be, (N, D), dtype=jnp.float32)

    # nn.Linear(D, OUT) default init: U(-1/sqrt(D), 1/sqrt(D)); stored transposed.
    bound = 1.0 / jnp.sqrt(jnp.float32(D))
    fc_w = jax.random.uniform(k_w, (D, OUT), jnp.float32, -bound, bound)
    fc_b = jax.random.uniform(k_b, (1, OUT), jnp.float32, -bound, bound)

    ref = norm_ensemble_ref(x, field_centers, ln_gamma, ln_beta, fc_w, fc_b)

    # 1) auto (VMEM-aware) tile, f32 elementwise path: tight tolerance.
    out = jax.block_until_ready(
        norm_ensemble(x, field_centers, ln_gamma, ln_beta, fc_w, fc_b))
    assert out.shape == (B, OUT)
    assert jnp.allclose(out, ref, atol=1e-4, rtol=1e-4), (
        float(jnp.max(jnp.abs(out - ref))))

    # 2) forced small tile: multiple grid steps + ragged (masked) last block.
    out8 = jax.block_until_ready(
        norm_ensemble(x, field_centers, ln_gamma, ln_beta, fc_w, fc_b, b_tile=8))
    assert jnp.allclose(out8, ref, atol=1e-4, rtol=1e-4), (
        float(jnp.max(jnp.abs(out8 - ref))))

    # 3) bf16 elementwise loop (v6e/v7x fast path); stats/matmuls stay f32.
    out_bf = jax.block_until_ready(
        norm_ensemble(x, field_centers, ln_gamma, ln_beta, fc_w, fc_b,
                      elementwise_dtype=jnp.bfloat16))
    assert out_bf.shape == (B, OUT)
    assert float(jnp.max(jnp.abs(out_bf - ref))) < 0.1

    print("KERNEL_OK")
</pallas_src>

<mosaic_0001>
module attributes {stable_mosaic.version = 11 : i64} {
  func.func @kernel(%arg0: i32, %arg1: memref<16x128xf32, #tpu.memory_space<vmem>>, %arg2: memref<4x128xf32, #tpu.memory_space<vmem>>, %arg3: memref<128x4xf32, #tpu.memory_space<vmem>>, %arg4: memref<1x4xf32, #tpu.memory_space<vmem>>, %arg5: memref<4x128xf32, #tpu.memory_space<vmem>>, %arg6: memref<4x128xf32, #tpu.memory_space<vmem>>, %arg7: memref<128x128xf32, #tpu.memory_space<vmem>>, %arg8: memref<1x128xf32, #tpu.memory_space<vmem>>, %arg9: memref<16x128xf32, #tpu.memory_space<vmem>>) attributes {dimension_semantics = [#tpu.dimension_semantics<parallel>], iteration_bounds = array<i64: 2>, scalar_prefetch = 0 : i64, scratch_operands = 0 : i64, tpu.core_type = #tpu.core_type<tc>, window_params = [{transform_indices = @transform_0, window_bounds = array<i64: 16, 128>}, {pipeline_mode = #tpu.pipeline_mode<synchronous>, transform_indices = @transform_1, window_bounds = array<i64: 4, 128>}, {pipeline_mode = #tpu.pipeline_mode<synchronous>, transform_indices = @transform_2, window_bounds = array<i64: 128, 4>}, {pipeline_mode = #tpu.pipeline_mode<synchronous>, transform_indices = @transform_3, window_bounds = array<i64: 1, 4>}, {pipeline_mode = #tpu.pipeline_mode<synchronous>, transform_indices = @transform_4, window_bounds = array<i64: 4, 128>}, {pipeline_mode = #tpu.pipeline_mode<synchronous>, transform_indices = @transform_5, window_bounds = array<i64: 4, 128>}, {pipeline_mode = #tpu.pipeline_mode<synchronous>, transform_indices = @transform_6, window_bounds = array<i64: 128, 128>}, {pipeline_mode = #tpu.pipeline_mode<synchronous>, transform_indices = @transform_7, window_bounds = array<i64: 1, 128>}, {transform_indices = @transform_8, window_bounds = array<i64: 16, 128>}]} {
    %c0 = arith.constant 0 : index
    %c0_0 = arith.constant 0 : index
    %0 = vector.load %arg1[%c0, %c0_0] : memref<16x128xf32, #tpu.memory_space<vmem>>, vector<16x128xf32>
    %cst = arith.constant dense<0.000000e+00> : vector<16xf32>
    %1 = vector.multi_reduction <add>, %0, %cst [1] : vector<16x128xf32> to vector<16xf32>
    %2 = vector.shape_cast %1 : vector<16xf32> to vector<16x1xf32>
    %cst_1 = arith.constant 7.812500e-03 : f32
    %3 = vector.broadcast %cst_1 : f32 to vector<16x1xf32>
    %4 = arith.mulf %2, %3 : vector<16x1xf32>
    %5 = vector.broadcast %4 : vector<16x1xf32> to vector<16x128xf32>
    %6 = arith.subf %0, %5 : vector<16x128xf32>
    %7 = arith.mulf %6, %6 : vector<16x128xf32>
    %cst_2 = arith.constant dense<0.000000e+00> : vector<16xf32>
    %8 = vector.multi_reduction <add>, %7, %cst_2 [1] : vector<16x128xf32> to vector<16xf32>
    %9 = vector.shape_cast %8 : vector<16xf32> to vector<16x1xf32>
    %cst_3 = arith.constant 7.812500e-03 : f32
    %10 = vector.broadcast %cst_3 : f32 to vector<16x1xf32>
    %11 = arith.mulf %9, %10 : vector<16x1xf32>
    %c0_4 = arith.constant 0 : index
    %c0_5 = arith.constant 0 : index
    %12 = vector.load %arg3[%c0_4, %c0_5] : memref<128x4xf32, #tpu.memory_space<vmem>>, vector<128x4xf32>
    %cst_6 = arith.constant dense<0.000000e+00> : vector<16x4xf32>
    %13 = tpu.matmul %6, %12, %cst_6 {dimension_numbers = #tpu.dot_dimension_numbers<[1], [0], [0], [1], [0, 0, 1, 1], [], []>, precision = #tpu.contract_precision<fp32>} : vector<16x128xf32>, vector<128x4xf32>, vector<16x4xf32> -> vector<16x4xf32>
    %cst_7 = arith.constant 1.562500e-02 : f32
    %14 = vector.broadcast %cst_7 : f32 to vector<16x4xf32>
    %15 = arith.mulf %13, %14 : vector<16x4xf32>
    %c0_8 = arith.constant 0 : index
    %c0_9 = arith.constant 0 : index
    %16 = vector.load %arg4[%c0_8, %c0_9] : memref<1x4xf32, #tpu.memory_space<vmem>>, vector<1x4xf32>
    %17 = vector.broadcast %11 : vector<16x1xf32> to vector<16x4xf32>
    %18 = vector.broadcast %16 : vector<1x4xf32> to vector<16x4xf32>
    %19 = arith.addf %17, %18 : vector<16x4xf32>
    %20 = arith.subf %19, %15 : vector<16x4xf32>
    %cst_10 = arith.constant 0.000000e+00 : f32
    %21 = vector.broadcast %cst_10 : f32 to vector<16x4xf32>
    %22 = arith.maximumf %20, %21 : vector<16x4xf32>
    %cst_11 = arith.constant 9.99999974E-6 : f32
    %23 = vector.broadcast %cst_11 : f32 to vector<16x4xf32>
    %24 = arith.addf %22, %23 : vector<16x4xf32>
    %25 = math.rsqrt %24 : vector<16x4xf32>
    %cst_12 = arith.constant 0.000000e+00 : f32
    %26 = vector.broadcast %cst_12 : f32 to vector<16x128xf32>
    %27 = vector.extract_strided_slice %25 {offsets = [0, 0], sizes = [16, 1], strides = [1, 1]} : vector<16x4xf32> to vector<16x1xf32>
    %c0_13 = arith.constant 0 : index
    %c0_14 = arith.constant 0 : index
    %28 = vector.load %arg2[%c0_13, %c0_14] : memref<4x128xf32, #tpu.memory_space<vmem>>, vector<1x128xf32>
    %29 = vector.broadcast %28 : vector<1x128xf32> to vector<16x128xf32>
    %30 = arith.subf %6, %29 : vector<16x128xf32>
    %31 = vector.broadcast %27 : vector<16x1xf32> to vector<16x128xf32>
    %32 = arith.mulf %30, %31 : vector<16x128xf32>
    %c0_15 = arith.constant 0 : index
    %c0_16 = arith.constant 0 : index
    %33 = vector.load %arg5[%c0_15, %c0_16] : memref<4x128xf32, #tpu.memory_space<vmem>>, vector<1x128xf32>
    %34 = vector.broadcast %33 : vector<1x128xf32> to vector<16x128xf32>
    %35 = arith.mulf %32, %34 : vector<16x128xf32>
    %c0_17 = arith.constant 0 : index
    %c0_18 = arith.constant 0 : index
    %36 = vector.load %arg6[%c0_17, %c0_18] : memref<4x128xf32, #tpu.memory_space<vmem>>, vector<1x128xf32>
    %37 = vector.broadcast %36 : vector<1x128xf32> to vector<16x128xf32>
    %38 = arith.addf %35, %37 : vector<16x128xf32>
    %cst_19 = arith.constant 0.00999999977 : f32
    %39 = vector.broadcast %cst_19 : f32 to vector<16x128xf32>
    %40 = arith.mulf %39, %38 : vector<16x128xf32>
    %41 = arith.maximumf %38, %40 : vector<16x128xf32>
    %42 = arith.addf %26, %41 : vector<16x128xf32>
    %43 = vector.extract_strided_slice %25 {offsets = [0, 1], sizes = [16, 1], strides = [1, 1]} : vector<16x4xf32> to vector<16x1xf32>
    %c1 = arith.constant 1 : index
    %c0_20 = arith.constant 0 : index
    %44 = vector.load %arg2[%c1, %c0_20] : memref<4x128xf32, #tpu.memory_space<vmem>>, vector<1x128xf32>
    %45 = vector.broadcast %44 : vector<1x128xf32> to vector<16x128xf32>
    %46 = arith.subf %6, %45 : vector<16x128xf32>
    %47 = vector.broadcast %43 : vector<16x1xf32> to vector<16x128xf32>
    %48 = arith.mulf %46, %47 : vector<16x128xf32>
    %c1_21 = arith.constant 1 : index
    %c0_22 = arith.constant 0 : index
    %49 = vector.load %arg5[%c1_21, %c0_22] : memref<4x128xf32, #tpu.memory_space<vmem>>, vector<1x128xf32>
    %50 = vector.broadcast %49 : vector<1x128xf32> to vector<16x128xf32>
    %51 = arith.mulf %48, %50 : vector<16x128xf32>
    %c1_23 = arith.constant 1 : index
    %c0_24 = arith.constant 0 : index
    %52 = vector.load %arg6[%c1_23, %c0_24] : memref<4x128xf32, #tpu.memory_space<vmem>>, vector<1x128xf32>
    %53 = vector.broadcast %52 : vector<1x128xf32> to vector<16x128xf32>
    %54 = arith.addf %51, %53 : vector<16x128xf32>
    %cst_25 = arith.constant 0.00999999977 : f32
    %55 = vector.broadcast %cst_25 : f32 to vector<16x128xf32>
    %56 = arith.mulf %55, %54 : vector<16x128xf32>
    %57 = arith.maximumf %54, %56 : vector<16x128xf32>
    %58 = arith.addf %42, %57 : vector<16x128xf32>
    %59 = vector.extract_strided_slice %25 {offsets = [0, 2], sizes = [16, 1], strides = [1, 1]} : vector<16x4xf32> to vector<16x1xf32>
    %c2 = arith.constant 2 : index
    %c0_26 = arith.constant 0 : index
    %60 = vector.load %arg2[%c2, %c0_26] : memref<4x128xf32, #tpu.memory_space<vmem>>, vector<1x128xf32>
    %61 = vector.broadcast %60 : vector<1x128xf32> to vector<16x128xf32>
    %62 = arith.subf %6, %61 : vector<16x128xf32>
    %63 = vector.broadcast %59 : vector<16x1xf32> to vector<16x128xf32>
    %64 = arith.mulf %62, %63 : vector<16x128xf32>
    %c2_27 = arith.constant 2 : index
    %c0_28 = arith.constant 0 : index
    %65 = vector.load %arg5[%c2_27, %c0_28] : memref<4x128xf32, #tpu.memory_space<vmem>>, vector<1x128xf32>
    %66 = vector.broadcast %65 : vector<1x128xf32> to vector<16x128xf32>
    %67 = arith.mulf %64, %66 : vector<16x128xf32>
    %c2_29 = arith.constant 2 : index
    %c0_30 = arith.constant 0 : index
    %68 = vector.load %arg6[%c2_29, %c0_30] : memref<4x128xf32, #tpu.memory_space<vmem>>, vector<1x128xf32>
    %69 = vector.broadcast %68 : vector<1x128xf32> to vector<16x128xf32>
    %70 = arith.addf %67, %69 : vector<16x128xf32>
    %cst_31 = arith.constant 0.00999999977 : f32
    %71 = vector.broadcast %cst_31 : f32 to vector<16x128xf32>
    %72 = arith.mulf %71, %70 : vector<16x128xf32>
    %73 = arith.maximumf %70, %72 : vector<16x128xf32>
    %74 = arith.addf %58, %73 : vector<16x128xf32>
    %75 = vector.extract_strided_slice %25 {offsets = [0, 3], sizes = [16, 1], strides = [1, 1]} : vector<16x4xf32> to vector<16x1xf32>
    %c3 = arith.constant 3 : index
    %c0_32 = arith.constant 0 : index
    %76 = vector.load %arg2[%c3, %c0_32] : memref<4x128xf32, #tpu.memory_space<vmem>>, vector<1x128xf32>
    %77 = vector.broadcast %76 : vector<1x128xf32> to vector<16x128xf32>
    %78 = arith.subf %6, %77 : vector<16x128xf32>
    %79 = vector.broadcast %75 : vector<16x1xf32> to vector<16x128xf32>
    %80 = arith.mulf %78, %79 : vector<16x128xf32>
    %c3_33 = arith.constant 3 : index
    %c0_34 = arith.constant 0 : index
    %81 = vector.load %arg5[%c3_33, %c0_34] : memref<4x128xf32, #tpu.memory_space<vmem>>, vector<1x128xf32>
    %82 = vector.broadcast %81 : vector<1x128xf32> to vector<16x128xf32>
    %83 = arith.mulf %80, %82 : vector<16x128xf32>
    %c3_35 = arith.constant 3 : index
    %c0_36 = arith.constant 0 : index
    %84 = vector.load %arg6[%c3_35, %c0_36] : memref<4x128xf32, #tpu.memory_space<vmem>>, vector<1x128xf32>
    %85 = vector.broadcast %84 : vector<1x128xf32> to vector<16x128xf32>
    %86 = arith.addf %83, %85 : vector<16x128xf32>
    %cst_37 = arith.constant 0.00999999977 : f32
    %87 = vector.broadcast %cst_37 : f32 to vector<16x128xf32>
    %88 = arith.mulf %87, %86 : vector<16x128xf32>
    %89 = arith.maximumf %86, %88 : vector<16x128xf32>
    %90 = arith.addf %74, %89 : vector<16x128xf32>
    %c0_38 = arith.constant 0 : index
    %c0_39 = arith.constant 0 : index
    %91 = vector.load %arg7[%c0_38, %c0_39] : memref<128x128xf32, #tpu.memory_space<vmem>>, vector<128x128xf32>
    %cst_40 = arith.constant dense<0.000000e+00> : vector<16x128xf32>
    %92 = tpu.matmul %90, %91, %cst_40 {dimension_numbers = #tpu.dot_dimension_numbers<[1], [0], [0], [1], [0, 0, 1, 1], [], []>, precision = #tpu.contract_precision<fp32>} : vector<16x128xf32>, vector<128x128xf32>, vector<16x128xf32> -> vector<16x128xf32>
    %c0_41 = arith.constant 0 : index
    %c0_42 = arith.constant 0 : index
    %93 = vector.load %arg8[%c0_41, %c0_42] : memref<1x128xf32, #tpu.memory_space<vmem>>, vector<1x128xf32>
    %94 = vector.broadcast %93 : vector<1x128xf32> to vector<16x128xf32>
    %95 = arith.addf %92, %94 : vector<16x128xf32>
    %cst_43 = arith.constant 0.000000e+00 : f32
    %96 = vector.broadcast %cst_43 : f32 to vector<16x128xf32>
    %97 = arith.maximumf %95, %96 : vector<16x128xf32>
    %c0_44 = arith.constant 0 : index
    %c0_45 = arith.constant 0 : index
    %98 = vector.load %arg9[%c0_44, %c0_45] : memref<16x128xf32, #tpu.memory_space<vmem>>, vector<16x128xf32>
    tpu.vector_store %arg9[%c0_44, %c0_45], %97 {strides = array<i32>} : memref<16x128xf32, #tpu.memory_space<vmem>>, vector<16x128xf32>,
    return
  }
  func.func @transform_0(%arg0: i32) -> (i32, i32) {
    %c0_i32 = arith.constant 0 : i32
    %c0_i32_0 = arith.constant 0 : i32
    return %arg0, %c0_i32 : i32, i32
  }
  func.func @transform_1(%arg0: i32) -> (i32, i32) {
    %c0_i32 = arith.constant 0 : i32
    %c0_i32_0 = arith.constant 0 : i32
    %c0_i32_1 = arith.constant 0 : i32
    return %c0_i32, %c0_i32_0 : i32, i32
  }
  func.func @transform_2(%arg0: i32) -> (i32, i32) {
    %c0_i32 = arith.constant 0 : i32
    %c0_i32_0 = arith.constant 0 : i32
    %c0_i32_1 = arith.constant 0 : i32
    return %c0_i32, %c0_i32_0 : i32, i32
  }
  func.func @transform_3(%arg0: i32) -> (i32, i32) {
    %c0_i32 = arith.constant 0 : i32
    %c0_i32_0 = arith.constant 0 : i32
    %c0_i32_1 = arith.constant 0 : i32
    return %c0_i32, %c0_i32_0 : i32, i32
  }
  func.func @transform_4(%arg0: i32) -> (i32, i32) {
    %c0_i32 = arith.constant 0 : i32
    %c0_i32_0 = arith.constant 0 : i32
    %c0_i32_1 = arith.constant 0 : i32
    return %c0_i32, %c0_i32_0 : i32, i32
  }
  func.func @transform_5(%arg0: i32) -> (i32, i32) {
    %c0_i32 = arith.constant 0 : i32
    %c0_i32_0 = arith.constant 0 : i32
    %c0_i32_1 = arith.constant 0 : i32
    return %c0_i32, %c0_i32_0 : i32, i32
  }
  func.func @transform_6(%arg0: i32) -> (i32, i32) {
    %c0_i32 = arith.constant 0 : i32
    %c0_i32_0 = arith.constant 0 : i32
    %c0_i32_1 = arith.constant 0 : i32
    return %c0_i32, %c0_i32_0 : i32, i32
  }
  func.func @transform_7(%arg0: i32) -> (i32, i32) {
    %c0_i32 = arith.constant 0 : i32
    %c0_i32_0 = arith.constant 0 : i32
    %c0_i32_1 = arith.constant 0 : i32
    return %c0_i32, %c0_i32_0 : i32, i32
  }
  func.func @transform_8(%arg0: i32) -> (i32, i32) {
    %c0_i32 = arith.constant 0 : i32
    %c0_i32_0 = arith.constant 0 : i32
    return %arg0, %c0_i32 : i32, i32
  }
}

module attributes {stable_mosaic.version = 11 : i64} {
  func.func @kernel(%arg0: i32, %arg1: memref<16x128xf32, #tpu.memory_space<vmem>>, %arg2: memref<4x128xf32, #tpu.memory_space<vmem>>, %arg3: memref<128x4xf32, #tpu.memory_space<vmem>>, %arg4: memref<1x4xf32, #tpu.memory_space<vmem>>, %arg5: memref<4x128xf32, #tpu.memory_space<vmem>>, %arg6: memref<4x128xf32, #tpu.memory_space<vmem>>, %arg7: memref<128x128xf32, #tpu.memory_space<vmem>>, %arg8: memref<1x128xf32, #tpu.memory_space<vmem>>, %arg9: memref<16x128xf32, #tpu.memory_space<vmem>>) attributes {dimension_semantics = [#tpu.dimension_semantics<parallel>], iteration_bounds = array<i64: 2>, scalar_prefetch = 0 : i64, scratch_operands = 0 : i64, tpu.core_type = #tpu.core_type<tc>, window_params = [{transform_indices = @transform_0, window_bounds = array<i64: 16, 128>}, {pipeline_mode = #tpu.pipeline_mode<synchronous>, transform_indices = @transform_1, window_bounds = array<i64: 4, 128>}, {pipeline_mode = #tpu.pipeline_mode<synchronous>, transform_indices = @transform_2, window_bounds = array<i64: 128, 4>}, {pipeline_mode = #tpu.pipeline_mode<synchronous>, transform_indices = @transform_3, window_bounds = array<i64: 1, 4>}, {pipeline_mode = #tpu.pipeline_mode<synchronous>, transform_indices = @transform_4, window_bounds = array<i64: 4, 128>}, {pipeline_mode = #tpu.pipeline_mode<synchronous>, transform_indices = @transform_5, window_bounds = array<i64: 4, 128>}, {pipeline_mode = #tpu.pipeline_mode<synchronous>, transform_indices = @transform_6, window_bounds = array<i64: 128, 128>}, {pipeline_mode = #tpu.pipeline_mode<synchronous>, transform_indices = @transform_7, window_bounds = array<i64: 1, 128>}, {transform_indices = @transform_8, window_bounds = array<i64: 16, 128>}]} {
    %c0 = arith.constant 0 : index
    %c0_0 = arith.constant 0 : index
    %0 = vector.load %arg1[%c0, %c0_0] : memref<16x128xf32, #tpu.memory_space<vmem>>, vector<16x128xf32>
    %cst = arith.constant dense<0.000000e+00> : vector<16xf32>
    %1 = vector.multi_reduction <add>, %0, %cst [1] : vector<16x128xf32> to vector<16xf32>
    %2 = vector.shape_cast %1 : vector<16xf32> to vector<16x1xf32>
    %cst_1 = arith.constant 7.812500e-03 : f32
    %3 = vector.broadcast %cst_1 : f32 to vector<16x1xf32>
    %4 = arith.mulf %2, %3 : vector<16x1xf32>
    %5 = vector.broadcast %4 : vector<16x1xf32> to vector<16x128xf32>
    %6 = arith.subf %0, %5 : vector<16x128xf32>
    %7 = arith.mulf %6, %6 : vector<16x128xf32>
    %cst_2 = arith.constant dense<0.000000e+00> : vector<16xf32>
    %8 = vector.multi_reduction <add>, %7, %cst_2 [1] : vector<16x128xf32> to vector<16xf32>
    %9 = vector.shape_cast %8 : vector<16xf32> to vector<16x1xf32>
    %cst_3 = arith.constant 7.812500e-03 : f32
    %10 = vector.broadcast %cst_3 : f32 to vector<16x1xf32>
    %11 = arith.mulf %9, %10 : vector<16x1xf32>
    %c0_4 = arith.constant 0 : index
    %c0_5 = arith.constant 0 : index
    %12 = vector.load %arg3[%c0_4, %c0_5] : memref<128x4xf32, #tpu.memory_space<vmem>>, vector<128x4xf32>
    %cst_6 = arith.constant dense<0.000000e+00> : vector<16x4xf32>
    %13 = tpu.matmul %6, %12, %cst_6 {dimension_numbers = #tpu.dot_dimension_numbers<[1], [0], [0], [1], [0, 0, 1, 1], [], []>, precision = #tpu.contract_precision<fp32>} : vector<16x128xf32>, vector<128x4xf32>, vector<16x4xf32> -> vector<16x4xf32>
    %cst_7 = arith.constant 1.562500e-02 : f32
    %14 = vector.broadcast %cst_7 : f32 to vector<16x4xf32>
    %15 = arith.mulf %13, %14 : vector<16x4xf32>
    %c0_8 = arith.constant 0 : index
    %c0_9 = arith.constant 0 : index
    %16 = vector.load %arg4[%c0_8, %c0_9] : memref<1x4xf32, #tpu.memory_space<vmem>>, vector<1x4xf32>
    %17 = vector.broadcast %11 : vector<16x1xf32> to vector<16x4xf32>
    %18 = vector.broadcast %16 : vector<1x4xf32> to vector<16x4xf32>
    %19 = arith.addf %17, %18 : vector<16x4xf32>
    %20 = arith.subf %19, %15 : vector<16x4xf32>
    %cst_10 = arith.constant 0.000000e+00 : f32
    %21 = vector.broadcast %cst_10 : f32 to vector<16x4xf32>
    %22 = arith.maximumf %20, %21 : vector<16x4xf32>
    %cst_11 = arith.constant 9.99999974E-6 : f32
    %23 = vector.broadcast %cst_11 : f32 to vector<16x4xf32>
    %24 = arith.addf %22, %23 : vector<16x4xf32>
    %25 = math.rsqrt %24 : vector<16x4xf32>
    %cst_12 = arith.constant 0.000000e+00 : f32
    %26 = vector.broadcast %cst_12 : f32 to vector<16x128xf32>
    %27 = vector.extract_strided_slice %25 {offsets = [0, 0], sizes = [16, 1], strides = [1, 1]} : vector<16x4xf32> to vector<16x1xf32>
    %c0_13 = arith.constant 0 : index
    %c0_14 = arith.constant 0 : index
    %28 = vector.load %arg2[%c0_13, %c0_14] : memref<4x128xf32, #tpu.memory_space<vmem>>, vector<1x128xf32>
    %29 = vector.broadcast %28 : vector<1x128xf32> to vector<16x128xf32>
    %30 = arith.subf %6, %29 : vector<16x128xf32>
    %31 = vector.broadcast %27 : vector<16x1xf32> to vector<16x128xf32>
    %32 = arith.mulf %30, %31 : vector<16x128xf32>
    %c0_15 = arith.constant 0 : index
    %c0_16 = arith.constant 0 : index
    %33 = vector.load %arg5[%c0_15, %c0_16] : memref<4x128xf32, #tpu.memory_space<vmem>>, vector<1x128xf32>
    %34 = vector.broadcast %33 : vector<1x128xf32> to vector<16x128xf32>
    %35 = arith.mulf %32, %34 : vector<16x128xf32>
    %c0_17 = arith.constant 0 : index
    %c0_18 = arith.constant 0 : index
    %36 = vector.load %arg6[%c0_17, %c0_18] : memref<4x128xf32, #tpu.memory_space<vmem>>, vector<1x128xf32>
    %37 = vector.broadcast %36 : vector<1x128xf32> to vector<16x128xf32>
    %38 = arith.addf %35, %37 : vector<16x128xf32>
    %cst_19 = arith.constant 0.00999999977 : f32
    %39 = vector.broadcast %cst_19 : f32 to vector<16x128xf32>
    %40 = arith.mulf %39, %38 : vector<16x128xf32>
    %41 = arith.maximumf %38, %40 : vector<16x128xf32>
    %42 = arith.addf %26, %41 : vector<16x128xf32>
    %43 = vector.extract_strided_slice %25 {offsets = [0, 1], sizes = [16, 1], strides = [1, 1]} : vector<16x4xf32> to vector<16x1xf32>
    %c1 = arith.constant 1 : index
    %c0_20 = arith.constant 0 : index
    %44 = vector.load %arg2[%c1, %c0_20] : memref<4x128xf32, #tpu.memory_space<vmem>>, vector<1x128xf32>
    %45 = vector.broadcast %44 : vector<1x128xf32> to vector<16x128xf32>
    %46 = arith.subf %6, %45 : vector<16x128xf32>
    %47 = vector.broadcast %43 : vector<16x1xf32> to vector<16x128xf32>
    %48 = arith.mulf %46, %47 : vector<16x128xf32>
    %c1_21 = arith.constant 1 : index
    %c0_22 = arith.constant 0 : index
    %49 = vector.load %arg5[%c1_21, %c0_22] : memref<4x128xf32, #tpu.memory_space<vmem>>, vector<1x128xf32>
    %50 = vector.broadcast %49 : vector<1x128xf32> to vector<16x128xf32>
    %51 = arith.mulf %48, %50 : vector<16x128xf32>
    %c1_23 = arith.constant 1 : index
    %c0_24 = arith.constant 0 : index
    %52 = vector.load %arg6[%c1_23, %c0_24] : memref<4x128xf32, #tpu.memory_space<vmem>>, vector<1x128xf32>
    %53 = vector.broadcast %52 : vector<1x128xf32> to vector<16x128xf32>
    %54 = arith.addf %51, %53 : vector<16x128xf32>
    %cst_25 = arith.constant 0.00999999977 : f32
    %55 = vector.broadcast %cst_25 : f32 to vector<16x128xf32>
    %56 = arith.mulf %55, %54 : vector<16x128xf32>
    %57 = arith.maximumf %54, %56 : vector<16x128xf32>
    %58 = arith.addf %42, %57 : vector<16x128xf32>
    %59 = vector.extract_strided_slice %25 {offsets = [0, 2], sizes = [16, 1], strides = [1, 1]} : vector<16x4xf32> to vector<16x1xf32>
    %c2 = arith.constant 2 : index
    %c0_26 = arith.constant 0 : index
    %60 = vector.load %arg2[%c2, %c0_26] : memref<4x128xf32, #tpu.memory_space<vmem>>, vector<1x128xf32>
    %61 = vector.broadcast %60 : vector<1x128xf32> to vector<16x128xf32>
    %62 = arith.subf %6, %61 : vector<16x128xf32>
    %63 = vector.broadcast %59 : vector<16x1xf32> to vector<16x128xf32>
    %64 = arith.mulf %62, %63 : vector<16x128xf32>
    %c2_27 = arith.constant 2 : index
    %c0_28 = arith.constant 0 : index
    %65 = vector.load %arg5[%c2_27, %c0_28] : memref<4x128xf32, #tpu.memory_space<vmem>>, vector<1x128xf32>
    %66 = vector.broadcast %65 : vector<1x128xf32> to vector<16x128xf32>
    %67 = arith.mulf %64, %66 : vector<16x128xf32>
    %c2_29 = arith.constant 2 : index
    %c0_30 = arith.constant 0 : index
    %68 = vector.load %arg6[%c2_29, %c0_30] : memref<4x128xf32, #tpu.memory_space<vmem>>, vector<1x128xf32>
    %69 = vector.broadcast %68 : vector<1x128xf32> to vector<16x128xf32>
    %70 = arith.addf %67, %69 : vector<16x128xf32>
    %cst_31 = arith.constant 0.00999999977 : f32
    %71 = vector.broadcast %cst_31 : f32 to vector<16x128xf32>
    %72 = arith.mulf %71, %70 : vector<16x128xf32>
    %73 = arith.maximumf %70, %72 : vector<16x128xf32>
    %74 = arith.addf %58, %73 : vector<16x128xf32>
    %75 = vector.extract_strided_slice %25 {offsets = [0, 3], sizes = [16, 1], strides = [1, 1]} : vector<16x4xf32> to vector<16x1xf32>
    %c3 = arith.constant 3 : index
    %c0_32 = arith.constant 0 : index
    %76 = vector.load %arg2[%c3, %c0_32] : memref<4x128xf32, #tpu.memory_space<vmem>>, vector<1x128xf32>
    %77 = vector.broadcast %76 : vector<1x128xf32> to vector<16x128xf32>
    %78 = arith.subf %6, %77 : vector<16x128xf32>
    %79 = vector.broadcast %75 : vector<16x1xf32> to vector<16x128xf32>
    %80 = arith.mulf %78, %79 : vector<16x128xf32>
    %c3_33 = arith.constant 3 : index
    %c0_34 = arith.constant 0 : index
    %81 = vector.load %arg5[%c3_33, %c0_34] : memref<4x128xf32, #tpu.memory_space<vmem>>, vector<1x128xf32>
    %82 = vector.broadcast %81 : vector<1x128xf32> to vector<16x128xf32>
    %83 = arith.mulf %80, %82 : vector<16x128xf32>
    %c3_35 = arith.constant 3 : index
    %c0_36 = arith.constant 0 : index
    %84 = vector.load %arg6[%c3_35, %c0_36] : memref<4x128xf32, #tpu.memory_space<vmem>>, vector<1x128xf32>
    %85 = vector.broadcast %84 : vector<1x128xf32> to vector<16x128xf32>
    %86 = arith.addf %83, %85 : vector<16x128xf32>
    %cst_37 = arith.constant 0.00999999977 : f32
    %87 = vector.broadcast %cst_37 : f32 to vector<16x128xf32>
    %88 = arith.mulf %87, %86 : vector<16x128xf32>
    %89 = arith.maximumf %86, %88 : vector<16x128xf32>
    %90 = arith.addf %74, %89 : vector<16x128xf32>
    %c0_38 = arith.constant 0 : index
    %c0_39 = arith.constant 0 : index
    %91 = vector.load %arg7[%c0_38, %c0_39] : memref<128x128xf32, #tpu.memory_space<vmem>>, vector<128x128xf32>
    %cst_40 = arith.constant dense<0.000000e+00> : vector<16x128xf32>
    %92 = tpu.matmul %90, %91, %cst_40 {dimension_numbers = #tpu.dot_dimension_numbers<[1], [0], [0], [1], [0, 0, 1, 1], [], []>, precision = #tpu.contract_precision<fp32>} : vector<16x128xf32>, vector<128x128xf32>, vector<16x128xf32> -> vector<16x128xf32>
    %c0_41 = arith.constant 0 : index
    %c0_42 = arith.constant 0 : index
    %93 = vector.load %arg8[%c0_41, %c0_42] : memref<1x128xf32, #tpu.memory_space<vmem>>, vector<1x128xf32>
    %94 = vector.broadcast %93 : vector<1x128xf32> to vector<16x128xf32>
    %95 = arith.addf %92, %94 : vector<16x128xf32>
    %cst_43 = arith.constant 0.000000e+00 : f32
    %96 = vector.broadcast %cst_43 : f32 to vector<16x128xf32>
    %97 = arith.maximumf %95, %96 : vector<16x128xf32>
    %c0_44 = arith.constant 0 : index
    %c0_45 = arith.constant 0 : index
    %98 = vector.load %arg9[%c0_44, %c0_45] : memref<16x128xf32, #tpu.memory_space<vmem>>, vector<16x128xf32>
    tpu.vector_store %arg9[%c0_44, %c0_45], %97 {strides = array<i32>} : memref<16x128xf32, #tpu.memory_space<vmem>>, vector<16x128xf32>,
    return
  }
  func.func @transform_0(%arg0: i32) -> (i32, i32) {
    %c0_i32 = arith.constant 0 : i32
    %c0_i32_0 = arith.constant 0 : i32
    return %arg0, %c0_i32 : i32, i32
  }
  func.func @transform_1(%arg0: i32) -> (i32, i32) {
    %c0_i32 = arith.constant 0 : i32
    %c0_i32_0 = arith.constant 0 : i32
    %c0_i32_1 = arith.constant 0 : i32
    return %c0_i32, %c0_i32_0 : i32, i32
  }
  func.func @transform_2(%arg0: i32) -> (i32, i32) {
    %c0_i32 = arith.constant 0 : i32
    %c0_i32_0 = arith.constant 0 : i32
    %c0_i32_1 = arith.constant 0 : i32
    return %c0_i32, %c0_i32_0 : i32, i32
  }
  func.func @transform_3(%arg0: i32) -> (i32, i32) {
    %c0_i32 = arith.constant 0 : i32
    %c0_i32_0 = arith.constant 0 : i32
    %c0_i32_1 = arith.constant 0 : i32
    return %c0_i32, %c0_i32_0 : i32, i32
  }
  func.func @transform_4(%arg0: i32) -> (i32, i32) {
    %c0_i32 = arith.constant 0 : i32
    %c0_i32_0 = arith.constant 0 : i32
    %c0_i32_1 = arith.constant 0 : i32
    return %c0_i32, %c0_i32_0 : i32, i32
  }
  func.func @transform_5(%arg0: i32) -> (i32, i32) {
    %c0_i32 = arith.constant 0 : i32
    %c0_i32_0 = arith.constant 0 : i32
    %c0_i32_1 = arith.constant 0 : i32
    return %c0_i32, %c0_i32_0 : i32, i32
  }
  func.func @transform_6(%arg0: i32) -> (i32, i32) {
    %c0_i32 = arith.constant 0 : i32
    %c0_i32_0 = arith.constant 0 : i32
    %c0_i32_1 = arith.constant 0 : i32
    return %c0_i32, %c0_i32_0 : i32, i32
  }
  func.func @transform_7(%arg0: i32) -> (i32, i32) {
    %c0_i32 = arith.constant 0 : i32
    %c0_i32_0 = arith.constant 0 : i32
    %c0_i32_1 = arith.constant 0 : i32
    return %c0_i32, %c0_i32_0 : i32, i32
  }
  func.func @transform_8(%arg0: i32) -> (i32, i32) {
    %c0_i32 = arith.constant 0 : i32
    %c0_i32_0 = arith.constant 0 : i32
    return %arg0, %c0_i32 : i32, i32
  }
}

module attributes {stable_mosaic.version = 11 : i64} {
  func.func @kernel(%arg0: i32, %arg1: memref<16x128xf32, #tpu.memory_space<vmem>>, %arg2: memref<4x128xf32, #tpu.memory_space<vmem>>, %arg3: memref<128x4xf32, #tpu.memory_space<vmem>>, %arg4: memref<1x4xf32, #tpu.memory_space<vmem>>, %arg5: memref<4x128xf32, #tpu.memory_space<vmem>>, %arg6: memref<4x128xf32, #tpu.memory_space<vmem>>, %arg7: memref<128x128xf32, #tpu.memory_space<vmem>>, %arg8: memref<1x128xf32, #tpu.memory_space<vmem>>, %arg9: memref<16x128xf32, #tpu.memory_space<vmem>>) attributes {dimension_semantics = [#tpu.dimension_semantics<parallel>], iteration_bounds = array<i64: 2>, scalar_prefetch = 0 : i64, scratch_operands = 0 : i64, tpu.core_type = #tpu.core_type<tc>, window_params = [{transform_indices = @transform_0, window_bounds = array<i64: 16, 128>}, {pipeline_mode = #tpu.pipeline_mode<synchronous>, transform_indices = @transform_1, window_bounds = array<i64: 4, 128>}, {pipeline_mode = #tpu.pipeline_mode<synchronous>, transform_indices = @transform_2, window_bounds = array<i64: 128, 4>}, {pipeline_mode = #tpu.pipeline_mode<synchronous>, transform_indices = @transform_3, window_bounds = array<i64: 1, 4>}, {pipeline_mode = #tpu.pipeline_mode<synchronous>, transform_indices = @transform_4, window_bounds = array<i64: 4, 128>}, {pipeline_mode = #tpu.pipeline_mode<synchronous>, transform_indices = @transform_5, window_bounds = array<i64: 4, 128>}, {pipeline_mode = #tpu.pipeline_mode<synchronous>, transform_indices = @transform_6, window_bounds = array<i64: 128, 128>}, {pipeline_mode = #tpu.pipeline_mode<synchronous>, transform_indices = @transform_7, window_bounds = array<i64: 1, 128>}, {transform_indices = @transform_8, window_bounds = array<i64: 16, 128>}]} {
    %c0 = arith.constant 0 : index
    %c0_0 = arith.constant 0 : index
    %0 = vector.load %arg1[%c0, %c0_0] : memref<16x128xf32, #tpu.memory_space<vmem>>, vector<16x128xf32>
    %cst = arith.constant dense<0.000000e+00> : vector<16xf32>
    %1 = vector.multi_reduction <add>, %0, %cst [1] : vector<16x128xf32> to vector<16xf32>
    %2 = vector.shape_cast %1 : vector<16xf32> to vector<16x1xf32>
    %cst_1 = arith.constant 7.812500e-03 : f32
    %3 = vector.broadcast %cst_1 : f32 to vector<16x1xf32>
    %4 = arith.mulf %2, %3 : vector<16x1xf32>
    %5 = vector.broadcast %4 : vector<16x1xf32> to vector<16x128xf32>
    %6 = arith.subf %0, %5 : vector<16x128xf32>
    %7 = arith.mulf %6, %6 : vector<16x128xf32>
    %cst_2 = arith.constant dense<0.000000e+00> : vector<16xf32>
    %8 = vector.multi_reduction <add>, %7, %cst_2 [1] : vector<16x128xf32> to vector<16xf32>
    %9 = vector.shape_cast %8 : vector<16xf32> to vector<16x1xf32>
    %cst_3 = arith.constant 7.812500e-03 : f32
    %10 = vector.broadcast %cst_3 : f32 to vector<16x1xf32>
    %11 = arith.mulf %9, %10 : vector<16x1xf32>
    %c0_4 = arith.constant 0 : index
    %c0_5 = arith.constant 0 : index
    %12 = vector.load %arg3[%c0_4, %c0_5] : memref<128x4xf32, #tpu.memory_space<vmem>>, vector<128x4xf32>
    %cst_6 = arith.constant dense<0.000000e+00> : vector<16x4xf32>
    %13 = tpu.matmul %6, %12, %cst_6 {dimension_numbers = #tpu.dot_dimension_numbers<[1], [0], [0], [1], [0, 0, 1, 1], [], []>} : vector<16x128xf32>, vector<128x4xf32>, vector<16x4xf32> -> vector<16x4xf32>
    %cst_7 = arith.constant 1.562500e-02 : f32
    %14 = vector.broadcast %cst_7 : f32 to vector<16x4xf32>
    %15 = arith.mulf %13, %14 : vector<16x4xf32>
    %c0_8 = arith.constant 0 : index
    %c0_9 = arith.constant 0 : index
    %16 = vector.load %arg4[%c0_8, %c0_9] : memref<1x4xf32, #tpu.memory_space<vmem>>, vector<1x4xf32>
    %17 = vector.broadcast %11 : vector<16x1xf32> to vector<16x4xf32>
    %18 = vector.broadcast %16 : vector<1x4xf32> to vector<16x4xf32>
    %19 = arith.addf %17, %18 : vector<16x4xf32>
    %20 = arith.subf %19, %15 : vector<16x4xf32>
    %cst_10 = arith.constant 0.000000e+00 : f32
    %21 = vector.broadcast %cst_10 : f32 to vector<16x4xf32>
    %22 = arith.maximumf %20, %21 : vector<16x4xf32>
    %cst_11 = arith.constant 9.99999974E-6 : f32
    %23 = vector.broadcast %cst_11 : f32 to vector<16x4xf32>
    %24 = arith.addf %22, %23 : vector<16x4xf32>
    %25 = math.rsqrt %24 : vector<16x4xf32>
    %cst_12 = arith.constant 0.000000e+00 : f32
    %26 = vector.broadcast %cst_12 : f32 to vector<16x128xf32>
    %27 = vector.extract_strided_slice %25 {offsets = [0, 0], sizes = [16, 1], strides = [1, 1]} : vector<16x4xf32> to vector<16x1xf32>
    %c0_13 = arith.constant 0 : index
    %c0_14 = arith.constant 0 : index
    %28 = vector.load %arg2[%c0_13, %c0_14] : memref<4x128xf32, #tpu.memory_space<vmem>>, vector<1x128xf32>
    %29 = vector.broadcast %28 : vector<1x128xf32> to vector<16x128xf32>
    %30 = arith.subf %6, %29 : vector<16x128xf32>
    %31 = vector.broadcast %27 : vector<16x1xf32> to vector<16x128xf32>
    %32 = arith.mulf %30, %31 : vector<16x128xf32>
    %c0_15 = arith.constant 0 : index
    %c0_16 = arith.constant 0 : index
    %33 = vector.load %arg5[%c0_15, %c0_16] : memref<4x128xf32, #tpu.memory_space<vmem>>, vector<1x128xf32>
    %34 = vector.broadcast %33 : vector<1x128xf32> to vector<16x128xf32>
    %35 = arith.mulf %32, %34 : vector<16x128xf32>
    %c0_17 = arith.constant 0 : index
    %c0_18 = arith.constant 0 : index
    %36 = vector.load %arg6[%c0_17, %c0_18] : memref<4x128xf32, #tpu.memory_space<vmem>>, vector<1x128xf32>
    %37 = vector.broadcast %36 : vector<1x128xf32> to vector<16x128xf32>
    %38 = arith.addf %35, %37 : vector<16x128xf32>
    %cst_19 = arith.constant 0.00999999977 : f32
    %39 = vector.broadcast %cst_19 : f32 to vector<16x128xf32>
    %40 = arith.mulf %39, %38 : vector<16x128xf32>
    %41 = arith.maximumf %38, %40 : vector<16x128xf32>
    %42 = arith.addf %26, %41 : vector<16x128xf32>
    %43 = vector.extract_strided_slice %25 {offsets = [0, 1], sizes = [16, 1], strides = [1, 1]} : vector<16x4xf32> to vector<16x1xf32>
    %c1 = arith.constant 1 : index
    %c0_20 = arith.constant 0 : index
    %44 = vector.load %arg2[%c1, %c0_20] : memref<4x128xf32, #tpu.memory_space<vmem>>, vector<1x128xf32>
    %45 = vector.broadcast %44 : vector<1x128xf32> to vector<16x128xf32>
    %46 = arith.subf %6, %45 : vector<16x128xf32>
    %47 = vector.broadcast %43 : vector<16x1xf32> to vector<16x128xf32>
    %48 = arith.mulf %46, %47 : vector<16x128xf32>
    %c1_21 = arith.constant 1 : index
    %c0_22 = arith.constant 0 : index
    %49 = vector.load %arg5[%c1_21, %c0_22] : memref<4x128xf32, #tpu.memory_space<vmem>>, vector<1x128xf32>
    %50 = vector.broadcast %49 : vector<1x128xf32> to vector<16x128xf32>
    %51 = arith.mulf %48, %50 : vector<16x128xf32>
    %c1_23 = arith.constant 1 : index
    %c0_24 = arith.constant 0 : index
    %52 = vector.load %arg6[%c1_23, %c0_24] : memref<4x128xf32, #tpu.memory_space<vmem>>, vector<1x128xf32>
    %53 = vector.broadcast %52 : vector<1x128xf32> to vector<16x128xf32>
    %54 = arith.addf %51, %53 : vector<16x128xf32>
    %cst_25 = arith.constant 0.00999999977 : f32
    %55 = vector.broadcast %cst_25 : f32 to vector<16x128xf32>
    %56 = arith.mulf %55, %54 : vector<16x128xf32>
    %57 = arith.maximumf %54, %56 : vector<16x128xf32>
    %58 = arith.addf %42, %57 : vector<16x128xf32>
    %59 = vector.extract_strided_slice %25 {offsets = [0, 2], sizes = [16, 1], strides = [1, 1]} : vector<16x4xf32> to vector<16x1xf32>
    %c2 = arith.constant 2 : index
    %c0_26 = arith.constant 0 : index
    %60 = vector.load %arg2[%c2, %c0_26] : memref<4x128xf32, #tpu.memory_space<vmem>>, vector<1x128xf32>
    %61 = vector.broadcast %60 : vector<1x128xf32> to vector<16x128xf32>
    %62 = arith.subf %6, %61 : vector<16x128xf32>
    %63 = vector.broadcast %59 : vector<16x1xf32> to vector<16x128xf32>
    %64 = arith.mulf %62, %63 : vector<16x128xf32>
    %c2_27 = arith.constant 2 : index
    %c0_28 = arith.constant 0 : index
    %65 = vector.load %arg5[%c2_27, %c0_28] : memref<4x128xf32, #tpu.memory_space<vmem>>, vector<1x128xf32>
    %66 = vector.broadcast %65 : vector<1x128xf32> to vector<16x128xf32>
    %67 = arith.mulf %64, %66 : vector<16x128xf32>
    %c2_29 = arith.constant 2 : index
    %c0_30 = arith.constant 0 : index
    %68 = vector.load %arg6[%c2_29, %c0_30] : memref<4x128xf32, #tpu.memory_space<vmem>>, vector<1x128xf32>
    %69 = vector.broadcast %68 : vector<1x128xf32> to vector<16x128xf32>
    %70 = arith.addf %67, %69 : vector<16x128xf32>
    %cst_31 = arith.constant 0.00999999977 : f32
    %71 = vector.broadcast %cst_31 : f32 to vector<16x128xf32>
    %72 = arith.mulf %71, %70 : vector<16x128xf32>
    %73 = arith.maximumf %70, %72 : vector<16x128xf32>
    %74 = arith.addf %58, %73 : vector<16x128xf32>
    %75 = vector.extract_strided_slice %25 {offsets = [0, 3], sizes = [16, 1], strides = [1, 1]} : vector<16x4xf32> to vector<16x1xf32>
    %c3 = arith.constant 3 : index
    %c0_32 = arith.constant 0 : index
    %76 = vector.load %arg2[%c3, %c0_32] : memref<4x128xf32, #tpu.memory_space<vmem>>, vector<1x128xf32>
    %77 = vector.broadcast %76 : vector<1x128xf32> to vector<16x128xf32>
    %78 = arith.subf %6, %77 : vector<16x128xf32>
    %79 = vector.broadcast %75 : vector<16x1xf32> to vector<16x128xf32>
    %80 = arith.mulf %78, %79 : vector<16x128xf32>
    %c3_33 = arith.constant 3 : index
    %c0_34 = arith.constant 0 : index
    %81 = vector.load %arg5[%c3_33, %c0_34] : memref<4x128xf32, #tpu.memory_space<vmem>>, vector<1x128xf32>
    %82 = vector.broadcast %81 : vector<1x128xf32> to vector<16x128xf32>
    %83 = arith.mulf %80, %82 : vector<16x128xf32>
    %c3_35 = arith.constant 3 : index
    %c0_36 = arith.constant 0 : index
    %84 = vector.load %arg6[%c3_35, %c0_36] : memref<4x128xf32, #tpu.memory_space<vmem>>, vector<1x128xf32>
    %85 = vector.broadcast %84 : vector<1x128xf32> to vector<16x128xf32>
    %86 = arith.addf %83, %85 : vector<16x128xf32>
    %cst_37 = arith.constant 0.00999999977 : f32
    %87 = vector.broadcast %cst_37 : f32 to vector<16x128xf32>
    %88 = arith.mulf %87, %86 : vector<16x128xf32>
    %89 = arith.maximumf %86, %88 : vector<16x128xf32>
    %90 = arith.addf %74, %89 : vector<16x128xf32>
    %c0_38 = arith.constant 0 : index
    %c0_39 = arith.constant 0 : index
    %91 = vector.load %arg7[%c0_38, %c0_39] : memref<128x128xf32, #tpu.memory_space<vmem>>, vector<128x128xf32>
    %cst_40 = arith.constant dense<0.000000e+00> : vector<16x128xf32>
    %92 = tpu.matmul %90, %91, %cst_40 {dimension_numbers = #tpu.dot_dimension_numbers<[1], [0], [0], [1], [0, 0, 1, 1], [], []>} : vector<16x128xf32>, vector<128x128xf32>, vector<16x128xf32> -> vector<16x128xf32>
    %c0_41 = arith.constant 0 : index
    %c0_42 = arith.constant 0 : index
    %93 = vector.load %arg8[%c0_41, %c0_42] : memref<1x128xf32, #tpu.memory_space<vmem>>, vector<1x128xf32>
    %94 = vector.broadcast %93 : vector<1x128xf32> to vector<16x128xf32>
    %95 = arith.addf %92, %94 : vector<16x128xf32>
    %cst_43 = arith.constant 0.000000e+00 : f32
    %96 = vector.broadcast %cst_43 : f32 to vector<16x128xf32>
    %97 = arith.maximumf %95, %96 : vector<16x128xf32>
    %c0_44 = arith.constant 0 : index
    %c0_45 = arith.constant 0 : index
    %98 = vector.load %arg9[%c0_44, %c0_45] : memref<16x128xf32, #tpu.memory_space<vmem>>, vector<16x128xf32>
    tpu.vector_store %arg9[%c0_44, %c0_45], %97 {strides = array<i32>} : memref<16x128xf32, #tpu.memory_space<vmem>>, vector<16x128xf32>,
    return
  }
  func.func @transform_0(%arg0: i32) -> (i32, i32) {
    %c0_i32 = arith.constant 0 : i32
    %c0_i32_0 = arith.constant 0 : i32
    return %arg0, %c0_i32 : i32, i32
  }
  func.func @transform_1(%arg0: i32) -> (i32, i32) {
    %c0_i32 = arith.constant 0 : i32
    %c0_i32_0 = arith.constant 0 : i32
    %c0_i32_1 = arith.constant 0 : i32
    return %c0_i32, %c0_i32_0 : i32, i32
  }
  func.func @transform_2(%arg0: i32) -> (i32, i32) {
    %c0_i32 = arith.constant 0 : i32
    %c0_i32_0 = arith.constant 0 : i32
    %c0_i32_1 = arith.constant 0 : i32
    return %c0_i32, %c0_i32_0 : i32, i32
  }
  func.func @transform_3(%arg0: i32) -> (i32, i32) {
    %c0_i32 = arith.constant 0 : i32
    %c0_i32_0 = arith.constant 0 : i32
    %c0_i32_1 = arith.constant 0 : i32
    return %c0_i32, %c0_i32_0 : i32, i32
  }
  func.func @transform_4(%arg0: i32) -> (i32, i32) {
    %c0_i32 = arith.constant 0 : i32
    %c0_i32_0 = arith.constant 0 : i32
    %c0_i32_1 = arith.constant 0 : i32
    return %c0_i32, %c0_i32_0 : i32, i32
  }
  func.func @transform_5(%arg0: i32) -> (i32, i32) {
    %c0_i32 = arith.constant 0 : i32
    %c0_i32_0 = arith.constant 0 : i32
    %c0_i32_1 = arith.constant 0 : i32
    return %c0_i32, %c0_i32_0 : i32, i32
  }
  func.func @transform_6(%arg0: i32) -> (i32, i32) {
    %c0_i32 = arith.constant 0 : i32
    %c0_i32_0 = arith.constant 0 : i32
    %c0_i32_1 = arith.constant 0 : i32
    return %c0_i32, %c0_i32_0 : i32, i32
  }
  func.func @transform_7(%arg0: i32) -> (i32, i32) {
    %c0_i32 = arith.constant 0 : i32
    %c0_i32_0 = arith.constant 0 : i32
    %c0_i32_1 = arith.constant 0 : i32
    return %c0_i32, %c0_i32_0 : i32, i32
  }
  func.func @transform_8(%arg0: i32) -> (i32, i32) {
    %c0_i32 = arith.constant 0 : i32
    %c0_i32_0 = arith.constant 0 : i32
    return %arg0, %c0_i32 : i32, i32
  }
}

</mosaic_0001>

<llo_original>
// kernel: tpu_custom_call.1
$region0: #{tpu_custom_call.1}
  #allocation0 [shape = 'u32[]', space=smem, size = 0x4, offset = 0x4, fixed_abs, tag = 'smem constant byte address 0x4 - core index']
  #allocation1 [shape = 'u32[144,128]{1,0:T(1,128)}', space=vmem, size = 0x12000, scoped, tag = 'internal scratch']
  %s0 = inlined_call_operand.vmem [shape: f32[20,128], index: 0, kind: input, shape index: {}]
  %s1 = inlined_call_operand.hbm [shape: f32[4,128], index: 1, kind: input, shape index: {}]
  %s2 = inlined_call_operand.vmem [shape: f32[128,4], index: 2, kind: input, shape index: {}]
  %s3 = inlined_call_operand.vmem [shape: f32[1,4], index: 3, kind: input, shape index: {}]
  %s4 = inlined_call_operand.hbm [shape: f32[4,128], index: 4, kind: input, shape index: {}]
  %s5 = inlined_call_operand.hbm [shape: f32[4,128], index: 5, kind: input, shape index: {}]
  %s6 = inlined_call_operand.vmem [shape: f32[128,128], index: 6, kind: input, shape index: {}]
  %s7 = inlined_call_operand.vmem [shape: f32[1,128], index: 7, kind: input, shape index: {}]
  %s8 = inlined_call_operand.hbm [shape: f32[20,128], index: 8, kind: output, shape index: {}]
  %s9 = sld [smem:[#allocation0]]
  $region77: #{tpu_custom_call.1} parent=0
    _
  %s11 = ssub.s32 1, %s9
  %s12 = scalar_select 0, %s11, %s9
  $region1: #{tpu_custom_call.1} parent=0
    #allocation2 [shape = 'u8[2048]{0}', space=vmem, size = 0x800, scoped, tag = 'input window, operand 1, single buffered']
    #allocation3 [shape = 's32[2]{0}', space=sflag, size = 0x8, scoped, tag = 'scoped memory for tpu_custom_call.1']
    #allocation4 [shape = 's32[2]{0}', space=sflag, size = 0x8, scoped, tag = 'scoped memory for tpu_custom_call.1']
    #allocation5 [shape = 'u8[2048]{0}', space=vmem, size = 0x800, scoped, tag = 'input window, operand 4, single buffered']
    #allocation6 [shape = 's32[1]{0}', space=sflag, size = 0x4, scoped, tag = 'scoped memory for tpu_custom_call.1']
    #allocation7 [shape = 'u8[2048]{0}', space=vmem, size = 0x800, scoped, tag = 'input window, operand 5, single buffered']
    #allocation8 [shape = 'u8[16384]{0}', space=vmem, size = 0x4000, scoped, tag = 'output window, operand 0']
    %13 = vsyncpa [#allocation3], 0
    %14 = vsyncpa [#allocation6], 0
    %15 = vsyncpa [#allocation4], 0
    %s16 = scalar_lea.sflag [#allocation4], 1
    %17 = vsyncpa %s16, 0
    loop: start=0, step=1, limit=4
    $region2: #{tpu_custom_call.1} parent=1 // loop_pre_header
      _
    $region3: #{tpu_custom_call.1} parent=1 // loop_header
      %s19 = sphi 0, %s23
      %p20 = scmp.ge.s32.totalorder %s19, 4
      %s29 = sphi 0, %s31
      %s32 = sphi 0, %s29
      %s33 = sphi 0, %s32
      %s49 = sphi 0, %s33
      %s53 = sphi 0, %s53
      %s55 = sphi 0, %s53
      %s56 = sphi 0, %s55
      %s70 = sphi 0, %s56
      %s74 = sphi 0, %s74
      %s76 = sphi 0, %s74
      %s77 = sphi 0, %s76
      %s91 = sphi 0, %s77
      %s95 = sphi 0, %s95
      %s97 = sphi 0, %s95
      %s98 = sphi 0, %s97
      %s112 = sphi 0, %s98
      %s116 = sphi 0, %s116
      %s118 = sphi 0, %s116
      %s119 = sphi 0, %s118
      %s133 = sphi 0, %s119
      %s137 = sphi 0, %s137
      %s139 = sphi 0, %s137
      %s140 = sphi 0, %s139
      %s154 = sphi 0, %s140
      %s158 = sphi 0, %s158
      %s160 = sphi 0, %s158
      %s161 = sphi 0, %s160
      %s175 = sphi 0, %s161
      %s179 = sphi 0, %s179
      %s181 = sphi 0, %s179
      %s182 = sphi 0, %s181
      %s196 = sphi 0, %s182
      %s202 = sphi 0, %s204
      %s205 = sphi 0, %s202
      %s206 = sphi 0, %s205
      %s222 = sphi 0, %s206
    $region4: #{tpu_custom_call.1} parent=1 // loop_header_branch
      %22 = sbr.rel (%p20) target = $region8
    $region5: #{tpu_custom_call.1} parent=1 // loop_body
      %s24 = ssub.s32 %s19, 1
      %s25 = ssub.s32 %s19, 2
      %s26 = sadd.s32 %s19, 1
      %s27 = ssub.s32 %s19, %s26
      %p28 = scmp.eq.s32.totalorder %s27, 0
      %s30 = sadd.s32 %s29, 1
      %s31 = scalar_select %p28, %s29, %s30
      %p34 = pneg %p28
      %p35 = scmp.eq.s32.totalorder %s19, 1
      %p36 = por %p34, %p35
      %p37 = scmp.ne.s32.totalorder %s29, %s32
      %p38 = scmp.eq.s32.totalorder %s19, 0
      %p39 = por %p37, %p38
      %p40 = scmp.ne.s32.totalorder %s29, %s32
      %p41 = scmp.eq.s32.totalorder %s24, 1
      %p42 = por %p40, %p41
      %p43 = scmp.ne.s32.totalorder %s32, %s33
      %p44 = scmp.eq.s32.totalorder %s24, 0
      %p45 = por %p43, %p44
      %p46 = scmp.ne.s32.totalorder %s32, %s33
      %p47 = scmp.eq.s32.totalorder %s25, 1
      %p48 = por %p46, %p47
      %p50 = scmp.ne.s32.totalorder %s33, %s49
      %p51 = scmp.eq.s32.totalorder %s25, 0
      %p52 = por %p50, %p51
      %s54 = sadd.s32 %s53, 1
      %p57 = scmp.eq.s32.totalorder %s19, 1
      %p58 = scmp.ne.s32.totalorder %s53, %s55
      %p59 = scmp.eq.s32.totalorder %s19, 0
      %p60 = por %p58, %p59
      %p61 = scmp.ne.s32.totalorder %s53, %s55
      %p62 = scmp.eq.s32.totalorder %s24, 1
      %p63 = por %p61, %p62
      %p64 = scmp.ne.s32.totalorder %s55, %s56
      %p65 = scmp.eq.s32.totalorder %s24, 0
      %p66 = por %p64, %p65
      %p67 = scmp.ne.s32.totalorder %s55, %s56
      %p68 = scmp.eq.s32.totalorder %s25, 1
      %p69 = por %p67, %p68
      %p71 = scmp.ne.s32.totalorder %s56, %s70
      %p72 = scmp.eq.s32.totalorder %s25, 0
      %p73 = por %p71, %p72
      %s75 = sadd.s32 %s74, 1
      %p78 = scmp.eq.s32.totalorder %s19, 1
      %p79 = scmp.ne.s32.totalorder %s74, %s76
      %p80 = scmp.eq.s32.totalorder %s19, 0
      %p81 = por %p79, %p80
      %p82 = scmp.ne.s32.totalorder %s74, %s76
      %p83 = scmp.eq.s32.totalorder %s24, 1
      %p84 = por %p82, %p83
      %p85 = scmp.ne.s32.totalorder %s76, %s77
      %p86 = scmp.eq.s32.totalorder %s24, 0
      %p87 = por %p85, %p86
      %p88 = scmp.ne.s32.totalorder %s76, %s77
      %p89 = scmp.eq.s32.totalorder %s25, 1
      %p90 = por %p88, %p89
      %p92 = scmp.ne.s32.totalorder %s77, %s91
      %p93 = scmp.eq.s32.totalorder %s25, 0
      %p94 = por %p92, %p93
      %s96 = sadd.s32 %s95, 1
      %p99 = scmp.eq.s32.totalorder %s19, 1
      %p100 = scmp.ne.s32.totalorder %s95, %s97
      %p101 = scmp.eq.s32.totalorder %s19, 0
      %p102 = por %p100, %p101
      %p103 = scmp.ne.s32.totalorder %s95, %s97
      %p104 = scmp.eq.s32.totalorder %s24, 1
      %p105 = por %p103, %p104
      %p106 = scmp.ne.s32.totalorder %s97, %s98
      %p107 = scmp.eq.s32.totalorder %s24, 0
      %p108 = por %p106, %p107
      %p109 = scmp.ne.s32.totalorder %s97, %s98
      %p110 = scmp.eq.s32.totalorder %s25, 1
      %p111 = por %p109, %p110
      %p113 = scmp.ne.s32.totalorder %s98, %s112
      %p114 = scmp.eq.s32.totalorder %s25, 0
      %p115 = por %p113, %p114
      %s117 = sadd.s32 %s116, 1
      %p120 = scmp.eq.s32.totalorder %s19, 1
      %p121 = scmp.ne.s32.totalorder %s116, %s118
      %p122 = scmp.eq.s32.totalorder %s19, 0
      %p123 = por %p121, %p122
      %p124 = scmp.ne.s32.totalorder %s116, %s118
      %p125 = scmp.eq.s32.totalorder %s24, 1
      %p126 = por %p124, %p125
      %p127 = scmp.ne.s32.totalorder %s118, %s119
      %p128 = scmp.eq.s32.totalorder %s24, 0
      %p129 = por %p127, %p128
      %p130 = scmp.ne.s32.totalorder %s118, %s119
      %p131 = scmp.eq.s32.totalorder %s25, 1
      %p132 = por %p130, %p131
      %p134 = scmp.ne.s32.totalorder %s119, %s133
      %p135 = scmp.eq.s32.totalorder %s25, 0
      %p136 = por %p134, %p135
      %s138 = sadd.s32 %s137, 1
      %p141 = scmp.eq.s32.totalorder %s19, 1
      %p142 = scmp.ne.s32.totalorder %s137, %s139
      %p143 = scmp.eq.s32.totalorder %s19, 0
      %p144 = por %p142, %p143
      %p145 = scmp.ne.s32.totalorder %s137, %s139
      %p146 = scmp.eq.s32.totalorder %s24, 1
      %p147 = por %p145, %p146
      %p148 = scmp.ne.s32.totalorder %s139, %s140
      %p149 = scmp.eq.s32.totalorder %s24, 0
      %p150 = por %p148, %p149
      %p151 = scmp.ne.s32.totalorder %s139, %s140
      %p152 = scmp.eq.s32.totalorder %s25, 1
      %p153 = por %p151, %p152
      %p155 = scmp.ne.s32.totalorder %s140, %s154
      %p156 = scmp.eq.s32.totalorder %s25, 0
      %p157 = por %p155, %p156
      %s159 = sadd.s32 %s158, 1
      %p162 = scmp.eq.s32.totalorder %s19, 1
      %p163 = scmp.ne.s32.totalorder %s158, %s160
      %p164 = scmp.eq.s32.totalorder %s19, 0
      %p165 = por %p163, %p164
      %p166 = scmp.ne.s32.totalorder %s158, %s160
      %p167 = scmp.eq.s32.totalorder %s24, 1
      %p168 = por %p166, %p167
      %p169 = scmp.ne.s32.totalorder %s160, %s161
      %p170 = scmp.eq.s32.totalorder %s24, 0
      %p171 = por %p169, %p170
      %p172 = scmp.ne.s32.totalorder %s160, %s161
      %p173 = scmp.eq.s32.totalorder %s25, 1
      %p174 = por %p172, %p173
      %p176 = scmp.ne.s32.totalorder %s161, %s175
      %p177 = scmp.eq.s32.totalorder %s25, 0
      %p178 = por %p176, %p177
      %s180 = sadd.s32 %s179, 1
      %p183 = scmp.eq.s32.totalorder %s19, 1
      %p184 = scmp.ne.s32.totalorder %s179, %s181
      %p185 = scmp.eq.s32.totalorder %s19, 0
      %p186 = por %p184, %p185
      %p187 = scmp.ne.s32.totalorder %s179, %s181
      %p188 = scmp.eq.s32.totalorder %s24, 1
      %p189 = por %p187, %p188
      %p190 = scmp.ne.s32.totalorder %s181, %s182
      %p191 = scmp.eq.s32.totalorder %s24, 0
      %p192 = por %p190, %p191
      %p193 = scmp.ne.s32.totalorder %s181, %s182
      %p194 = scmp.eq.s32.totalorder %s25, 1
      %p195 = por %p193, %p194
      %p197 = scmp.ne.s32.totalorder %s182, %s196
      %p198 = scmp.eq.s32.totalorder %s25, 0
      %p199 = por %p197, %p198
      %s200 = ssub.s32 %s19, %s26
      %p201 = scmp.eq.s32.totalorder %s200, 0
      %s203 = sadd.s32 %s202, 1
      %s204 = scalar_select %p201, %s202, %s203
      %p207 = pneg %p201
      %p208 = scmp.eq.s32.totalorder %s19, 1
      %p209 = por %p207, %p208
      %p210 = scmp.ne.s32.totalorder %s202, %s205
      %p211 = scmp.eq.s32.totalorder %s19, 0
      %p212 = por %p210, %p211
      %p213 = scmp.ne.s32.totalorder %s202, %s205
      %p214 = scmp.eq.s32.totalorder %s24, 1
      %p215 = por %p213, %p214
      %p216 = scmp.ne.s32.totalorder %s205, %s206
      %p217 = scmp.eq.s32.totalorder %s24, 0
      %p218 = por %p216, %p217
      %p219 = scmp.ne.s32.totalorder %s205, %s206
      %p220 = scmp.eq.s32.totalorder %s25, 1
      %p221 = por %p219, %p220
      %p223 = scmp.ne.s32.totalorder %s206, %s222
      %p224 = scmp.eq.s32.totalorder %s25, 0
      %p225 = por %p223, %p224
      %p226 = scmp.le.s32.totalorder 1, %s19
      %p227 = scmp.lt.s32.totalorder %s19, 3
      %p228 = pnand %p226, %p227
      %p229 = pneg %p228
      // Predicated region
      $region9: #{tpu_custom_call.1} parent=5 // pred_check
        _
      $region10: #{tpu_custom_call.1} parent=5 // pred_check_branch
        %231 = sbr.rel (%p228) target = $region12
      $region11: #{tpu_custom_call.1} parent=5 // pred_region
        %s232 = ssub.s32 %s19, 1
        // Predicated region
        $region13: #{tpu_custom_call.1} parent=11 // pred_check
          %p233 = pneg %p66
        $region14: #{tpu_custom_call.1} parent=11 // pred_check_branch
          %235 = sbr.rel (%p233) target = $region16
        $region15: #{tpu_custom_call.1} parent=11 // pred_region
          %s237 = ssub.s32 64, 64
          %238 = vsyncadd [#allocation3], %s237
          %s240 = sshll.u32 [#allocation2], 4
          %s241 = int_to_ptr.vmem [resolvable:$true] %s240
          %243 = dma.hbm_to_vmem [thread:$0]  %s1, 64, %s241, [#allocation3]
        $region16: #{tpu_custom_call.1} parent=11 // pred_fallthru
          _
        // Predicated region
        $region17: #{tpu_custom_call.1} parent=11 // pred_check
          %p244 = pneg %p87
        $region18: #{tpu_custom_call.1} parent=11 // pred_check_branch
          %246 = sbr.rel (%p244) target = $region20
        $region19: #{tpu_custom_call.1} parent=11 // pred_region
          _
        $region20: #{tpu_custom_call.1} parent=11 // pred_fallthru
          _
        // Predicated region
        $region21: #{tpu_custom_call.1} parent=11 // pred_check
          %p247 = pneg %p108
        $region22: #{tpu_custom_call.1} parent=11 // pred_check_branch
          %249 = sbr.rel (%p247) target = $region24
        $region23: #{tpu_custom_call.1} parent=11 // pred_region
          _
        $region24: #{tpu_custom_call.1} parent=11 // pred_fallthru
          _
        // Predicated region
        $region25: #{tpu_custom_call.1} parent=11 // pred_check
          %p250 = pneg %p129
        $region26: #{tpu_custom_call.1} parent=11 // pred_check_branch
          %252 = sbr.rel (%p250) target = $region28
        $region27: #{tpu_custom_call.1} parent=11 // pred_region
          %s254 = ssub.s32 64, 64
          %255 = vsyncadd [#allocation6], %s254
          %s257 = sshll.u32 [#allocation5], 4
          %s258 = int_to_ptr.vmem [resolvable:$true] %s257
          %260 = dma.hbm_to_vmem [thread:$0]  %s4, 64, %s258, [#allocation6]
        $region28: #{tpu_custom_call.1} parent=11 // pred_fallthru
          _
        // Predicated region
        $region29: #{tpu_custom_call.1} parent=11 // pred_check
          %p261 = pneg %p150
        $region30: #{tpu_custom_call.1} parent=11 // pred_check_branch
          %263 = sbr.rel (%p261) target = $region32
        $region31: #{tpu_custom_call.1} parent=11 // pred_region
          %s265 = ssub.s32 64, 64
          %266 = vsyncadd [#allocation6], %s265
          %s268 = sshll.u32 [#allocation7], 4
          %s269 = int_to_ptr.vmem [resolvable:$true] %s268
          %271 = dma.hbm_to_vmem [thread:$0]  %s5, 64, %s269, [#allocation6]
        $region32: #{tpu_custom_call.1} parent=11 // pred_fallthru
          _
        // Predicated region
        $region33: #{tpu_custom_call.1} parent=11 // pred_check
          %p272 = pneg %p171
        $region34: #{tpu_custom_call.1} parent=11 // pred_check_branch
          %274 = sbr.rel (%p272) target = $region36
        $region35: #{tpu_custom_call.1} parent=11 // pred_region
          _
        $region36: #{tpu_custom_call.1} parent=11 // pred_fallthru
          _
        // Predicated region
        $region37: #{tpu_custom_call.1} parent=11 // pred_check
          %p275 = pneg %p192
        $region38: #{tpu_custom_call.1} parent=11 // pred_check_branch
          %277 = sbr.rel (%p275) target = $region40
        $region39: #{tpu_custom_call.1} parent=11 // pred_region
          _
        $region40: #{tpu_custom_call.1} parent=11 // pred_fallthru
          _
      $region12: #{tpu_custom_call.1} parent=5 // pred_fallthru
        _
      %p278 = scmp.lt.s32.totalorder %s19, 2
      // Predicated region
      $region41: #{tpu_custom_call.1} parent=5 // pred_check
        %p279 = pneg %p278
      $region42: #{tpu_custom_call.1} parent=5 // pred_check_branch
        %281 = sbr.rel (%p279) target = $region44
      $region43: #{tpu_custom_call.1} parent=5 // pred_region
        // Predicated region
        $region45: #{tpu_custom_call.1} parent=43 // pred_check
          %p282 = pneg %p39
        $region46: #{tpu_custom_call.1} parent=43 // pred_check_branch
          %284 = sbr.rel (%p282) target = $region48
        $region47: #{tpu_custom_call.1} parent=43 // pred_region
          %s285 = smul.u32 2, %s19
          %s286 = ssub.s32 3, %s285
          %p287 = scmp.lt.s32.totalorder %s286, 2
          %s288 = scalar_select %p287, %s286, 2
          %s289 = smul.u32 128, %s288
          %p290 = scmp.lt.s32.totalorder %s285, 2
          %s291 = scalar_select %p290, %s285, 2
          %s292 = smul.addr %s291, 8
          %s293 = scalar_lea.vmem %s0, %s292
          %s294 = smul.u32 2, %s19
          %s295 = ssub.s32 3, %s294
          %p296 = scmp.lt.s32.totalorder %s295, 2
          %s297 = scalar_select %p296, %s295, 2
          %s298 = smul.u32 128, %s297
        $region48: #{tpu_custom_call.1} parent=43 // pred_fallthru
          _
      $region44: #{tpu_custom_call.1} parent=5 // pred_fallthru
        _
      %p299 = scmp.le.s32.totalorder 1, %s19
      %p300 = scmp.lt.s32.totalorder %s19, 3
      %p301 = pnand %p299, %p300
      %p302 = pneg %p301
      // Predicated region
      $region49: #{tpu_custom_call.1} parent=5 // pred_check
        _
      $region50: #{tpu_custom_call.1} parent=5 // pred_check_branch
        %304 = sbr.rel (%p301) target = $region52
      $region51: #{tpu_custom_call.1} parent=5 // pred_region
        %s305 = ssub.s32 %s19, 1
        // Predicated region
        $region53: #{tpu_custom_call.1} parent=51 // pred_check
          %p306 = pneg %p66
        $region54: #{tpu_custom_call.1} parent=51 // pred_check_branch
          %308 = sbr.rel (%p306) target = $region56
        $region55: #{tpu_custom_call.1} parent=51 // pred_region
          %309 = dma.done [#allocation3], 64
        $region56: #{tpu_custom_call.1} parent=51 // pred_fallthru
          _
        // Predicated region
        $region57: #{tpu_custom_call.1} parent=51 // pred_check
          %p310 = pneg %p129
        $region58: #{tpu_custom_call.1} parent=51 // pred_check_branch
          %312 = sbr.rel (%p310) target = $region60
        $region59: #{tpu_custom_call.1} parent=51 // pred_region
          %313 = dma.done [#allocation6], 64
        $region60: #{tpu_custom_call.1} parent=51 // pred_fallthru
          _
        // Predicated region
        $region61: #{tpu_custom_call.1} parent=51 // pred_check
          %p314 = pneg %p150
        $region62: #{tpu_custom_call.1} parent=51 // pred_check_branch
          %316 = sbr.rel (%p314) target = $region64
        $region63: #{tpu_custom_call.1} parent=51 // pred_region
          %317 = dma.done [#allocation6], 64
        $region64: #{tpu_custom_call.1} parent=51 // pred_fallthru
          _
        %s318 = smul.u32 2, %s24
        %s319 = ssub.s32 3, %s318
        %p320 = scmp.lt.s32.totalorder %s319, 2
        %s321 = scalar_select %p320, %s319, 2
        %s322 = smul.u32 128, %s321
        %p323 = scmp.lt.s32.totalorder %s318, 2
        %s324 = scalar_select %p323, %s318, 2
        %s325 = smul.addr %s324, 8
        %s326 = scalar_lea.vmem %s0, %s325
        %p327 = pneg %p45
        %p328 = pneg %p42
        %p329 = pneg %p66
        %p330 = pneg %p63
        %p331 = pneg %p87
        %p332 = pneg %p84
        %p333 = pneg %p108
        %p334 = pneg %p105
        %p335 = pneg %p129
        %p336 = pneg %p126
        %p337 = pneg %p150
        %p338 = pneg %p147
        %p339 = pneg %p171
        %p340 = pneg %p168
        %p341 = pneg %p192
        %p342 = pneg %p189
        %p343 = pneg %p218
        %p344 = pneg %p215
        %s345 = sand.u32 %s205, 1
        %s346 = scalar_lea.sflag [#allocation4], %s345
        %s347 = sand.u32 %s205, 1
        %s348 = smul.addr %s347, 16
        %s349 = scalar_lea.vmem [#allocation8], %s348
        %s350 = smul.u32 2, %s24
        %s351 = ssub.s32 3, %s350
        %p352 = scmp.lt.s32.totalorder %s351, 2
        %s353 = scalar_select %p352, %s351, 2
        %s354 = smul.u32 128, %s353
        %p355 = scmp.lt.s32.totalorder %s350, 2
        %s356 = scalar_select %p355, %s350, 2
        %s357 = smul.addr %s356, 8
        %s358 = scalar_lea.vmem %s0, %s357
        %s359 = smul.u32 2, %s24
        %s360 = ssub.s32 3, %s359
        %p361 = scmp.lt.s32.totalorder %s360, 2
        %s362 = scalar_select %p361, %s360, 2
        %s363 = smul.u32 128, %s362
        %s364 = smul.u32 2, %s24
        %s365 = ssub.s32 3, %s364
        %p366 = scmp.lt.s32.totalorder %s365, 2
        %s367 = scalar_select %p366, %s365, 2
        %s368 = smul.u32 128, %s367
        %v369 = vld [vmem:[%s358] sm:$0xff]
        %v370 = vld [vmem:[%s358 + $0x8] sm:$0xff]
        %371 = vadd.xlane.f32.xlu0 %v369
        %v372 = vpop.xlane.xlu0 %371
        %373 = vadd.xlane.f32.xlu0 %v370
        %v374 = vpop.xlane.xlu0 %373
        %v375 = vmul.f32 %v372, 0.0078125
        %v376 = vmul.f32 %v374, 0.0078125
        %v377 = vsub.f32 %v369, %v375
        %v378 = vsub.f32 %v370, %v376
        %v379 = vmul.f32 %v377, %v377
        %v380 = vmul.f32 %v378, %v378
        %381 = vadd.xlane.f32.xlu0 %v379
        %v382 = vpop.xlane.xlu0 %381
        %383 = vadd.xlane.f32.xlu0 %v380
        %v384 = vpop.xlane.xlu0 %383
        %v385 = vmul.f32 %v382, 0.0078125
        %v386 = vmul.f32 %v384, 0.0078125
        %v387 = vld [vmem:[%s2] sm:$0xff]
        %v388 = vld [vmem:[%s2 + $0x8] sm:$0xff]
        %v389 = vld [vmem:[%s2 + $0x10] sm:$0xff]
        %v390 = vld [vmem:[%s2 + $0x18] sm:$0xff]
        %v391 = vld [vmem:[%s2 + $0x20] sm:$0xff]
        %v392 = vld [vmem:[%s2 + $0x28] sm:$0xff]
        %v393 = vld [vmem:[%s2 + $0x30] sm:$0xff]
        %v394 = vld [vmem:[%s2 + $0x38] sm:$0xff]
        %v395 = vld [vmem:[%s2 + $0x40] sm:$0xff]
        %v396 = vld [vmem:[%s2 + $0x48] sm:$0xff]
        %v397 = vld [vmem:[%s2 + $0x50] sm:$0xff]
        %v398 = vld [vmem:[%s2 + $0x58] sm:$0xff]
        %v399 = vld [vmem:[%s2 + $0x60] sm:$0xff]
        %v400 = vld [vmem:[%s2 + $0x68] sm:$0xff]
        %v401 = vld [vmem:[%s2 + $0x70] sm:$0xff]
        %v402 = vld [vmem:[%s2 + $0x78] sm:$0xff]
        %403 = vmatprep.subr.mxu0 0.0
        %v404 = vand.u32 %v387, 4294901760
        %405 = vmatpush1.msra.mxu0 %v404
        %406 = vmatprep.subr.mxu0 0.0
        %v407 = vand.u32 %v388, 4294901760
        %408 = vmatpush1.msra.mxu0 %v407
        %409 = vmatprep.subr.mxu0 0.0
        %v410 = vand.u32 %v389, 4294901760
        %411 = vmatpush1.msra.mxu0 %v410
        %412 = vmatprep.subr.mxu0 0.0
        %v413 = vand.u32 %v390, 4294901760
        %414 = vmatpush1.msra.mxu0 %v413
        %415 = vmatprep.subr.mxu0 0.0
        %v416 = vand.u32 %v391, 4294901760
        %417 = vmatpush1.msra.mxu0 %v416
        %418 = vmatprep.subr.mxu0 0.0
        %v419 = vand.u32 %v392, 4294901760
        %420 = vmatpush1.msra.mxu0 %v419
        %421 = vmatprep.subr.mxu0 0.0
        %v422 = vand.u32 %v393, 4294901760
        %423 = vmatpush1.msra.mxu0 %v422
        %424 = vmatprep.subr.mxu0 0.0
        %v425 = vand.u32 %v394, 4294901760
        %426 = vmatpush1.msra.mxu0 %v425
        %427 = vmatprep.subr.mxu0 0.0
        %v428 = vand.u32 %v395, 4294901760
        %429 = vmatpush1.msra.mxu0 %v428
        %430 = vmatprep.subr.mxu0 0.0
        %v431 = vand.u32 %v396, 4294901760
        %432 = vmatpush1.msra.mxu0 %v431
        %433 = vmatprep.subr.mxu0 0.0
        %v434 = vand.u32 %v397, 4294901760
        %435 = vmatpush1.msra.mxu0 %v434
        %436 = vmatprep.subr.mxu0 0.0
        %v437 = vand.u32 %v398, 4294901760
        %438 = vmatpush1.msra.mxu0 %v437
        %439 = vmatprep.subr.mxu0 0.0
        %v440 = vand.u32 %v399, 4294901760
        %441 = vmatpush1.msra.mxu0 %v440
        %442 = vmatprep.subr.mxu0 0.0
        %v443 = vand.u32 %v400, 4294901760
        %444 = vmatpush1.msra.mxu0 %v443
        %445 = vmatprep.subr.mxu0 0.0
        %v446 = vand.u32 %v401, 4294901760
        %447 = vmatpush1.msra.mxu0 %v446
        %448 = vmatprep.subr.mxu0 0.0
        %v449 = vand.u32 %v402, 4294901760
        %450 = vmatpush1.msra.mxu0 %v449
        %451 = vmatprep.subr.mxu0 0.0
        %452 = vmatpush1.msra.mxu0 0.0
        %453 = vmatprep.subr.mxu0 0.0
        %454 = vmatpush1.msra.mxu0 0.0
        %455 = vmatprep.subr.mxu0 0.0
        %456 = vmatpush1.msra.mxu0 0.0
        %457 = vmatprep.subr.mxu0 0.0
        %458 = vmatpush1.msra.mxu0 0.0
        %459 = vmatprep.subr.mxu0 0.0
        %460 = vmatpush1.msra.mxu0 0.0
        %461 = vmatprep.subr.mxu0 0.0
        %462 = vmatpush1.msra.mxu0 0.0
        %463 = vmatprep.subr.mxu0 0.0
        %464 = vmatpush1.msra.mxu0 0.0
        %465 = vmatprep.subr.mxu0 0.0
        %466 = vmatpush1.msra.mxu0 0.0
        %467 = vmatprep.subr.mxu0 0.0
        %468 = vmatpush1.msra.mxu0 0.0
        %469 = vmatprep.subr.mxu0 0.0
        %470 = vmatpush1.msra.mxu0 0.0
        %471 = vmatprep.subr.mxu0 0.0
        %472 = vmatpush1.msra.mxu0 0.0
        %473 = vmatprep.subr.mxu0 0.0
        %474 = vmatpush1.msra.mxu0 0.0
        %475 = vmatprep.subr.mxu0 0.0
        %476 = vmatpush1.msra.mxu0 0.0
        %477 = vmatprep.subr.mxu0 0.0
        %478 = vmatpush1.msra.mxu0 0.0
        %479 = vmatprep.subr.mxu0 0.0
        %480 = vmatpush1.msra.mxu0 0.0
        %481 = vmatprep.subr.mxu0 0.0
        %482 = vmatpush1.msra.mxu0 0.0
        %483 = vmatprep.mubr.f32.mxu0 0.0
        %v484 = vand.u32 %v377, 4294901760
        %v485 = vsub.f32 %v377, %v484
        %v486 = vand.u32 %v485, 4294901760
        %v487 = vsub.f32 %v485, %v486
        %v488 = vand.u32 %v487, 4294901760
        %489 = vmatmul.mubr.f32.gmra.mrb[0].mxu0 %v488
        %v490 = vpop.f32.mrb[0].mxu0
        %v491 = vadd.f32 0.0, %v490
        %v492 = vpop.f32.mrb[0].mxu0
        %493 = vmatprep.mubr.f32.mxu0 0.0
        %v494 = vand.u32 %v378, 4294901760
        %v495 = vsub.f32 %v378, %v494
        %v496 = vand.u32 %v495, 4294901760
        %v497 = vsub.f32 %v495, %v496
        %v498 = vand.u32 %v497, 4294901760
        %499 = vmatmul.mubr.f32.gmra.mrb[0].mxu0 %v498
        %v500 = vpop.f32.mrb[0].mxu0
        %v501 = vadd.f32 0.0, %v500
        %v502 = vpop.f32.mrb[0].mxu0
        %503 = vdwg.mxu0
        %504 = vmatprep.subr.mxu0 0.0
        %v505 = vand.u32 %v387, 4294901760
        %v506 = vsub.f32 %v387, %v505
        %v507 = vand.u32 %v506, 4294901760
        %v508 = vsub.f32 %v506, %v507
        %v509 = vand.u32 %v508, 4294901760
        %510 = vmatpush1.msra.mxu0 %v509
        %511 = vmatprep.subr.mxu0 0.0
        %v512 = vand.u32 %v388, 4294901760
        %v513 = vsub.f32 %v388, %v512
        %v514 = vand.u32 %v513, 4294901760
        %v515 = vsub.f32 %v513, %v514
        %v516 = vand.u32 %v515, 4294901760
        %517 = vmatpush1.msra.mxu0 %v516
        %518 = vmatprep.subr.mxu0 0.0
        %v519 = vand.u32 %v389, 4294901760
        %v520 = vsub.f32 %v389, %v519
        %v521 = vand.u32 %v520, 4294901760
        %v522 = vsub.f32 %v520, %v521
        %v523 = vand.u32 %v522, 4294901760
        %524 = vmatpush1.msra.mxu0 %v523
        %525 = vmatprep.subr.mxu0 0.0
        %v526 = vand.u32 %v390, 4294901760
        %v527 = vsub.f32 %v390, %v526
        %v528 = vand.u32 %v527, 4294901760
        %v529 = vsub.f32 %v527, %v528
        %v530 = vand.u32 %v529, 4294901760
        %531 = vmatpush1.msra.mxu0 %v530
        %532 = vmatprep.subr.mxu0 0.0
        %v533 = vand.u32 %v391, 4294901760
        %v534 = vsub.f32 %v391, %v533
        %v535 = vand.u32 %v534, 4294901760
        %v536 = vsub.f32 %v534, %v535
        %v537 = vand.u32 %v536, 4294901760
        %538 = vmatpush1.msra.mxu0 %v537
        %539 = vmatprep.subr.mxu0 0.0
        %v540 = vand.u32 %v392, 4294901760
        %v541 = vsub.f32 %v392, %v540
        %v542 = vand.u32 %v541, 4294901760
        %v543 = vsub.f32 %v541, %v542
        %v544 = vand.u32 %v543, 4294901760
        %545 = vmatpush1.msra.mxu0 %v544
        %546 = vmatprep.subr.mxu0 0.0
        %v547 = vand.u32 %v393, 4294901760
        %v548 = vsub.f32 %v393, %v547
        %v549 = vand.u32 %v548, 4294901760
        %v550 = vsub.f32 %v548, %v549
        %v551 = vand.u32 %v550, 4294901760
        %552 = vmatpush1.msra.mxu0 %v551
        %553 = vmatprep.subr.mxu0 0.0
        %v554 = vand.u32 %v394, 4294901760
        %v555 = vsub.f32 %v394, %v554
        %v556 = vand.u32 %v555, 4294901760
        %v557 = vsub.f32 %v555, %v556
        %v558 = vand.u32 %v557, 4294901760
        %559 = vmatpush1.msra.mxu0 %v558
        %560 = vmatprep.subr.mxu0 0.0
        %v561 = vand.u32 %v395, 4294901760
        %v562 = vsub.f32 %v395, %v561
        %v563 = vand.u32 %v562, 4294901760
        %v564 = vsub.f32 %v562, %v563
        %v565 = vand.u32 %v564, 4294901760
        %566 = vmatpush1.msra.mxu0 %v565
        %567 = vmatprep.subr.mxu0 0.0
        %v568 = vand.u32 %v396, 4294901760
        %v569 = vsub.f32 %v396, %v568
        %v570 = vand.u32 %v569, 4294901760
        %v571 = vsub.f32 %v569, %v570
        %v572 = vand.u32 %v571, 4294901760
        %573 = vmatpush1.msra.mxu0 %v572
        %574 = vmatprep.subr.mxu0 0.0
        %v575 = vand.u32 %v397, 4294901760
        %v576 = vsub.f32 %v397, %v575
        %v577 = vand.u32 %v576, 4294901760
        %v578 = vsub.f32 %v576, %v577
        %v579 = vand.u32 %v578, 4294901760
        %580 = vmatpush1.msra.mxu0 %v579
        %581 = vmatprep.subr.mxu0 0.0
        %v582 = vand.u32 %v398, 4294901760
        %v583 = vsub.f32 %v398, %v582
        %v584 = vand.u32 %v583, 4294901760
        %v585 = vsub.f32 %v583, %v584
        %v586 = vand.u32 %v585, 4294901760
        %587 = vmatpush1.msra.mxu0 %v586
        %588 = vmatprep.subr.mxu0 0.0
        %v589 = vand.u32 %v399, 4294901760
        %v590 = vsub.f32 %v399, %v589
        %v591 = vand.u32 %v590, 4294901760
        %v592 = vsub.f32 %v590, %v591
        %v593 = vand.u32 %v592, 4294901760
        %594 = vmatpush1.msra.mxu0 %v593
        %595 = vmatprep.subr.mxu0 0.0
        %v596 = vand.u32 %v400, 4294901760
        %v597 = vsub.f32 %v400, %v596
        %v598 = vand.u32 %v597, 4294901760
        %v599 = vsub.f32 %v597, %v598
        %v600 = vand.u32 %v599, 4294901760
        %601 = vmatpush1.msra.mxu0 %v600
        %602 = vmatprep.subr.mxu0 0.0
        %v603 = vand.u32 %v401, 4294901760
        %v604 = vsub.f32 %v401, %v603
        %v605 = vand.u32 %v604, 4294901760
        %v606 = vsub.f32 %v604, %v605
        %v607 = vand.u32 %v606, 4294901760
        %608 = vmatpush1.msra.mxu0 %v607
        %609 = vmatprep.subr.mxu0 0.0
        %v610 = vand.u32 %v402, 4294901760
        %v611 = vsub.f32 %v402, %v610
        %v612 = vand.u32 %v611, 4294901760
        %v613 = vsub.f32 %v611, %v612
        %v614 = vand.u32 %v613, 4294901760
        %615 = vmatpush1.msra.mxu0 %v614
        %616 = vmatprep.subr.mxu0 0.0
        %617 = vmatpush1.msra.mxu0 0.0
        %618 = vmatprep.subr.mxu0 0.0
        %619 = vmatpush1.msra.mxu0 0.0
        %620 = vmatprep.subr.mxu0 0.0
        %621 = vmatpush1.msra.mxu0 0.0
        %622 = vmatprep.subr.mxu0 0.0
        %623 = vmatpush1.msra.mxu0 0.0
        %624 = vmatprep.subr.mxu0 0.0
        %625 = vmatpush1.msra.mxu0 0.0
        %626 = vmatprep.subr.mxu0 0.0
        %627 = vmatpush1.msra.mxu0 0.0
        %628 = vmatprep.subr.mxu0 0.0
        %629 = vmatpush1.msra.mxu0 0.0
        %630 = vmatprep.subr.mxu0 0.0
        %631 = vmatpush1.msra.mxu0 0.0
        %632 = vmatprep.subr.mxu0 0.0
        %633 = vmatpush1.msra.mxu0 0.0
        %634 = vmatprep.subr.mxu0 0.0
        %635 = vmatpush1.msra.mxu0 0.0
        %636 = vmatprep.subr.mxu0 0.0
        %637 = vmatpush1.msra.mxu0 0.0
        %638 = vmatprep.subr.mxu0 0.0
        %639 = vmatpush1.msra.mxu0 0.0
        %640 = vmatprep.subr.mxu0 0.0
        %641 = vmatpush1.msra.mxu0 0.0
        %642 = vmatprep.subr.mxu0 0.0
        %643 = vmatpush1.msra.mxu0 0.0
        %644 = vmatprep.subr.mxu0 0.0
        %645 = vmatpush1.msra.mxu0 0.0
        %646 = vmatprep.subr.mxu0 0.0
        %647 = vmatpush1.msra.mxu0 0.0
        %648 = vmatprep.mubr.f32.mxu0 0.0
        %v649 = vand.u32 %v377, 4294901760
        %650 = vmatmul.mubr.f32.gmra.mrb[0].mxu0 %v649
        %v651 = vpop.f32.mrb[0].mxu0
        %v652 = vadd.f32 %v491, %v651
        %v653 = vpop.f32.mrb[0].mxu0
        %654 = vmatprep.mubr.f32.mxu0 0.0
        %v655 = vand.u32 %v378, 4294901760
        %656 = vmatmul.mubr.f32.gmra.mrb[0].mxu0 %v655
        %v657 = vpop.f32.mrb[0].mxu0
        %v658 = vadd.f32 %v501, %v657
        %v659 = vpop.f32.mrb[0].mxu0
        %660 = vdwg.mxu0
        %661 = vmatprep.subr.mxu0 0.0
        %v662 = vand.u32 %v387, 4294901760
        %v663 = vsub.f32 %v387, %v662
        %664 = vmatpush1.msra.mxu0 %v663
        %665 = vmatprep.subr.mxu0 0.0
        %v666 = vand.u32 %v388, 4294901760
        %v667 = vsub.f32 %v388, %v666
        %668 = vmatpush1.msra.mxu0 %v667
        %669 = vmatprep.subr.mxu0 0.0
        %v670 = vand.u32 %v389, 4294901760
        %v671 = vsub.f32 %v389, %v670
        %672 = vmatpush1.msra.mxu0 %v671
        %673 = vmatprep.subr.mxu0 0.0
        %v674 = vand.u32 %v390, 4294901760
        %v675 = vsub.f32 %v390, %v674
        %676 = vmatpush1.msra.mxu0 %v675
        %677 = vmatprep.subr.mxu0 0.0
        %v678 = vand.u32 %v391, 4294901760
        %v679 = vsub.f32 %v391, %v678
        %680 = vmatpush1.msra.mxu0 %v679
        %681 = vmatprep.subr.mxu0 0.0
        %v682 = vand.u32 %v392, 4294901760
        %v683 = vsub.f32 %v392, %v682
        %684 = vmatpush1.msra.mxu0 %v683
        %685 = vmatprep.subr.mxu0 0.0
        %v686 = vand.u32 %v393, 4294901760
        %v687 = vsub.f32 %v393, %v686
        %688 = vmatpush1.msra.mxu0 %v687
        %689 = vmatprep.subr.mxu0 0.0
        %v690 = vand.u32 %v394, 4294901760
        %v691 = vsub.f32 %v394, %v690
        %692 = vmatpush1.msra.mxu0 %v691
        %693 = vmatprep.subr.mxu0 0.0
        %v694 = vand.u32 %v395, 4294901760
        %v695 = vsub.f32 %v395, %v694
        %696 = vmatpush1.msra.mxu0 %v695
        %697 = vmatprep.subr.mxu0 0.0
        %v698 = vand.u32 %v396, 4294901760
        %v699 = vsub.f32 %v396, %v698
        %700 = vmatpush1.msra.mxu0 %v699
        %701 = vmatprep.subr.mxu0 0.0
        %v702 = vand.u32 %v397, 4294901760
        %v703 = vsub.f32 %v397, %v702
        %704 = vmatpush1.msra.mxu0 %v703
        %705 = vmatprep.subr.mxu0 0.0
        %v706 = vand.u32 %v398, 4294901760
        %v707 = vsub.f32 %v398, %v706
        %708 = vmatpush1.msra.mxu0 %v707
        %709 = vmatprep.subr.mxu0 0.0
        %v710 = vand.u32 %v399, 4294901760
        %v711 = vsub.f32 %v399, %v710
        %712 = vmatpush1.msra.mxu0 %v711
        %713 = vmatprep.subr.mxu0 0.0
        %v714 = vand.u32 %v400, 4294901760
        %v715 = vsub.f32 %v400, %v714
        %716 = vmatpush1.msra.mxu0 %v715
        %717 = vmatprep.subr.mxu0 0.0
        %v718 = vand.u32 %v401, 4294901760
        %v719 = vsub.f32 %v401, %v718
        %720 = vmatpush1.msra.mxu0 %v719
        %721 = vmatprep.subr.mxu0 0.0
        %v722 = vand.u32 %v402, 4294901760
        %v723 = vsub.f32 %v402, %v722
        %724 = vmatpush1.msra.mxu0 %v723
        %725 = vmatprep.subr.mxu0 0.0
        %726 = vmatpush1.msra.mxu0 0.0
        %727 = vmatprep.subr.mxu0 0.0
        %728 = vmatpush1.msra.mxu0 0.0
        %729 = vmatprep.subr.mxu0 0.0
        %730 = vmatpush1.msra.mxu0 0.0
        %731 = vmatprep.subr.mxu0 0.0
        %732 = vmatpush1.msra.mxu0 0.0
        %733 = vmatprep.subr.mxu0 0.0
        %734 = vmatpush1.msra.mxu0 0.0
        %735 = vmatprep.subr.mxu0 0.0
        %736 = vmatpush1.msra.mxu0 0.0
        %737 = vmatprep.subr.mxu0 0.0
        %738 = vmatpush1.msra.mxu0 0.0
        %739 = vmatprep.subr.mxu0 0.0
        %740 = vmatpush1.msra.mxu0 0.0
        %741 = vmatprep.subr.mxu0 0.0
        %742 = vmatpush1.msra.mxu0 0.0
        %743 = vmatprep.subr.mxu0 0.0
        %744 = vmatpush1.msra.mxu0 0.0
        %745 = vmatprep.subr.mxu0 0.0
        %746 = vmatpush1.msra.mxu0 0.0
        %747 = vmatprep.subr.mxu0 0.0
        %748 = vmatpush1.msra.mxu0 0.0
        %749 = vmatprep.subr.mxu0 0.0
        %750 = vmatpush1.msra.mxu0 0.0
        %751 = vmatprep.subr.mxu0 0.0
        %752 = vmatpush1.msra.mxu0 0.0
        %753 = vmatprep.subr.mxu0 0.0
        %754 = vmatpush1.msra.mxu0 0.0
        %755 = vmatprep.subr.mxu0 0.0
        %756 = vmatpush1.msra.mxu0 0.0
        %757 = vmatprep.mubr.f32.mxu0 0.0
        %v758 = vand.u32 %v377, 4294901760
        %v759 = vsub.f32 %v377, %v758
        %760 = vmatmul.mubr.f32.gmra.mrb[0].mxu0 %v759
        %v761 = vpop.f32.mrb[0].mxu0
        %v762 = vadd.f32 %v652, %v761
        %v763 = vpop.f32.mrb[0].mxu0
        %764 = vmatprep.mubr.f32.mxu0 0.0
        %v765 = vand.u32 %v378, 4294901760
        %v766 = vsub.f32 %v378, %v765
        %767 = vmatmul.mubr.f32.gmra.mrb[0].mxu0 %v766
        %v768 = vpop.f32.mrb[0].mxu0
        %v769 = vadd.f32 %v658, %v768
        %v770 = vpop.f32.mrb[0].mxu0
        %771 = vdwg.mxu0
        %772 = vmatprep.subr.mxu0 0.0
        %v773 = vand.u32 %v387, 4294901760
        %774 = vmatpush1.msra.mxu0 %v773
        %775 = vmatprep.subr.mxu0 0.0
        %v776 = vand.u32 %v388, 4294901760
        %777 = vmatpush1.msra.mxu0 %v776
        %778 = vmatprep.subr.mxu0 0.0
        %v779 = vand.u32 %v389, 4294901760
        %780 = vmatpush1.msra.mxu0 %v779
        %781 = vmatprep.subr.mxu0 0.0
        %v782 = vand.u32 %v390, 4294901760
        %783 = vmatpush1.msra.mxu0 %v782
        %784 = vmatprep.subr.mxu0 0.0
        %v785 = vand.u32 %v391, 4294901760
        %786 = vmatpush1.msra.mxu0 %v785
        %787 = vmatprep.subr.mxu0 0.0
        %v788 = vand.u32 %v392, 4294901760
        %789 = vmatpush1.msra.mxu0 %v788
        %790 = vmatprep.subr.mxu0 0.0
        %v791 = vand.u32 %v393, 4294901760
        %792 = vmatpush1.msra.mxu0 %v791
        %793 = vmatprep.subr.mxu0 0.0
        %v794 = vand.u32 %v394, 4294901760
        %795 = vmatpush1.msra.mxu0 %v794
        %796 = vmatprep.subr.mxu0 0.0
        %v797 = vand.u32 %v395, 4294901760
        %798 = vmatpush1.msra.mxu0 %v797
        %799 = vmatprep.subr.mxu0 0.0
        %v800 = vand.u32 %v396, 4294901760
        %801 = vmatpush1.msra.mxu0 %v800
        %802 = vmatprep.subr.mxu0 0.0
        %v803 = vand.u32 %v397, 4294901760
        %804 = vmatpush1.msra.mxu0 %v803
        %805 = vmatprep.subr.mxu0 0.0
        %v806 = vand.u32 %v398, 4294901760
        %807 = vmatpush1.msra.mxu0 %v806
        %808 = vmatprep.subr.mxu0 0.0
        %v809 = vand.u32 %v399, 4294901760
        %810 = vmatpush1.msra.mxu0 %v809
        %811 = vmatprep.subr.mxu0 0.0
        %v812 = vand.u32 %v400, 4294901760
        %813 = vmatpush1.msra.mxu0 %v812
        %814 = vmatprep.subr.mxu0 0.0
        %v815 = vand.u32 %v401, 4294901760
        %816 = vmatpush1.msra.mxu0 %v815
        %817 = vmatprep.subr.mxu0 0.0
        %v818 = vand.u32 %v402, 4294901760
        %819 = vmatpush1.msra.mxu0 %v818
        %820 = vmatprep.subr.mxu0 0.0
        %821 = vmatpush1.msra.mxu0 0.0
        %822 = vmatprep.subr.mxu0 0.0
        %823 = vmatpush1.msra.mxu0 0.0
        %824 = vmatprep.subr.mxu0 0.0
        %825 = vmatpush1.msra.mxu0 0.0
        %826 = vmatprep.subr.mxu0 0.0
        %827 = vmatpush1.msra.mxu0 0.0
        %828 = vmatprep.subr.mxu0 0.0
        %829 = vmatpush1.msra.mxu0 0.0
        %830 = vmatprep.subr.mxu0 0.0
        %831 = vmatpush1.msra.mxu0 0.0
        %832 = vmatprep.subr.mxu0 0.0
        %833 = vmatpush1.msra.mxu0 0.0
        %834 = vmatprep.subr.mxu0 0.0
        %835 = vmatpush1.msra.mxu0 0.0
        %836 = vmatprep.subr.mxu0 0.0
        %837 = vmatpush1.msra.mxu0 0.0
        %838 = vmatprep.subr.mxu0 0.0
        %839 = vmatpush1.msra.mxu0 0.0
        %840 = vmatprep.subr.mxu0 0.0
        %841 = vmatpush1.msra.mxu0 0.0
        %842 = vmatprep.subr.mxu0 0.0
        %843 = vmatpush1.msra.mxu0 0.0
        %844 = vmatprep.subr.mxu0 0.0
        %845 = vmatpush1.msra.mxu0 0.0
        %846 = vmatprep.subr.mxu0 0.0
        %847 = vmatpush1.msra.mxu0 0.0
        %848 = vmatprep.subr.mxu0 0.0
        %849 = vmatpush1.msra.mxu0 0.0
        %850 = vmatprep.subr.mxu0 0.0
        %851 = vmatpush1.msra.mxu0 0.0
        %852 = vmatprep.mubr.f32.mxu0 0.0
        %v853 = vand.u32 %v377, 4294901760
        %v854 = vsub.f32 %v377, %v853
        %v855 = vand.u32 %v854, 4294901760
        %856 = vmatmul.mubr.f32.gmra.mrb[0].mxu0 %v855
        %v857 = vpop.f32.mrb[0].mxu0
        %v858 = vadd.f32 %v762, %v857
        %v859 = vpop.f32.mrb[0].mxu0
        %860 = vmatprep.mubr.f32.mxu0 0.0
        %v861 = vand.u32 %v378, 4294901760
        %v862 = vsub.f32 %v378, %v861
        %v863 = vand.u32 %v862, 4294901760
        %864 = vmatmul.mubr.f32.gmra.mrb[0].mxu0 %v863
        %v865 = vpop.f32.mrb[0].mxu0
        %v866 = vadd.f32 %v769, %v865
        %v867 = vpop.f32.mrb[0].mxu0
        %868 = vdwg.mxu0
        %869 = vmatprep.subr.mxu0 0.0
        %v870 = vand.u32 %v387, 4294901760
        %v871 = vsub.f32 %v387, %v870
        %v872 = vand.u32 %v871, 4294901760
        %873 = vmatpush1.msra.mxu0 %v872
        %874 = vmatprep.subr.mxu0 0.0
        %v875 = vand.u32 %v388, 4294901760
        %v876 = vsub.f32 %v388, %v875
        %v877 = vand.u32 %v876, 4294901760
        %878 = vmatpush1.msra.mxu0 %v877
        %879 = vmatprep.subr.mxu0 0.0
        %v880 = vand.u32 %v389, 4294901760
        %v881 = vsub.f32 %v389, %v880
        %v882 = vand.u32 %v881, 4294901760
        %883 = vmatpush1.msra.mxu0 %v882
        %884 = vmatprep.subr.mxu0 0.0
        %v885 = vand.u32 %v390, 4294901760
        %v886 = vsub.f32 %v390, %v885
        %v887 = vand.u32 %v886, 4294901760
        %888 = vmatpush1.msra.mxu0 %v887
        %889 = vmatprep.subr.mxu0 0.0
        %v890 = vand.u32 %v391, 4294901760
        %v891 = vsub.f32 %v391, %v890
        %v892 = vand.u32 %v891, 4294901760
        %893 = vmatpush1.msra.mxu0 %v892
        %894 = vmatprep.subr.mxu0 0.0
        %v895 = vand.u32 %v392, 4294901760
        %v896 = vsub.f32 %v392, %v895
        %v897 = vand.u32 %v896, 4294901760
        %898 = vmatpush1.msra.mxu0 %v897
        %899 = vmatprep.subr.mxu0 0.0
        %v900 = vand.u32 %v393, 4294901760
        %v901 = vsub.f32 %v393, %v900
        %v902 = vand.u32 %v901, 4294901760
        %903 = vmatpush1.msra.mxu0 %v902
        %904 = vmatprep.subr.mxu0 0.0
        %v905 = vand.u32 %v394, 4294901760
        %v906 = vsub.f32 %v394, %v905
        %v907 = vand.u32 %v906, 4294901760
        %908 = vmatpush1.msra.mxu0 %v907
        %909 = vmatprep.subr.mxu0 0.0
        %v910 = vand.u32 %v395, 4294901760
        %v911 = vsub.f32 %v395, %v910
        %v912 = vand.u32 %v911, 4294901760
        %913 = vmatpush1.msra.mxu0 %v912
        %914 = vmatprep.subr.mxu0 0.0
        %v915 = vand.u32 %v396, 4294901760
        %v916 = vsub.f32 %v396, %v915
        %v917 = vand.u32 %v916, 4294901760
        %918 = vmatpush1.msra.mxu0 %v917
        %919 = vmatprep.subr.mxu0 0.0
        %v920 = vand.u32 %v397, 4294901760
        %v921 = vsub.f32 %v397, %v920
        %v922 = vand.u32 %v921, 4294901760
        %923 = vmatpush1.msra.mxu0 %v922
        %924 = vmatprep.subr.mxu0 0.0
        %v925 = vand.u32 %v398, 4294901760
        %v926 = vsub.f32 %v398, %v925
        %v927 = vand.u32 %v926, 4294901760
        %928 = vmatpush1.msra.mxu0 %v927
        %929 = vmatprep.subr.mxu0 0.0
        %v930 = vand.u32 %v399, 4294901760
        %v931 = vsub.f32 %v399, %v930
        %v932 = vand.u32 %v931, 4294901760
        %933 = vmatpush1.msra.mxu0 %v932
        %934 = vmatprep.subr.mxu0 0.0
        %v935 = vand.u32 %v400, 4294901760
        %v936 = vsub.f32 %v400, %v935
        %v937 = vand.u32 %v936, 4294901760
        %938 = vmatpush1.msra.mxu0 %v937
        %939 = vmatprep.subr.mxu0 0.0
        %v940 = vand.u32 %v401, 4294901760
        %v941 = vsub.f32 %v401, %v940
        %v942 = vand.u32 %v941, 4294901760
        %943 = vmatpush1.msra.mxu0 %v942
        %944 = vmatprep.subr.mxu0 0.0
        %v945 = vand.u32 %v402, 4294901760
        %v946 = vsub.f32 %v402, %v945
        %v947 = vand.u32 %v946, 4294901760
        %948 = vmatpush1.msra.mxu0 %v947
        %949 = vmatprep.subr.mxu0 0.0
        %950 = vmatpush1.msra.mxu0 0.0
        %951 = vmatprep.subr.mxu0 0.0
        %952 = vmatpush1.msra.mxu0 0.0
        %953 = vmatprep.subr.mxu0 0.0
        %954 = vmatpush1.msra.mxu0 0.0
        %955 = vmatprep.subr.mxu0 0.0
        %956 = vmatpush1.msra.mxu0 0.0
        %957 = vmatprep.subr.mxu0 0.0
        %958 = vmatpush1.msra.mxu0 0.0
        %959 = vmatprep.subr.mxu0 0.0
        %960 = vmatpush1.msra.mxu0 0.0
        %961 = vmatprep.subr.mxu0 0.0
        %962 = vmatpush1.msra.mxu0 0.0
        %963 = vmatprep.subr.mxu0 0.0
        %964 = vmatpush1.msra.mxu0 0.0
        %965 = vmatprep.subr.mxu0 0.0
        %966 = vmatpush1.msra.mxu0 0.0
        %967 = vmatprep.subr.mxu0 0.0
        %968 = vmatpush1.msra.mxu0 0.0
        %969 = vmatprep.subr.mxu0 0.0
        %970 = vmatpush1.msra.mxu0 0.0
        %971 = vmatprep.subr.mxu0 0.0
        %972 = vmatpush1.msra.mxu0 0.0
        %973 = vmatprep.subr.mxu0 0.0
        %974 = vmatpush1.msra.mxu0 0.0
        %975 = vmatprep.subr.mxu0 0.0
        %976 = vmatpush1.msra.mxu0 0.0
        %977 = vmatprep.subr.mxu0 0.0
        %978 = vmatpush1.msra.mxu0 0.0
        %979 = vmatprep.subr.mxu0 0.0
        %980 = vmatpush1.msra.mxu0 0.0
        %981 = vmatprep.mubr.f32.mxu0 0.0
        %v982 = vand.u32 %v377, 4294901760
        %983 = vmatmul.mubr.f32.gmra.mrb[0].mxu0 %v982
        %v984 = vpop.f32.mrb[0].mxu0
        %v985 = vadd.f32 %v858, %v984
        %v986 = vpop.f32.mrb[0].mxu0
        %987 = vmatprep.mubr.f32.mxu0 0.0
        %v988 = vand.u32 %v378, 4294901760
        %989 = vmatmul.mubr.f32.gmra.mrb[0].mxu0 %v988
        %v990 = vpop.f32.mrb[0].mxu0
        %v991 = vadd.f32 %v866, %v990
        %v992 = vpop.f32.mrb[0].mxu0
        %993 = vdwg.mxu0
        %994 = vmatprep.subr.mxu0 0.0
        %v995 = vand.u32 %v387, 4294901760
        %996 = vmatpush1.msra.mxu0 %v995
        %997 = vmatprep.subr.mxu0 0.0
        %v998 = vand.u32 %v388, 4294901760
        %999 = vmatpush1.msra.mxu0 %v998
        %1000 = vmatprep.subr.mxu0 0.0
        %v1001 = vand.u32 %v389, 4294901760
        %1002 = vmatpush1.msra.mxu0 %v1001
        %1003 = vmatprep.subr.mxu0 0.0
        %v1004 = vand.u32 %v390, 4294901760
        %1005 = vmatpush1.msra.mxu0 %v1004
        %1006 = vmatprep.subr.mxu0 0.0
        %v1007 = vand.u32 %v391, 4294901760
        %1008 = vmatpush1.msra.mxu0 %v1007
        %1009 = vmatprep.subr.mxu0 0.0
        %v1010 = vand.u32 %v392, 4294901760
        %1011 = vmatpush1.msra.mxu0 %v1010
        %1012 = vmatprep.subr.mxu0 0.0
        %v1013 = vand.u32 %v393, 4294901760
        %1014 = vmatpush1.msra.mxu0 %v1013
        %1015 = vmatprep.subr.mxu0 0.0
        %v1016 = vand.u32 %v394, 4294901760
        %1017 = vmatpush1.msra.mxu0 %v1016
        %1018 = vmatprep.subr.mxu0 0.0
        %v1019 = vand.u32 %v395, 4294901760
        %1020 = vmatpush1.msra.mxu0 %v1019
        %1021 = vmatprep.subr.mxu0 0.0
        %v1022 = vand.u32 %v396, 4294901760
        %1023 = vmatpush1.msra.mxu0 %v1022
        %1024 = vmatprep.subr.mxu0 0.0
        %v1025 = vand.u32 %v397, 4294901760
        %1026 = vmatpush1.msra.mxu0 %v1025
        %1027 = vmatprep.subr.mxu0 0.0
        %v1028 = vand.u32 %v398, 4294901760
        %1029 = vmatpush1.msra.mxu0 %v1028
        %1030 = vmatprep.subr.mxu0 0.0
        %v1031 = vand.u32 %v399, 4294901760
        %1032 = vmatpush1.msra.mxu0 %v1031
        %1033 = vmatprep.subr.mxu0 0.0
        %v1034 = vand.u32 %v400, 4294901760
        %1035 = vmatpush1.msra.mxu0 %v1034
        %1036 = vmatprep.subr.mxu0 0.0
        %v1037 = vand.u32 %v401, 4294901760
        %1038 = vmatpush1.msra.mxu0 %v1037
        %1039 = vmatprep.subr.mxu0 0.0
        %v1040 = vand.u32 %v402, 4294901760
        %1041 = vmatpush1.msra.mxu0 %v1040
        %1042 = vmatprep.subr.mxu0 0.0
        %1043 = vmatpush1.msra.mxu0 0.0
        %1044 = vmatprep.subr.mxu0 0.0
        %1045 = vmatpush1.msra.mxu0 0.0
        %1046 = vmatprep.subr.mxu0 0.0
        %1047 = vmatpush1.msra.mxu0 0.0
        %1048 = vmatprep.subr.mxu0 0.0
        %1049 = vmatpush1.msra.mxu0 0.0
        %1050 = vmatprep.subr.mxu0 0.0
        %1051 = vmatpush1.msra.mxu0 0.0
        %1052 = vmatprep.subr.mxu0 0.0
        %1053 = vmatpush1.msra.mxu0 0.0
        %1054 = vmatprep.subr.mxu0 0.0
        %1055 = vmatpush1.msra.mxu0 0.0
        %1056 = vmatprep.subr.mxu0 0.0
        %1057 = vmatpush1.msra.mxu0 0.0
        %1058 = vmatprep.subr.mxu0 0.0
        %1059 = vmatpush1.msra.mxu0 0.0
        %1060 = vmatprep.subr.mxu0 0.0
        %1061 = vmatpush1.msra.mxu0 0.0
        %1062 = vmatprep.subr.mxu0 0.0
        %1063 = vmatpush1.msra.mxu0 0.0
        %1064 = vmatprep.subr.mxu0 0.0
        %1065 = vmatpush1.msra.mxu0 0.0
        %1066 = vmatprep.subr.mxu0 0.0
        %1067 = vmatpush1.msra.mxu0 0.0
        %1068 = vmatprep.subr.mxu0 0.0
        %1069 = vmatpush1.msra.mxu0 0.0
        %1070 = vmatprep.subr.mxu0 0.0
        %1071 = vmatpush1.msra.mxu0 0.0
        %1072 = vmatprep.subr.mxu0 0.0
        %1073 = vmatpush1.msra.mxu0 0.0
        %1074 = vmatprep.mubr.f32.mxu0 0.0
        %v1075 = vand.u32 %v377, 4294901760
        %1076 = vmatmul.mubr.f32.gmra.mrb[0].mxu0 %v1075
        %v1077 = vpop.f32.mrb[0].mxu0
        %v1078 = vadd.f32 %v985, %v1077
        %v1079 = vpop.f32.mrb[0].mxu0
        %1080 = vmatprep.mubr.f32.mxu0 0.0
        %v1081 = vand.u32 %v378, 4294901760
        %1082 = vmatmul.mubr.f32.gmra.mrb[0].mxu0 %v1081
        %v1083 = vpop.f32.mrb[0].mxu0
        %v1084 = vadd.f32 %v991, %v1083
        %v1085 = vpop.f32.mrb[0].mxu0
        %1086 = vdwg.mxu0
        %v1087 = vmul.f32 %v1078, 0.015625
        %v1088 = vmul.f32 %v1084, 0.015625
        %v1089 = vld [vmem:[%s3] sm:$0x1]
        %v1091 = vlaneseq
        %v1092 = vshrl.u32 %v1091, 7
        %v1093 = vsub.s32 0, %v1092
        %v1094 = vrot.slane %v1089, %v1093
        %v1096 = vadd.f32 %v385, %v1094
        %v1097 = vadd.f32 %v386, %v1094
        %v1098 = vsub.f32 %v1096, %v1087
        %v1099 = vsub.f32 %v1097, %v1088
        %v1100 = vmax.f32 %v1098, 0.0
        %v1101 = vmax.f32 %v1099, 0.0
        %v1102 = vadd.f32 %v1100, 1e-05
        %v1103 = vadd.f32 %v1101, 1e-05
        %v1104 = vrsqrt.pop %v1102
        %v1105 = vrsqrt.pop %v1103
        %v1106 = vld [vmem:[#allocation2] sm:$0x1]
        %v1107 = vlaneseq
        %v1108 = vshrl.u32 %v1107, 7
        %v1109 = vsub.s32 0, %v1108
        %v1110 = vrot.slane %v1106, %v1109
        %v1111 = vsub.f32 %v377, %v1110
        %v1112 = vsub.f32 %v378, %v1110
        %1114 = vset.pattern.permute.xlu0 0
        %1115 = vperm.xlu0 %1114, %v1104
        %v1116 = vpop.permute.xlu0 %1115
        %1119 = vset.pattern.permute.xlu0 0
        %1120 = vperm.xlu0 %1119, %v1105
        %v1121 = vpop.permute.xlu0 %1120
        %v1123 = vmul.f32 %v1111, %v1116
        %v1124 = vmul.f32 %v1112, %v1121
        %v1125 = vld [vmem:[#allocation5] sm:$0x1]
        %v1126 = vlaneseq
        %v1127 = vshrl.u32 %v1126, 7
        %v1128 = vsub.s32 0, %v1127
        %v1129 = vrot.slane %v1125, %v1128
        %v1130 = vmul.f32 %v1123, %v1129
        %v1131 = vmul.f32 %v1124, %v1129
        %v1132 = vld [vmem:[#allocation7] sm:$0x1]
        %v1133 = vlaneseq
        %v1134 = vshrl.u32 %v1133, 7
        %v1135 = vsub.s32 0, %v1134
        %v1136 = vrot.slane %v1132, %v1135
        %v1137 = vadd.f32 %v1130, %v1136
        %v1138 = vadd.f32 %v1131, %v1136
        %v1139 = vmul.f32 %v1137, 0.01
        %v1140 = vmul.f32 %v1138, 0.01
        %v1141 = vmax.f32 %v1137, %v1139
        %v1142 = vmax.f32 %v1138, %v1140
        %v1143 = vadd.f32 %v1141, 0.0
        %v1144 = vadd.f32 %v1142, 0.0
        %v1145 = vld [vmem:[#allocation2 + $0x1] sm:$0x1]
        %v1146 = vlaneseq
        %v1147 = vshrl.u32 %v1146, 7
        %v1148 = vsub.s32 0, %v1147
        %v1149 = vrot.slane %v1145, %v1148
        %v1150 = vsub.f32 %v377, %v1149
        %v1151 = vsub.f32 %v378, %v1149
        %1152 = vset.pattern.permute.xlu0 1
        %1153 = vperm.xlu0 %1152, %v1104
        %v1154 = vpop.permute.xlu0 %1153
        %1156 = vset.pattern.permute.xlu0 1
        %1157 = vperm.xlu0 %1156, %v1105
        %v1158 = vpop.permute.xlu0 %1157
        %v1160 = vmul.f32 %v1150, %v1154
        %v1161 = vmul.f32 %v1151, %v1158
        %v1162 = vld [vmem:[#allocation5 + $0x1] sm:$0x1]
        %v1163 = vlaneseq
        %v1164 = vshrl.u32 %v1163, 7
        %v1165 = vsub.s32 0, %v1164
        %v1166 = vrot.slane %v1162, %v1165
        %v1167 = vmul.f32 %v1160, %v1166
        %v1168 = vmul.f32 %v1161, %v1166
        %v1169 = vld [vmem:[#allocation7 + $0x1] sm:$0x1]
        %v1170 = vlaneseq
        %v1171 = vshrl.u32 %v1170, 7
        %v1172 = vsub.s32 0, %v1171
        %v1173 = vrot.slane %v1169, %v1172
        %v1174 = vadd.f32 %v1167, %v1173
        %v1175 = vadd.f32 %v1168, %v1173
        %v1176 = vmul.f32 %v1174, 0.01
        %v1177 = vmul.f32 %v1175, 0.01
        %v1178 = vmax.f32 %v1174, %v1176
        %v1179 = vmax.f32 %v1175, %v1177
        %v1180 = vadd.f32 %v1143, %v1178
        %v1181 = vadd.f32 %v1144, %v1179
        %v1182 = vld [vmem:[#allocation2 + $0x2] sm:$0x1]
        %v1183 = vlaneseq
        %v1184 = vshrl.u32 %v1183, 7
        %v1185 = vsub.s32 0, %v1184
        %v1186 = vrot.slane %v1182, %v1185
        %v1187 = vsub.f32 %v377, %v1186
        %v1188 = vsub.f32 %v378, %v1186
        %1189 = vset.pattern.permute.xlu0 2
        %1190 = vperm.xlu0 %1189, %v1104
        %v1191 = vpop.permute.xlu0 %1190
        %1193 = vset.pattern.permute.xlu0 2
        %1194 = vperm.xlu0 %1193, %v1105
        %v1195 = vpop.permute.xlu0 %1194
        %v1197 = vmul.f32 %v1187, %v1191
        %v1198 = vmul.f32 %v1188, %v1195
        %v1199 = vld [vmem:[#allocation5 + $0x2] sm:$0x1]
        %v1200 = vlaneseq
        %v1201 = vshrl.u32 %v1200, 7
        %v1202 = vsub.s32 0, %v1201
        %v1203 = vrot.slane %v1199, %v1202
        %v1204 = vmul.f32 %v1197, %v1203
        %v1205 = vmul.f32 %v1198, %v1203
        %v1206 = vld [vmem:[#allocation7 + $0x2] sm:$0x1]
        %v1207 = vlaneseq
        %v1208 = vshrl.u32 %v1207, 7
        %v1209 = vsub.s32 0, %v1208
        %v1210 = vrot.slane %v1206, %v1209
        %v1211 = vadd.f32 %v1204, %v1210
        %v1212 = vadd.f32 %v1205, %v1210
        %v1213 = vmul.f32 %v1211, 0.01
        %v1214 = vmul.f32 %v1212, 0.01
        %v1215 = vmax.f32 %v1211, %v1213
        %v1216 = vmax.f32 %v1212, %v1214
        %v1217 = vadd.f32 %v1180, %v1215
        %v1218 = vadd.f32 %v1181, %v1216
        %v1219 = vld [vmem:[#allocation2 + $0x3] sm:$0x1]
        %v1220 = vlaneseq
        %v1221 = vshrl.u32 %v1220, 7
        %v1222 = vsub.s32 0, %v1221
        %v1223 = vrot.slane %v1219, %v1222
        %v1224 = vsub.f32 %v377, %v1223
        %v1225 = vsub.f32 %v378, %v1223
        %1226 = vset.pattern.permute.xlu0 3
        %1227 = vperm.xlu0 %1226, %v1104
        %v1228 = vpop.permute.xlu0 %1227
        %1230 = vset.pattern.permute.xlu0 3
        %1231 = vperm.xlu0 %1230, %v1105
        %v1232 = vpop.permute.xlu0 %1231
        %v1234 = vmul.f32 %v1224, %v1228
        %v1235 = vmul.f32 %v1225, %v1232
        %v1236 = vld [vmem:[#allocation5 + $0x3] sm:$0x1]
        %v1237 = vlaneseq
        %v1238 = vshrl.u32 %v1237, 7
        %v1239 = vsub.s32 0, %v1238
        %v1240 = vrot.slane %v1236, %v1239
        %v1241 = vmul.f32 %v1234, %v1240
        %v1242 = vmul.f32 %v1235, %v1240
        %v1243 = vld [vmem:[#allocation7 + $0x3] sm:$0x1]
        %v1244 = vlaneseq
        %v1245 = vshrl.u32 %v1244, 7
        %v1246 = vsub.s32 0, %v1245
        %v1247 = vrot.slane %v1243, %v1246
        %v1248 = vadd.f32 %v1241, %v1247
        %v1249 = vadd.f32 %v1242, %v1247
        %v1250 = vmul.f32 %v1248, 0.01
        %v1251 = vmul.f32 %v1249, 0.01
        %v1252 = vmax.f32 %v1248, %v1250
        %v1253 = vmax.f32 %v1249, %v1251
        %v1254 = vadd.f32 %v1217, %v1252
        %v1255 = vadd.f32 %v1218, %v1253
        %v1256 = vld [vmem:[%s6] sm:$0xff]
        %v1257 = vld [vmem:[%s6 + $0x8] sm:$0xff]
        %v1258 = vld [vmem:[%s6 + $0x10] sm:$0xff]
        %v1259 = vld [vmem:[%s6 + $0x18] sm:$0xff]
        %v1260 = vld [vmem:[%s6 + $0x20] sm:$0xff]
        %v1261 = vld [vmem:[%s6 + $0x28] sm:$0xff]
        %v1262 = vld [vmem:[%s6 + $0x30] sm:$0xff]
        %v1263 = vld [vmem:[%s6 + $0x38] sm:$0xff]
        %v1264 = vld [vmem:[%s6 + $0x40] sm:$0xff]
        %v1265 = vld [vmem:[%s6 + $0x48] sm:$0xff]
        %v1266 = vld [vmem:[%s6 + $0x50] sm:$0xff]
        %v1267 = vld [vmem:[%s6 + $0x58] sm:$0xff]
        %v1268 = vld [vmem:[%s6 + $0x60] sm:$0xff]
        %v1269 = vld [vmem:[%s6 + $0x68] sm:$0xff]
        %v1270 = vld [vmem:[%s6 + $0x70] sm:$0xff]
        %v1271 = vld [vmem:[%s6 + $0x78] sm:$0xff]
        %v1272 = vld [vmem:[%s7] sm:$0x1]
        %v1274 = vlaneseq
        %v1275 = vshrl.u32 %v1274, 7
        %v1276 = vsub.s32 0, %v1275
        %v1277 = vrot.slane %v1272, %v1276
        %1279 = vmatprep.subr.mxu0 0.0
        %v1280 = vand.u32 %v1256, 4294901760
        %1281 = vmatpush1.msra.mxu0 %v1280
        %1282 = vmatprep.subr.mxu0 0.0
        %v1283 = vand.u32 %v1257, 4294901760
        %1284 = vmatpush1.msra.mxu0 %v1283
        %1285 = vmatprep.subr.mxu0 0.0
        %v1286 = vand.u32 %v1258, 4294901760
        %1287 = vmatpush1.msra.mxu0 %v1286
        %1288 = vmatprep.subr.mxu0 0.0
        %v1289 = vand.u32 %v1259, 4294901760
        %1290 = vmatpush1.msra.mxu0 %v1289
        %1291 = vmatprep.subr.mxu0 0.0
        %v1292 = vand.u32 %v1260, 4294901760
        %1293 = vmatpush1.msra.mxu0 %v1292
        %1294 = vmatprep.subr.mxu0 0.0
        %v1295 = vand.u32 %v1261, 4294901760
        %1296 = vmatpush1.msra.mxu0 %v1295
        %1297 = vmatprep.subr.mxu0 0.0
        %v1298 = vand.u32 %v1262, 4294901760
        %1299 = vmatpush1.msra.mxu0 %v1298
        %1300 = vmatprep.subr.mxu0 0.0
        %v1301 = vand.u32 %v1263, 4294901760
        %1302 = vmatpush1.msra.mxu0 %v1301
        %1303 = vmatprep.subr.mxu0 0.0
        %v1304 = vand.u32 %v1264, 4294901760
        %1305 = vmatpush1.msra.mxu0 %v1304
        %1306 = vmatprep.subr.mxu0 0.0
        %v1307 = vand.u32 %v1265, 4294901760
        %1308 = vmatpush1.msra.mxu0 %v1307
        %1309 = vmatprep.subr.mxu0 0.0
        %v1310 = vand.u32 %v1266, 4294901760
        %1311 = vmatpush1.msra.mxu0 %v1310
        %1312 = vmatprep.subr.mxu0 0.0
        %v1313 = vand.u32 %v1267, 4294901760
        %1314 = vmatpush1.msra.mxu0 %v1313
        %1315 = vmatprep.subr.mxu0 0.0
        %v1316 = vand.u32 %v1268, 4294901760
        %1317 = vmatpush1.msra.mxu0 %v1316
        %1318 = vmatprep.subr.mxu0 0.0
        %v1319 = vand.u32 %v1269, 4294901760
        %1320 = vmatpush1.msra.mxu0 %v1319
        %1321 = vmatprep.subr.mxu0 0.0
        %v1322 = vand.u32 %v1270, 4294901760
        %1323 = vmatpush1.msra.mxu0 %v1322
        %1324 = vmatprep.subr.mxu0 0.0
        %v1325 = vand.u32 %v1271, 4294901760
        %1326 = vmatpush1.msra.mxu0 %v1325
        %1327 = vmatprep.subr.mxu0 0.0
        %1328 = vmatpush1.msra.mxu0 0.0
        %1329 = vmatprep.subr.mxu0 0.0
        %1330 = vmatpush1.msra.mxu0 0.0
        %1331 = vmatprep.subr.mxu0 0.0
        %1332 = vmatpush1.msra.mxu0 0.0
        %1333 = vmatprep.subr.mxu0 0.0
        %1334 = vmatpush1.msra.mxu0 0.0
        %1335 = vmatprep.subr.mxu0 0.0
        %1336 = vmatpush1.msra.mxu0 0.0
        %1337 = vmatprep.subr.mxu0 0.0
        %1338 = vmatpush1.msra.mxu0 0.0
        %1339 = vmatprep.subr.mxu0 0.0
        %1340 = vmatpush1.msra.mxu0 0.0
        %1341 = vmatprep.subr.mxu0 0.0
        %1342 = vmatpush1.msra.mxu0 0.0
        %1343 = vmatprep.subr.mxu0 0.0
        %1344 = vmatpush1.msra.mxu0 0.0
        %1345 = vmatprep.subr.mxu0 0.0
        %1346 = vmatpush1.msra.mxu0 0.0
        %1347 = vmatprep.subr.mxu0 0.0
        %1348 = vmatpush1.msra.mxu0 0.0
        %1349 = vmatprep.subr.mxu0 0.0
        %1350 = vmatpush1.msra.mxu0 0.0
        %1351 = vmatprep.subr.mxu0 0.0
        %1352 = vmatpush1.msra.mxu0 0.0
        %1353 = vmatprep.subr.mxu0 0.0
        %1354 = vmatpush1.msra.mxu0 0.0
        %1355 = vmatprep.subr.mxu0 0.0
        %1356 = vmatpush1.msra.mxu0 0.0
        %1357 = vmatprep.subr.mxu0 0.0
        %1358 = vmatpush1.msra.mxu0 0.0
        %1359 = vmatprep.mubr.f32.mxu0 0.0
        %v1360 = vand.u32 %v1254, 4294901760
        %v1361 = vsub.f32 %v1254, %v1360
        %v1362 = vand.u32 %v1361, 4294901760
        %v1363 = vsub.f32 %v1361, %v1362
        %v1364 = vand.u32 %v1363, 4294901760
        %1365 = vmatmul.mubr.f32.gmra.mrb[0].mxu0 %v1364
        %v1366 = vpop.f32.mrb[0].mxu0
        %v1367 = vadd.f32 %v1277, %v1366
        %v1368 = vpop.f32.mrb[0].mxu0
        %1369 = vmatprep.mubr.f32.mxu0 0.0
        %v1370 = vand.u32 %v1255, 4294901760
        %v1371 = vsub.f32 %v1255, %v1370
        %v1372 = vand.u32 %v1371, 4294901760
        %v1373 = vsub.f32 %v1371, %v1372
        %v1374 = vand.u32 %v1373, 4294901760
        %1375 = vmatmul.mubr.f32.gmra.mrb[0].mxu0 %v1374
        %v1376 = vpop.f32.mrb[0].mxu0
        %v1377 = vadd.f32 %v1277, %v1376
        %v1378 = vpop.f32.mrb[0].mxu0
        %1379 = vdwg.mxu0
        %1380 = vmatprep.subr.mxu0 0.0
        %v1381 = vand.u32 %v1256, 4294901760
        %v1382 = vsub.f32 %v1256, %v1381
        %v1383 = vand.u32 %v1382, 4294901760
        %v1384 = vsub.f32 %v1382, %v1383
        %v1385 = vand.u32 %v1384, 4294901760
        %1386 = vmatpush1.msra.mxu0 %v1385
        %1387 = vmatprep.subr.mxu0 0.0
        %v1388 = vand.u32 %v1257, 4294901760
        %v1389 = vsub.f32 %v1257, %v1388
        %v1390 = vand.u32 %v1389, 4294901760
        %v1391 = vsub.f32 %v1389, %v1390
        %v1392 = vand.u32 %v1391, 4294901760
        %1393 = vmatpush1.msra.mxu0 %v1392
        %1394 = vmatprep.subr.mxu0 0.0
        %v1395 = vand.u32 %v1258, 4294901760
        %v1396 = vsub.f32 %v1258, %v1395
        %v1397 = vand.u32 %v1396, 4294901760
        %v1398 = vsub.f32 %v1396, %v1397
        %v1399 = vand.u32 %v1398, 4294901760
        %1400 = vmatpush1.msra.mxu0 %v1399
        %1401 = vmatprep.subr.mxu0 0.0
        %v1402 = vand.u32 %v1259, 4294901760
        %v1403 = vsub.f32 %v1259, %v1402
        %v1404 = vand.u32 %v1403, 4294901760
        %v1405 = vsub.f32 %v1403, %v1404
        %v1406 = vand.u32 %v1405, 4294901760
        %1407 = vmatpush1.msra.mxu0 %v1406
        %1408 = vmatprep.subr.mxu0 0.0
        %v1409 = vand.u32 %v1260, 4294901760
        %v1410 = vsub.f32 %v1260, %v1409
        %v1411 = vand.u32 %v1410, 4294901760
        %v1412 = vsub.f32 %v1410, %v1411
        %v1413 = vand.u32 %v1412, 4294901760
        %1414 = vmatpush1.msra.mxu0 %v1413
        %1415 = vmatprep.subr.mxu0 0.0
        %v1416 = vand.u32 %v1261, 4294901760
        %v1417 = vsub.f32 %v1261, %v1416
        %v1418 = vand.u32 %v1417, 4294901760
        %v1419 = vsub.f32 %v1417, %v1418
        %v1420 = vand.u32 %v1419, 4294901760
        %1421 = vmatpush1.msra.mxu0 %v1420
        %1422 = vmatprep.subr.mxu0 0.0
        %v1423 = vand.u32 %v1262, 4294901760
        %v1424 = vsub.f32 %v1262, %v1423
        %v1425 = vand.u32 %v1424, 4294901760
        %v1426 = vsub.f32 %v1424, %v1425
        %v1427 = vand.u32 %v1426, 4294901760
        %1428 = vmatpush1.msra.mxu0 %v1427
        %1429 = vmatprep.subr.mxu0 0.0
        %v1430 = vand.u32 %v1263, 4294901760
        %v1431 = vsub.f32 %v1263, %v1430
        %v1432 = vand.u32 %v1431, 4294901760
        %v1433 = vsub.f32 %v1431, %v1432
        %v1434 = vand.u32 %v1433, 4294901760
        %1435 = vmatpush1.msra.mxu0 %v1434
        %1436 = vmatprep.subr.mxu0 0.0
        %v1437 = vand.u32 %v1264, 4294901760
        %v1438 = vsub.f32 %v1264, %v1437
        %v1439 = vand.u32 %v1438, 4294901760
        %v1440 = vsub.f32 %v1438, %v1439
        %v1441 = vand.u32 %v1440, 4294901760
        %1442 = vmatpush1.msra.mxu0 %v1441
        %1443 = vmatprep.subr.mxu0 0.0
        %v1444 = vand.u32 %v1265, 4294901760
        %v1445 = vsub.f32 %v1265, %v1444
        %v1446 = vand.u32 %v1445, 4294901760
        %v1447 = vsub.f32 %v1445, %v1446
        %v1448 = vand.u32 %v1447, 4294901760
        %1449 = vmatpush1.msra.mxu0 %v1448
        %1450 = vmatprep.subr.mxu0 0.0
        %v1451 = vand.u32 %v1266, 4294901760
        %v1452 = vsub.f32 %v1266, %v1451
        %v1453 = vand.u32 %v1452, 4294901760
        %v1454 = vsub.f32 %v1452, %v1453
        %v1455 = vand.u32 %v1454, 4294901760
        %1456 = vmatpush1.msra.mxu0 %v1455
        %1457 = vmatprep.subr.mxu0 0.0
        %v1458 = vand.u32 %v1267, 4294901760
        %v1459 = vsub.f32 %v1267, %v1458
        %v1460 = vand.u32 %v1459, 4294901760
        %v1461 = vsub.f32 %v1459, %v1460
        %v1462 = vand.u32 %v1461, 4294901760
        %1463 = vmatpush1.msra.mxu0 %v1462
        %1464 = vmatprep.subr.mxu0 0.0
        %v1465 = vand.u32 %v1268, 4294901760
        %v1466 = vsub.f32 %v1268, %v1465
        %v1467 = vand.u32 %v1466, 4294901760
        %v1468 = vsub.f32 %v1466, %v1467
        %v1469 = vand.u32 %v1468, 4294901760
        %1470 = vmatpush1.msra.mxu0 %v1469
        %1471 = vmatprep.subr.mxu0 0.0
        %v1472 = vand.u32 %v1269, 4294901760
        %v1473 = vsub.f32 %v1269, %v1472
        %v1474 = vand.u32 %v1473, 4294901760
        %v1475 = vsub.f32 %v1473, %v1474
        %v1476 = vand.u32 %v1475, 4294901760
        %1477 = vmatpush1.msra.mxu0 %v1476
        %1478 = vmatprep.subr.mxu0 0.0
        %v1479 = vand.u32 %v1270, 4294901760
        %v1480 = vsub.f32 %v1270, %v1479
        %v1481 = vand.u32 %v1480, 4294901760
        %v1482 = vsub.f32 %v1480, %v1481
        %v1483 = vand.u32 %v1482, 4294901760
        %1484 = vmatpush1.msra.mxu0 %v1483
        %1485 = vmatprep.subr.mxu0 0.0
        %v1486 = vand.u32 %v1271, 4294901760
        %v1487 = vsub.f32 %v1271, %v1486
        %v1488 = vand.u32 %v1487, 4294901760
        %v1489 = vsub.f32 %v1487, %v1488
        %v1490 = vand.u32 %v1489, 4294901760
        %1491 = vmatpush1.msra.mxu0 %v1490
        %1492 = vmatprep.subr.mxu0 0.0
        %1493 = vmatpush1.msra.mxu0 0.0
        %1494 = vmatprep.subr.mxu0 0.0
        %1495 = vmatpush1.msra.mxu0 0.0
        %1496 = vmatprep.subr.mxu0 0.0
        %1497 = vmatpush1.msra.mxu0 0.0
        %1498 = vmatprep.subr.mxu0 0.0
        %1499 = vmatpush1.msra.mxu0 0.0
        %1500 = vmatprep.subr.mxu0 0.0
        %1501 = vmatpush1.msra.mxu0 0.0
        %1502 = vmatprep.subr.mxu0 0.0
        %1503 = vmatpush1.msra.mxu0 0.0
        %1504 = vmatprep.subr.mxu0 0.0
        %1505 = vmatpush1.msra.mxu0 0.0
        %1506 = vmatprep.subr.mxu0 0.0
        %1507 = vmatpush1.msra.mxu0 0.0
        %1508 = vmatprep.subr.mxu0 0.0
        %1509 = vmatpush1.msra.mxu0 0.0
        %1510 = vmatprep.subr.mxu0 0.0
        %1511 = vmatpush1.msra.mxu0 0.0
        %1512 = vmatprep.subr.mxu0 0.0
        %1513 = vmatpush1.msra.mxu0 0.0
        %1514 = vmatprep.subr.mxu0 0.0
        %1515 = vmatpush1.msra.mxu0 0.0
        %1516 = vmatprep.subr.mxu0 0.0
        %1517 = vmatpush1.msra.mxu0 0.0
        %1518 = vmatprep.subr.mxu0 0.0
        %1519 = vmatpush1.msra.mxu0 0.0
        %1520 = vmatprep.subr.mxu0 0.0
        %1521 = vmatpush1.msra.mxu0 0.0
        %1522 = vmatprep.subr.mxu0 0.0
        %1523 = vmatpush1.msra.mxu0 0.0
        %1524 = vmatprep.mubr.f32.mxu0 0.0
        %v1525 = vand.u32 %v1254, 4294901760
        %1526 = vmatmul.mubr.f32.gmra.mrb[0].mxu0 %v1525
        %v1527 = vpop.f32.mrb[0].mxu0
        %v1528 = vadd.f32 %v1367, %v1527
        %v1529 = vpop.f32.mrb[0].mxu0
        %1530 = vmatprep.mubr.f32.mxu0 0.0
        %v1531 = vand.u32 %v1255, 4294901760
        %1532 = vmatmul.mubr.f32.gmra.mrb[0].mxu0 %v1531
        %v1533 = vpop.f32.mrb[0].mxu0
        %v1534 = vadd.f32 %v1377, %v1533
        %v1535 = vpop.f32.mrb[0].mxu0
        %1536 = vdwg.mxu0
        %1537 = vmatprep.subr.mxu0 0.0
        %v1538 = vand.u32 %v1256, 4294901760
        %v1539 = vsub.f32 %v1256, %v1538
        %1540 = vmatpush1.msra.mxu0 %v1539
        %1541 = vmatprep.subr.mxu0 0.0
        %v1542 = vand.u32 %v1257, 4294901760
        %v1543 = vsub.f32 %v1257, %v1542
        %1544 = vmatpush1.msra.mxu0 %v1543
        %1545 = vmatprep.subr.mxu0 0.0
        %v1546 = vand.u32 %v1258, 4294901760
        %v1547 = vsub.f32 %v1258, %v1546
        %1548 = vmatpush1.msra.mxu0 %v1547
        %1549 = vmatprep.subr.mxu0 0.0
        %v1550 = vand.u32 %v1259, 4294901760
        %v1551 = vsub.f32 %v1259, %v1550
        %1552 = vmatpush1.msra.mxu0 %v1551
        %1553 = vmatprep.subr.mxu0 0.0
        %v1554 = vand.u32 %v1260, 4294901760
        %v1555 = vsub.f32 %v1260, %v1554
        %1556 = vmatpush1.msra.mxu0 %v1555
        %1557 = vmatprep.subr.mxu0 0.0
        %v1558 = vand.u32 %v1261, 4294901760
        %v1559 = vsub.f32 %v1261, %v1558
        %1560 = vmatpush1.msra.mxu0 %v1559
        %1561 = vmatprep.subr.mxu0 0.0
        %v1562 = vand.u32 %v1262, 4294901760
        %v1563 = vsub.f32 %v1262, %v1562
        %1564 = vmatpush1.msra.mxu0 %v1563
        %1565 = vmatprep.subr.mxu0 0.0
        %v1566 = vand.u32 %v1263, 4294901760
        %v1567 = vsub.f32 %v1263, %v1566
        %1568 = vmatpush1.msra.mxu0 %v1567
        %1569 = vmatprep.subr.mxu0 0.0
        %v1570 = vand.u32 %v1264, 4294901760
        %v1571 = vsub.f32 %v1264, %v1570
        %1572 = vmatpush1.msra.mxu0 %v1571
        %1573 = vmatprep.subr.mxu0 0.0
        %v1574 = vand.u32 %v1265, 4294901760
        %v1575 = vsub.f32 %v1265, %v1574
        %1576 = vmatpush1.msra.mxu0 %v1575
        %1577 = vmatprep.subr.mxu0 0.0
        %v1578 = vand.u32 %v1266, 4294901760
        %v1579 = vsub.f32 %v1266, %v1578
        %1580 = vmatpush1.msra.mxu0 %v1579
        %1581 = vmatprep.subr.mxu0 0.0
        %v1582 = vand.u32 %v1267, 4294901760
        %v1583 = vsub.f32 %v1267, %v1582
        %1584 = vmatpush1.msra.mxu0 %v1583
        %1585 = vmatprep.subr.mxu0 0.0
        %v1586 = vand.u32 %v1268, 4294901760
        %v1587 = vsub.f32 %v1268, %v1586
        %1588 = vmatpush1.msra.mxu0 %v1587
        %1589 = vmatprep.subr.mxu0 0.0
        %v1590 = vand.u32 %v1269, 4294901760
        %v1591 = vsub.f32 %v1269, %v1590
        %1592 = vmatpush1.msra.mxu0 %v1591
        %1593 = vmatprep.subr.mxu0 0.0
        %v1594 = vand.u32 %v1270, 4294901760
        %v1595 = vsub.f32 %v1270, %v1594
        %1596 = vmatpush1.msra.mxu0 %v1595
        %1597 = vmatprep.subr.mxu0 0.0
        %v1598 = vand.u32 %v1271, 4294901760
        %v1599 = vsub.f32 %v1271, %v1598
        %1600 = vmatpush1.msra.mxu0 %v1599
        %1601 = vmatprep.subr.mxu0 0.0
        %1602 = vmatpush1.msra.mxu0 0.0
        %1603 = vmatprep.subr.mxu0 0.0
        %1604 = vmatpush1.msra.mxu0 0.0
        %1605 = vmatprep.subr.mxu0 0.0
        %1606 = vmatpush1.msra.mxu0 0.0
        %1607 = vmatprep.subr.mxu0 0.0
        %1608 = vmatpush1.msra.mxu0 0.0
        %1609 = vmatprep.subr.mxu0 0.0
        %1610 = vmatpush1.msra.mxu0 0.0
        %1611 = vmatprep.subr.mxu0 0.0
        %1612 = vmatpush1.msra.mxu0 0.0
        %1613 = vmatprep.subr.mxu0 0.0
        %1614 = vmatpush1.msra.mxu0 0.0
        %1615 = vmatprep.subr.mxu0 0.0
        %1616 = vmatpush1.msra.mxu0 0.0
        %1617 = vmatprep.subr.mxu0 0.0
        %1618 = vmatpush1.msra.mxu0 0.0
        %1619 = vmatprep.subr.mxu0 0.0
        %1620 = vmatpush1.msra.mxu0 0.0
        %1621 = vmatprep.subr.mxu0 0.0
        %1622 = vmatpush1.msra.mxu0 0.0
        %1623 = vmatprep.subr.mxu0 0.0
        %1624 = vmatpush1.msra.mxu0 0.0
        %1625 = vmatprep.subr.mxu0 0.0
        %1626 = vmatpush1.msra.mxu0 0.0
        %1627 = vmatprep.subr.mxu0 0.0
        %1628 = vmatpush1.msra.mxu0 0.0
        %1629 = vmatprep.subr.mxu0 0.0
        %1630 = vmatpush1.msra.mxu0 0.0
        %1631 = vmatprep.subr.mxu0 0.0
        %1632 = vmatpush1.msra.mxu0 0.0
        %1633 = vmatprep.mubr.f32.mxu0 0.0
        %v1634 = vand.u32 %v1254, 4294901760
        %v1635 = vsub.f32 %v1254, %v1634
        %1636 = vmatmul.mubr.f32.gmra.mrb[0].mxu0 %v1635
        %v1637 = vpop.f32.mrb[0].mxu0
        %v1638 = vadd.f32 %v1528, %v1637
        %v1639 = vpop.f32.mrb[0].mxu0
        %1640 = vmatprep.mubr.f32.mxu0 0.0
        %v1641 = vand.u32 %v1255, 4294901760
        %v1642 = vsub.f32 %v1255, %v1641
        %1643 = vmatmul.mubr.f32.gmra.mrb[0].mxu0 %v1642
        %v1644 = vpop.f32.mrb[0].mxu0
        %v1645 = vadd.f32 %v1534, %v1644
        %v1646 = vpop.f32.mrb[0].mxu0
        %1647 = vdwg.mxu0
        %1648 = vmatprep.subr.mxu0 0.0
        %v1649 = vand.u32 %v1256, 4294901760
        %1650 = vmatpush1.msra.mxu0 %v1649
        %1651 = vmatprep.subr.mxu0 0.0
        %v1652 = vand.u32 %v1257, 4294901760
        %1653 = vmatpush1.msra.mxu0 %v1652
        %1654 = vmatprep.subr.mxu0 0.0
        %v1655 = vand.u32 %v1258, 4294901760
        %1656 = vmatpush1.msra.mxu0 %v1655
        %1657 = vmatprep.subr.mxu0 0.0
        %v1658 = vand.u32 %v1259, 4294901760
        %1659 = vmatpush1.msra.mxu0 %v1658
        %1660 = vmatprep.subr.mxu0 0.0
        %v1661 = vand.u32 %v1260, 4294901760
        %1662 = vmatpush1.msra.mxu0 %v1661
        %1663 = vmatprep.subr.mxu0 0.0
        %v1664 = vand.u32 %v1261, 4294901760
        %1665 = vmatpush1.msra.mxu0 %v1664
        %1666 = vmatprep.subr.mxu0 0.0
        %v1667 = vand.u32 %v1262, 4294901760
        %1668 = vmatpush1.msra.mxu0 %v1667
        %1669 = vmatprep.subr.mxu0 0.0
        %v1670 = vand.u32 %v1263, 4294901760
        %1671 = vmatpush1.msra.mxu0 %v1670
        %1672 = vmatprep.subr.mxu0 0.0
        %v1673 = vand.u32 %v1264, 4294901760
        %1674 = vmatpush1.msra.mxu0 %v1673
        %1675 = vmatprep.subr.mxu0 0.0
        %v1676 = vand.u32 %v1265, 4294901760
        %1677 = vmatpush1.msra.mxu0 %v1676
        %1678 = vmatprep.subr.mxu0 0.0
        %v1679 = vand.u32 %v1266, 4294901760
        %1680 = vmatpush1.msra.mxu0 %v1679
        %1681 = vmatprep.subr.mxu0 0.0
        %v1682 = vand.u32 %v1267, 4294901760
        %1683 = vmatpush1.msra.mxu0 %v1682
        %1684 = vmatprep.subr.mxu0 0.0
        %v1685 = vand.u32 %v1268, 4294901760
        %1686 = vmatpush1.msra.mxu0 %v1685
        %1687 = vmatprep.subr.mxu0 0.0
        %v1688 = vand.u32 %v1269, 4294901760
        %1689 = vmatpush1.msra.mxu0 %v1688
        %1690 = vmatprep.subr.mxu0 0.0
        %v1691 = vand.u32 %v1270, 4294901760
        %1692 = vmatpush1.msra.mxu0 %v1691
        %1693 = vmatprep.subr.mxu0 0.0
        %v1694 = vand.u32 %v1271, 4294901760
        %1695 = vmatpush1.msra.mxu0 %v1694
        %1696 = vmatprep.subr.mxu0 0.0
        %1697 = vmatpush1.msra.mxu0 0.0
        %1698 = vmatprep.subr.mxu0 0.0
        %1699 = vmatpush1.msra.mxu0 0.0
        %1700 = vmatprep.subr.mxu0 0.0
        %1701 = vmatpush1.msra.mxu0 0.0
        %1702 = vmatprep.subr.mxu0 0.0
        %1703 = vmatpush1.msra.mxu0 0.0
        %1704 = vmatprep.subr.mxu0 0.0
        %1705 = vmatpush1.msra.mxu0 0.0
        %1706 = vmatprep.subr.mxu0 0.0
        %1707 = vmatpush1.msra.mxu0 0.0
        %1708 = vmatprep.subr.mxu0 0.0
        %1709 = vmatpush1.msra.mxu0 0.0
        %1710 = vmatprep.subr.mxu0 0.0
        %1711 = vmatpush1.msra.mxu0 0.0
        %1712 = vmatprep.subr.mxu0 0.0
        %1713 = vmatpush1.msra.mxu0 0.0
        %1714 = vmatprep.subr.mxu0 0.0
        %1715 = vmatpush1.msra.mxu0 0.0
        %1716 = vmatprep.subr.mxu0 0.0
        %1717 = vmatpush1.msra.mxu0 0.0
        %1718 = vmatprep.subr.mxu0 0.0
        %1719 = vmatpush1.msra.mxu0 0.0
        %1720 = vmatprep.subr.mxu0 0.0
        %1721 = vmatpush1.msra.mxu0 0.0
        %1722 = vmatprep.subr.mxu0 0.0
        %1723 = vmatpush1.msra.mxu0 0.0
        %1724 = vmatprep.subr.mxu0 0.0
        %1725 = vmatpush1.msra.mxu0 0.0
        %1726 = vmatprep.subr.mxu0 0.0
        %1727 = vmatpush1.msra.mxu0 0.0
        %1728 = vmatprep.mubr.f32.mxu0 0.0
        %v1729 = vand.u32 %v1254, 4294901760
        %v1730 = vsub.f32 %v1254, %v1729
        %v1731 = vand.u32 %v1730, 4294901760
        %1732 = vmatmul.mubr.f32.gmra.mrb[0].mxu0 %v1731
        %v1733 = vpop.f32.mrb[0].mxu0
        %v1734 = vadd.f32 %v1638, %v1733
        %v1735 = vpop.f32.mrb[0].mxu0
        %1736 = vmatprep.mubr.f32.mxu0 0.0
        %v1737 = vand.u32 %v1255, 4294901760
        %v1738 = vsub.f32 %v1255, %v1737
        %v1739 = vand.u32 %v1738, 4294901760
        %1740 = vmatmul.mubr.f32.gmra.mrb[0].mxu0 %v1739
        %v1741 = vpop.f32.mrb[0].mxu0
        %v1742 = vadd.f32 %v1645, %v1741
        %v1743 = vpop.f32.mrb[0].mxu0
        %1744 = vdwg.mxu0
        %1745 = vmatprep.subr.mxu0 0.0
        %v1746 = vand.u32 %v1256, 4294901760
        %v1747 = vsub.f32 %v1256, %v1746
        %v1748 = vand.u32 %v1747, 4294901760
        %1749 = vmatpush1.msra.mxu0 %v1748
        %1750 = vmatprep.subr.mxu0 0.0
        %v1751 = vand.u32 %v1257, 4294901760
        %v1752 = vsub.f32 %v1257, %v1751
        %v1753 = vand.u32 %v1752, 4294901760
        %1754 = vmatpush1.msra.mxu0 %v1753
        %1755 = vmatprep.subr.mxu0 0.0
        %v1756 = vand.u32 %v1258, 4294901760
        %v1757 = vsub.f32 %v1258, %v1756
        %v1758 = vand.u32 %v1757, 4294901760
        %1759 = vmatpush1.msra.mxu0 %v1758
        %1760 = vmatprep.subr.mxu0 0.0
        %v1761 = vand.u32 %v1259, 4294901760
        %v1762 = vsub.f32 %v1259, %v1761
        %v1763 = vand.u32 %v1762, 4294901760
        %1764 = vmatpush1.msra.mxu0 %v1763
        %1765 = vmatprep.subr.mxu0 0.0
        %v1766 = vand.u32 %v1260, 4294901760
        %v1767 = vsub.f32 %v1260, %v1766
        %v1768 = vand.u32 %v1767, 4294901760
        %1769 = vmatpush1.msra.mxu0 %v1768
        %1770 = vmatprep.subr.mxu0 0.0
        %v1771 = vand.u32 %v1261, 4294901760
        %v1772 = vsub.f32 %v1261, %v1771
        %v1773 = vand.u32 %v1772, 4294901760
        %1774 = vmatpush1.msra.mxu0 %v1773
        %1775 = vmatprep.subr.mxu0 0.0
        %v1776 = vand.u32 %v1262, 4294901760
        %v1777 = vsub.f32 %v1262, %v1776
        %v1778 = vand.u32 %v1777, 4294901760
        %1779 = vmatpush1.msra.mxu0 %v1778
        %1780 = vmatprep.subr.mxu0 0.0
        %v1781 = vand.u32 %v1263, 4294901760
        %v1782 = vsub.f32 %v1263, %v1781
        %v1783 = vand.u32 %v1782, 4294901760
        %1784 = vmatpush1.msra.mxu0 %v1783
        %1785 = vmatprep.subr.mxu0 0.0
        %v1786 = vand.u32 %v1264, 4294901760
        %v1787 = vsub.f32 %v1264, %v1786
        %v1788 = vand.u32 %v1787, 4294901760
        %1789 = vmatpush1.msra.mxu0 %v1788
        %1790 = vmatprep.subr.mxu0 0.0
        %v1791 = vand.u32 %v1265, 4294901760
        %v1792 = vsub.f32 %v1265, %v1791
        %v1793 = vand.u32 %v1792, 4294901760
        %1794 = vmatpush1.msra.mxu0 %v1793
        %1795 = vmatprep.subr.mxu0 0.0
        %v1796 = vand.u32 %v1266, 4294901760
        %v1797 = vsub.f32 %v1266, %v1796
        %v1798 = vand.u32 %v1797, 4294901760
        %1799 = vmatpush1.msra.mxu0 %v1798
        %1800 = vmatprep.subr.mxu0 0.0
        %v1801 = vand.u32 %v1267, 4294901760
        %v1802 = vsub.f32 %v1267, %v1801
        %v1803 = vand.u32 %v1802, 4294901760
        %1804 = vmatpush1.msra.mxu0 %v1803
        %1805 = vmatprep.subr.mxu0 0.0
        %v1806 = vand.u32 %v1268, 4294901760
        %v1807 = vsub.f32 %v1268, %v1806
        %v1808 = vand.u32 %v1807, 4294901760
        %1809 = vmatpush1.msra.mxu0 %v1808
        %1810 = vmatprep.subr.mxu0 0.0
        %v1811 = vand.u32 %v1269, 4294901760
        %v1812 = vsub.f32 %v1269, %v1811
        %v1813 = vand.u32 %v1812, 4294901760
        %1814 = vmatpush1.msra.mxu0 %v1813
        %1815 = vmatprep.subr.mxu0 0.0
        %v1816 = vand.u32 %v1270, 4294901760
        %v1817 = vsub.f32 %v1270, %v1816
        %v1818 = vand.u32 %v1817, 4294901760
        %1819 = vmatpush1.msra.mxu0 %v1818
        %1820 = vmatprep.subr.mxu0 0.0
        %v1821 = vand.u32 %v1271, 4294901760
        %v1822 = vsub.f32 %v1271, %v1821
        %v1823 = vand.u32 %v1822, 4294901760
        %1824 = vmatpush1.msra.mxu0 %v1823
        %1825 = vmatprep.subr.mxu0 0.0
        %1826 = vmatpush1.msra.mxu0 0.0
        %1827 = vmatprep.subr.mxu0 0.0
        %1828 = vmatpush1.msra.mxu0 0.0
        %1829 = vmatprep.subr.mxu0 0.0
        %1830 = vmatpush1.msra.mxu0 0.0
        %1831 = vmatprep.subr.mxu0 0.0
        %1832 = vmatpush1.msra.mxu0 0.0
        %1833 = vmatprep.subr.mxu0 0.0
        %1834 = vmatpush1.msra.mxu0 0.0
        %1835 = vmatprep.subr.mxu0 0.0
        %1836 = vmatpush1.msra.mxu0 0.0
        %1837 = vmatprep.subr.mxu0 0.0
        %1838 = vmatpush1.msra.mxu0 0.0
        %1839 = vmatprep.subr.mxu0 0.0
        %1840 = vmatpush1.msra.mxu0 0.0
        %1841 = vmatprep.subr.mxu0 0.0
        %1842 = vmatpush1.msra.mxu0 0.0
        %1843 = vmatprep.subr.mxu0 0.0
        %1844 = vmatpush1.msra.mxu0 0.0
        %1845 = vmatprep.subr.mxu0 0.0
        %1846 = vmatpush1.msra.mxu0 0.0
        %1847 = vmatprep.subr.mxu0 0.0
        %1848 = vmatpush1.msra.mxu0 0.0
        %1849 = vmatprep.subr.mxu0 0.0
        %1850 = vmatpush1.msra.mxu0 0.0
        %1851 = vmatprep.subr.mxu0 0.0
        %1852 = vmatpush1.msra.mxu0 0.0
        %1853 = vmatprep.subr.mxu0 0.0
        %1854 = vmatpush1.msra.mxu0 0.0
        %1855 = vmatprep.subr.mxu0 0.0
        %1856 = vmatpush1.msra.mxu0 0.0
        %1857 = vmatprep.mubr.f32.mxu0 0.0
        %v1858 = vand.u32 %v1254, 4294901760
        %1859 = vmatmul.mubr.f32.gmra.mrb[0].mxu0 %v1858
        %v1860 = vpop.f32.mrb[0].mxu0
        %v1861 = vadd.f32 %v1734, %v1860
        %v1862 = vpop.f32.mrb[0].mxu0
        %1863 = vmatprep.mubr.f32.mxu0 0.0
        %v1864 = vand.u32 %v1255, 4294901760
        %1865 = vmatmul.mubr.f32.gmra.mrb[0].mxu0 %v1864
        %v1866 = vpop.f32.mrb[0].mxu0
        %v1867 = vadd.f32 %v1742, %v1866
        %v1868 = vpop.f32.mrb[0].mxu0
        %1869 = vdwg.mxu0
        %1870 = vmatprep.subr.mxu0 0.0
        %v1871 = vand.u32 %v1256, 4294901760
        %1872 = vmatpush1.msra.mxu0 %v1871
        %1873 = vmatprep.subr.mxu0 0.0
        %v1874 = vand.u32 %v1257, 4294901760
        %1875 = vmatpush1.msra.mxu0 %v1874
        %1876 = vmatprep.subr.mxu0 0.0
        %v1877 = vand.u32 %v1258, 4294901760
        %1878 = vmatpush1.msra.mxu0 %v1877
        %1879 = vmatprep.subr.mxu0 0.0
        %v1880 = vand.u32 %v1259, 4294901760
        %1881 = vmatpush1.msra.mxu0 %v1880
        %1882 = vmatprep.subr.mxu0 0.0
        %v1883 = vand.u32 %v1260, 4294901760
        %1884 = vmatpush1.msra.mxu0 %v1883
        %1885 = vmatprep.subr.mxu0 0.0
        %v1886 = vand.u32 %v1261, 4294901760
        %1887 = vmatpush1.msra.mxu0 %v1886
        %1888 = vmatprep.subr.mxu0 0.0
        %v1889 = vand.u32 %v1262, 4294901760
        %1890 = vmatpush1.msra.mxu0 %v1889
        %1891 = vmatprep.subr.mxu0 0.0
        %v1892 = vand.u32 %v1263, 4294901760
        %1893 = vmatpush1.msra.mxu0 %v1892
        %1894 = vmatprep.subr.mxu0 0.0
        %v1895 = vand.u32 %v1264, 4294901760
        %1896 = vmatpush1.msra.mxu0 %v1895
        %1897 = vmatprep.subr.mxu0 0.0
        %v1898 = vand.u32 %v1265, 4294901760
        %1899 = vmatpush1.msra.mxu0 %v1898
        %1900 = vmatprep.subr.mxu0 0.0
        %v1901 = vand.u32 %v1266, 4294901760
        %1902 = vmatpush1.msra.mxu0 %v1901
        %1903 = vmatprep.subr.mxu0 0.0
        %v1904 = vand.u32 %v1267, 4294901760
        %1905 = vmatpush1.msra.mxu0 %v1904
        %1906 = vmatprep.subr.mxu0 0.0
        %v1907 = vand.u32 %v1268, 4294901760
        %1908 = vmatpush1.msra.mxu0 %v1907
        %1909 = vmatprep.subr.mxu0 0.0
        %v1910 = vand.u32 %v1269, 4294901760
        %1911 = vmatpush1.msra.mxu0 %v1910
        %1912 = vmatprep.subr.mxu0 0.0
        %v1913 = vand.u32 %v1270, 4294901760
        %1914 = vmatpush1.msra.mxu0 %v1913
        %1915 = vmatprep.subr.mxu0 0.0
        %v1916 = vand.u32 %v1271, 4294901760
        %1917 = vmatpush1.msra.mxu0 %v1916
        %1918 = vmatprep.subr.mxu0 0.0
        %1919 = vmatpush1.msra.mxu0 0.0
        %1920 = vmatprep.subr.mxu0 0.0
        %1921 = vmatpush1.msra.mxu0 0.0
        %1922 = vmatprep.subr.mxu0 0.0
        %1923 = vmatpush1.msra.mxu0 0.0
        %1924 = vmatprep.subr.mxu0 0.0
        %1925 = vmatpush1.msra.mxu0 0.0
        %1926 = vmatprep.subr.mxu0 0.0
        %1927 = vmatpush1.msra.mxu0 0.0
        %1928 = vmatprep.subr.mxu0 0.0
        %1929 = vmatpush1.msra.mxu0 0.0
        %1930 = vmatprep.subr.mxu0 0.0
        %1931 = vmatpush1.msra.mxu0 0.0
        %1932 = vmatprep.subr.mxu0 0.0
        %1933 = vmatpush1.msra.mxu0 0.0
        %1934 = vmatprep.subr.mxu0 0.0
        %1935 = vmatpush1.msra.mxu0 0.0
        %1936 = vmatprep.subr.mxu0 0.0
        %1937 = vmatpush1.msra.mxu0 0.0
        %1938 = vmatprep.subr.mxu0 0.0
        %1939 = vmatpush1.msra.mxu0 0.0
        %1940 = vmatprep.subr.mxu0 0.0
        %1941 = vmatpush1.msra.mxu0 0.0
        %1942 = vmatprep.subr.mxu0 0.0
        %1943 = vmatpush1.msra.mxu0 0.0
        %1944 = vmatprep.subr.mxu0 0.0
        %1945 = vmatpush1.msra.mxu0 0.0
        %1946 = vmatprep.subr.mxu0 0.0
        %1947 = vmatpush1.msra.mxu0 0.0
        %1948 = vmatprep.subr.mxu0 0.0
        %1949 = vmatpush1.msra.mxu0 0.0
        %1950 = vmatprep.mubr.f32.mxu0 0.0
        %v1951 = vand.u32 %v1254, 4294901760
        %1952 = vmatmul.mubr.f32.gmra.mrb[0].mxu0 %v1951
        %v1953 = vpop.f32.mrb[0].mxu0
        %v1954 = vadd.f32 %v1861, %v1953
        %v1955 = vpop.f32.mrb[0].mxu0
        %1956 = vmatprep.mubr.f32.mxu0 0.0
        %v1957 = vand.u32 %v1255, 4294901760
        %1958 = vmatmul.mubr.f32.gmra.mrb[0].mxu0 %v1957
        %v1959 = vpop.f32.mrb[0].mxu0
        %v1960 = vadd.f32 %v1867, %v1959
        %v1961 = vpop.f32.mrb[0].mxu0
        %1962 = vdwg.mxu0
        %v1963 = vmax.f32 %v1954, 0.0
        %v1964 = vmax.f32 %v1960, 0.0
        %1965 = vst [vmem:[%s349] sm:$0xff] %v1963
        %1966 = vst [vmem:[%s349 + $0x8] sm:$0xff] %v1964
        %s1967 = sand.u32 %s205, 1
        %s1968 = scalar_lea.sflag [#allocation4], %s1967
        %s1969 = sand.u32 %s205, 1
        %s1970 = smul.addr %s1969, 16
        %s1971 = scalar_lea.vmem [#allocation8], %s1970
        // Predicated region
        $region65: #{tpu_custom_call.1} parent=51 // pred_check
          %p1972 = pneg %p215
        $region66: #{tpu_custom_call.1} parent=51 // pred_check_branch
          %1974 = sbr.rel (%p1972) target = $region68
        $region67: #{tpu_custom_call.1} parent=51 // pred_region
          %s1975 = smul.u32 2, %s24
          %s1976 = ssub.s32 3, %s1975
          %p1977 = scmp.lt.s32.totalorder %s1976, 2
          %s1978 = scalar_select %p1977, %s1976, 2
          %s1979 = smul.u32 128, %s1978
          %s1981 = ssub.s32 256, %s1979
          %1982 = vsyncadd %s1968, %s1981
          %p1983 = scmp.ne.s32.totalorder 0, %s1979
          %s1984 = smul.addr %s1975, 128
          %s1985 = scalar_lea.hbm %s8, %s1984
          %s1986 = smul.u32 8, %s1978
          %s1987 = sshll.u32 %s1971, 4
          %s1988 = int_to_ptr.vmem [resolvable:$true] %s1987
          %s1989 = sshll.u32 %s1986, 4
          %1993 = dma.vmem_to_hbm [thread:$0]  (%p1983), %s1988, %s1989, %s1985, %s1968, 128, 128, 8
        $region68: #{tpu_custom_call.1} parent=51 // pred_fallthru
          _
      $region52: #{tpu_custom_call.1} parent=5 // pred_fallthru
        _
      %p1994 = scmp.le.s32.totalorder 2, %s19
      // Predicated region
      $region69: #{tpu_custom_call.1} parent=5 // pred_check
        %p1995 = pneg %p1994
      $region70: #{tpu_custom_call.1} parent=5 // pred_check_branch
        %1997 = sbr.rel (%p1995) target = $region72
      $region71: #{tpu_custom_call.1} parent=5 // pred_region
        %s1998 = ssub.s32 %s19, 2
        // Predicated region
        $region73: #{tpu_custom_call.1} parent=71 // pred_check
          %p1999 = pneg %p221
        $region74: #{tpu_custom_call.1} parent=71 // pred_check_branch
          %2001 = sbr.rel (%p1999) target = $region76
        $region75: #{tpu_custom_call.1} parent=71 // pred_region
          %s2002 = sand.u32 %s206, 1
          %s2003 = scalar_lea.sflag [#allocation4], %s2002
          %s2004 = sand.u32 %s206, 1
          %s2005 = smul.addr %s2004, 16
          %s2006 = scalar_lea.vmem [#allocation8], %s2005
          %2007 = dma.done %s2003, 256
        $region76: #{tpu_custom_call.1} parent=71 // pred_fallthru
          _
      $region72: #{tpu_custom_call.1} parent=5 // pred_fallthru
        _
    $region6: #{tpu_custom_call.1} parent=1 // loop_footer
      %s23 = sadd.s32 1, %s19
    $region7: #{tpu_custom_call.1} parent=1 // loop_footer_branch
      %18 = sbr.rel target = $region3
    $region8: #{tpu_custom_call.1} parent=1 // loop_exit
      _
    %2008 = vsyncpa [#allocation3], 1
    %s2009 = scalar_lea.sflag [#allocation3], 1
    %2010 = vsyncpa %s2009, 1
    %2011 = vsyncpa [#allocation6], 1
    %2012 = vsyncpa [#allocation4], 1
    %s2013 = scalar_lea.sflag [#allocation4], 1
    %2014 = vsyncpa %s2013, 1

// kernel: tpu_custom_call.1
$region0: #{tpu_custom_call.1}
  #allocation0 [shape = 'u32[]', space=smem, size = 0x4, offset = 0x4, fixed_abs, tag = 'smem constant byte address 0x4 - core index']
  #allocation1 [shape = 'u32[144,128]{1,0:T(1,128)}', space=vmem, size = 0x12000, scoped, tag = 'internal scratch']
  %s0 = inlined_call_operand.vmem [shape: f32[20,128], index: 0, kind: input, shape index: {}]
  %s1 = inlined_call_operand.hbm [shape: f32[4,128], index: 1, kind: input, shape index: {}]
  %s2 = inlined_call_operand.vmem [shape: f32[128,4], index: 2, kind: input, shape index: {}]
  %s3 = inlined_call_operand.vmem [shape: f32[1,4], index: 3, kind: input, shape index: {}]
  %s4 = inlined_call_operand.hbm [shape: f32[4,128], index: 4, kind: input, shape index: {}]
  %s5 = inlined_call_operand.hbm [shape: f32[4,128], index: 5, kind: input, shape index: {}]
  %s6 = inlined_call_operand.vmem [shape: f32[128,128], index: 6, kind: input, shape index: {}]
  %s7 = inlined_call_operand.vmem [shape: f32[1,128], index: 7, kind: input, shape index: {}]
  %s8 = inlined_call_operand.hbm [shape: f32[20,128], index: 8, kind: output, shape index: {}]
  %s9 = sld [smem:[#allocation0]]
  $region77: #{tpu_custom_call.1} parent=0
    _
  %s11 = ssub.s32 1, %s9
  %s12 = scalar_select 0, %s11, %s9
  $region1: #{tpu_custom_call.1} parent=0
    #allocation2 [shape = 'u8[2048]{0}', space=vmem, size = 0x800, scoped, tag = 'input window, operand 1, single buffered']
    #allocation3 [shape = 's32[2]{0}', space=sflag, size = 0x8, scoped, tag = 'scoped memory for tpu_custom_call.1']
    #allocation4 [shape = 's32[2]{0}', space=sflag, size = 0x8, scoped, tag = 'scoped memory for tpu_custom_call.1']
    #allocation5 [shape = 'u8[2048]{0}', space=vmem, size = 0x800, scoped, tag = 'input window, operand 4, single buffered']
    #allocation6 [shape = 's32[1]{0}', space=sflag, size = 0x4, scoped, tag = 'scoped memory for tpu_custom_call.1']
    #allocation7 [shape = 'u8[2048]{0}', space=vmem, size = 0x800, scoped, tag = 'input window, operand 5, single buffered']
    #allocation8 [shape = 'u8[16384]{0}', space=vmem, size = 0x4000, scoped, tag = 'output window, operand 0']
    %13 = vsyncpa [#allocation3], 0
    %14 = vsyncpa [#allocation6], 0
    %15 = vsyncpa [#allocation4], 0
    %s16 = scalar_lea.sflag [#allocation4], 1
    %17 = vsyncpa %s16, 0
    loop: start=0, step=1, limit=4
    $region2: #{tpu_custom_call.1} parent=1 // loop_pre_header
      _
    $region3: #{tpu_custom_call.1} parent=1 // loop_header
      %s19 = sphi 0, %s23
      %p20 = scmp.ge.s32.totalorder %s19, 4
      %s29 = sphi 0, %s31
      %s32 = sphi 0, %s29
      %s33 = sphi 0, %s32
      %s49 = sphi 0, %s33
      %s53 = sphi 0, %s53
      %s55 = sphi 0, %s53
      %s56 = sphi 0, %s55
      %s70 = sphi 0, %s56
      %s74 = sphi 0, %s74
      %s76 = sphi 0, %s74
      %s77 = sphi 0, %s76
      %s91 = sphi 0, %s77
      %s95 = sphi 0, %s95
      %s97 = sphi 0, %s95
      %s98 = sphi 0, %s97
      %s112 = sphi 0, %s98
      %s116 = sphi 0, %s116
      %s118 = sphi 0, %s116
      %s119 = sphi 0, %s118
      %s133 = sphi 0, %s119
      %s137 = sphi 0, %s137
      %s139 = sphi 0, %s137
      %s140 = sphi 0, %s139
      %s154 = sphi 0, %s140
      %s158 = sphi 0, %s158
      %s160 = sphi 0, %s158
      %s161 = sphi 0, %s160
      %s175 = sphi 0, %s161
      %s179 = sphi 0, %s179
      %s181 = sphi 0, %s179
      %s182 = sphi 0, %s181
      %s196 = sphi 0, %s182
      %s202 = sphi 0, %s204
      %s205 = sphi 0, %s202
      %s206 = sphi 0, %s205
      %s222 = sphi 0, %s206
    $region4: #{tpu_custom_call.1} parent=1 // loop_header_branch
      %22 = sbr.rel (%p20) target = $region8
    $region5: #{tpu_custom_call.1} parent=1 // loop_body
      %s24 = ssub.s32 %s19, 1
      %s25 = ssub.s32 %s19, 2
      %s26 = sadd.s32 %s19, 1
      %s27 = ssub.s32 %s19, %s26
      %p28 = scmp.eq.s32.totalorder %s27, 0
      %s30 = sadd.s32 %s29, 1
      %s31 = scalar_select %p28, %s29, %s30
      %p34 = pneg %p28
      %p35 = scmp.eq.s32.totalorder %s19, 1
      %p36 = por %p34, %p35
      %p37 = scmp.ne.s32.totalorder %s29, %s32
      %p38 = scmp.eq.s32.totalorder %s19, 0
      %p39 = por %p37, %p38
      %p40 = scmp.ne.s32.totalorder %s29, %s32
      %p41 = scmp.eq.s32.totalorder %s24, 1
      %p42 = por %p40, %p41
      %p43 = scmp.ne.s32.totalorder %s32, %s33
      %p44 = scmp.eq.s32.totalorder %s24, 0
      %p45 = por %p43, %p44
      %p46 = scmp.ne.s32.totalorder %s32, %s33
      %p47 = scmp.eq.s32.totalorder %s25, 1
      %p48 = por %p46, %p47
      %p50 = scmp.ne.s32.totalorder %s33, %s49
      %p51 = scmp.eq.s32.totalorder %s25, 0
      %p52 = por %p50, %p51
      %s54 = sadd.s32 %s53, 1
      %p57 = scmp.eq.s32.totalorder %s19, 1
      %p58 = scmp.ne.s32.totalorder %s53, %s55
      %p59 = scmp.eq.s32.totalorder %s19, 0
      %p60 = por %p58, %p59
      %p61 = scmp.ne.s32.totalorder %s53, %s55
      %p62 = scmp.eq.s32.totalorder %s24, 1
      %p63 = por %p61, %p62
      %p64 = scmp.ne.s32.totalorder %s55, %s56
      %p65 = scmp.eq.s32.totalorder %s24, 0
      %p66 = por %p64, %p65
      %p67 = scmp.ne.s32.totalorder %s55, %s56
      %p68 = scmp.eq.s32.totalorder %s25, 1
      %p69 = por %p67, %p68
      %p71 = scmp.ne.s32.totalorder %s56, %s70
      %p72 = scmp.eq.s32.totalorder %s25, 0
      %p73 = por %p71, %p72
      %s75 = sadd.s32 %s74, 1
      %p78 = scmp.eq.s32.totalorder %s19, 1
      %p79 = scmp.ne.s32.totalorder %s74, %s76
      %p80 = scmp.eq.s32.totalorder %s19, 0
      %p81 = por %p79, %p80
      %p82 = scmp.ne.s32.totalorder %s74, %s76
      %p83 = scmp.eq.s32.totalorder %s24, 1
      %p84 = por %p82, %p83
      %p85 = scmp.ne.s32.totalorder %s76, %s77
      %p86 = scmp.eq.s32.totalorder %s24, 0
      %p87 = por %p85, %p86
      %p88 = scmp.ne.s32.totalorder %s76, %s77
      %p89 = scmp.eq.s32.totalorder %s25, 1
      %p90 = por %p88, %p89
      %p92 = scmp.ne.s32.totalorder %s77, %s91
      %p93 = scmp.eq.s32.totalorder %s25, 0
      %p94 = por %p92, %p93
      %s96 = sadd.s32 %s95, 1
      %p99 = scmp.eq.s32.totalorder %s19, 1
      %p100 = scmp.ne.s32.totalorder %s95, %s97
      %p101 = scmp.eq.s32.totalorder %s19, 0
      %p102 = por %p100, %p101
      %p103 = scmp.ne.s32.totalorder %s95, %s97
      %p104 = scmp.eq.s32.totalorder %s24, 1
      %p105 = por %p103, %p104
      %p106 = scmp.ne.s32.totalorder %s97, %s98
      %p107 = scmp.eq.s32.totalorder %s24, 0
      %p108 = por %p106, %p107
      %p109 = scmp.ne.s32.totalorder %s97, %s98
      %p110 = scmp.eq.s32.totalorder %s25, 1
      %p111 = por %p109, %p110
      %p113 = scmp.ne.s32.totalorder %s98, %s112
      %p114 = scmp.eq.s32.totalorder %s25, 0
      %p115 = por %p113, %p114
      %s117 = sadd.s32 %s116, 1
      %p120 = scmp.eq.s32.totalorder %s19, 1
      %p121 = scmp.ne.s32.totalorder %s116, %s118
      %p122 = scmp.eq.s32.totalorder %s19, 0
      %p123 = por %p121, %p122
      %p124 = scmp.ne.s32.totalorder %s116, %s118
      %p125 = scmp.eq.s32.totalorder %s24, 1
      %p126 = por %p124, %p125
      %p127 = scmp.ne.s32.totalorder %s118, %s119
      %p128 = scmp.eq.s32.totalorder %s24, 0
      %p129 = por %p127, %p128
      %p130 = scmp.ne.s32.totalorder %s118, %s119
      %p131 = scmp.eq.s32.totalorder %s25, 1
      %p132 = por %p130, %p131
      %p134 = scmp.ne.s32.totalorder %s119, %s133
      %p135 = scmp.eq.s32.totalorder %s25, 0
      %p136 = por %p134, %p135
      %s138 = sadd.s32 %s137, 1
      %p141 = scmp.eq.s32.totalorder %s19, 1
      %p142 = scmp.ne.s32.totalorder %s137, %s139
      %p143 = scmp.eq.s32.totalorder %s19, 0
      %p144 = por %p142, %p143
      %p145 = scmp.ne.s32.totalorder %s137, %s139
      %p146 = scmp.eq.s32.totalorder %s24, 1
      %p147 = por %p145, %p146
      %p148 = scmp.ne.s32.totalorder %s139, %s140
      %p149 = scmp.eq.s32.totalorder %s24, 0
      %p150 = por %p148, %p149
      %p151 = scmp.ne.s32.totalorder %s139, %s140
      %p152 = scmp.eq.s32.totalorder %s25, 1
      %p153 = por %p151, %p152
      %p155 = scmp.ne.s32.totalorder %s140, %s154
      %p156 = scmp.eq.s32.totalorder %s25, 0
      %p157 = por %p155, %p156
      %s159 = sadd.s32 %s158, 1
      %p162 = scmp.eq.s32.totalorder %s19, 1
      %p163 = scmp.ne.s32.totalorder %s158, %s160
      %p164 = scmp.eq.s32.totalorder %s19, 0
      %p165 = por %p163, %p164
      %p166 = scmp.ne.s32.totalorder %s158, %s160
      %p167 = scmp.eq.s32.totalorder %s24, 1
      %p168 = por %p166, %p167
      %p169 = scmp.ne.s32.totalorder %s160, %s161
      %p170 = scmp.eq.s32.totalorder %s24, 0
      %p171 = por %p169, %p170
      %p172 = scmp.ne.s32.totalorder %s160, %s161
      %p173 = scmp.eq.s32.totalorder %s25, 1
      %p174 = por %p172, %p173
      %p176 = scmp.ne.s32.totalorder %s161, %s175
      %p177 = scmp.eq.s32.totalorder %s25, 0
      %p178 = por %p176, %p177
      %s180 = sadd.s32 %s179, 1
      %p183 = scmp.eq.s32.totalorder %s19, 1
      %p184 = scmp.ne.s32.totalorder %s179, %s181
      %p185 = scmp.eq.s32.totalorder %s19, 0
      %p186 = por %p184, %p185
      %p187 = scmp.ne.s32.totalorder %s179, %s181
      %p188 = scmp.eq.s32.totalorder %s24, 1
      %p189 = por %p187, %p188
      %p190 = scmp.ne.s32.totalorder %s181, %s182
      %p191 = scmp.eq.s32.totalorder %s24, 0
      %p192 = por %p190, %p191
      %p193 = scmp.ne.s32.totalorder %s181, %s182
      %p194 = scmp.eq.s32.totalorder %s25, 1
      %p195 = por %p193, %p194
      %p197 = scmp.ne.s32.totalorder %s182, %s196
      %p198 = scmp.eq.s32.totalorder %s25, 0
      %p199 = por %p197, %p198
      %s200 = ssub.s32 %s19, %s26
      %p201 = scmp.eq.s32.totalorder %s200, 0
      %s203 = sadd.s32 %s202, 1
      %s204 = scalar_select %p201, %s202, %s203
      %p207 = pneg %p201
      %p208 = scmp.eq.s32.totalorder %s19, 1
      %p209 = por %p207, %p208
      %p210 = scmp.ne.s32.totalorder %s202, %s205
      %p211 = scmp.eq.s32.totalorder %s19, 0
      %p212 = por %p210, %p211
      %p213 = scmp.ne.s32.totalorder %s202, %s205
      %p214 = scmp.eq.s32.totalorder %s24, 1
      %p215 = por %p213, %p214
      %p216 = scmp.ne.s32.totalorder %s205, %s206
      %p217 = scmp.eq.s32.totalorder %s24, 0
      %p218 = por %p216, %p217
      %p219 = scmp.ne.s32.totalorder %s205, %s206
      %p220 = scmp.eq.s32.totalorder %s25, 1
      %p221 = por %p219, %p220
      %p223 = scmp.ne.s32.totalorder %s206, %s222
      %p224 = scmp.eq.s32.totalorder %s25, 0
      %p225 = por %p223, %p224
      %p226 = scmp.le.s32.totalorder 1, %s19
      %p227 = scmp.lt.s32.totalorder %s19, 3
      %p228 = pnand %p226, %p227
      %p229 = pneg %p228
      // Predicated region
      $region9: #{tpu_custom_call.1} parent=5 // pred_check
        _
      $region10: #{tpu_custom_call.1} parent=5 // pred_check_branch
        %231 = sbr.rel (%p228) target = $region12
      $region11: #{tpu_custom_call.1} parent=5 // pred_region
        %s232 = ssub.s32 %s19, 1
        // Predicated region
        $region13: #{tpu_custom_call.1} parent=11 // pred_check
          %p233 = pneg %p66
        $region14: #{tpu_custom_call.1} parent=11 // pred_check_branch
          %235 = sbr.rel (%p233) target = $region16
        $region15: #{tpu_custom_call.1} parent=11 // pred_region
          %s237 = ssub.s32 64, 64
          %238 = vsyncadd [#allocation3], %s237
          %s240 = sshll.u32 [#allocation2], 4
          %s241 = int_to_ptr.vmem [resolvable:$true] %s240
          %243 = dma.hbm_to_vmem [thread:$0]  %s1, 64, %s241, [#allocation3]
        $region16: #{tpu_custom_call.1} parent=11 // pred_fallthru
          _
        // Predicated region
        $region17: #{tpu_custom_call.1} parent=11 // pred_check
          %p244 = pneg %p87
        $region18: #{tpu_custom_call.1} parent=11 // pred_check_branch
          %246 = sbr.rel (%p244) target = $region20
        $region19: #{tpu_custom_call.1} parent=11 // pred_region
          _
        $region20: #{tpu_custom_call.1} parent=11 // pred_fallthru
          _
        // Predicated region
        $region21: #{tpu_custom_call.1} parent=11 // pred_check
          %p247 = pneg %p108
        $region22: #{tpu_custom_call.1} parent=11 // pred_check_branch
          %249 = sbr.rel (%p247) target = $region24
        $region23: #{tpu_custom_call.1} parent=11 // pred_region
          _
        $region24: #{tpu_custom_call.1} parent=11 // pred_fallthru
          _
        // Predicated region
        $region25: #{tpu_custom_call.1} parent=11 // pred_check
          %p250 = pneg %p129
        $region26: #{tpu_custom_call.1} parent=11 // pred_check_branch
          %252 = sbr.rel (%p250) target = $region28
        $region27: #{tpu_custom_call.1} parent=11 // pred_region
          %s254 = ssub.s32 64, 64
          %255 = vsyncadd [#allocation6], %s254
          %s257 = sshll.u32 [#allocation5], 4
          %s258 = int_to_ptr.vmem [resolvable:$true] %s257
          %260 = dma.hbm_to_vmem [thread:$0]  %s4, 64, %s258, [#allocation6]
        $region28: #{tpu_custom_call.1} parent=11 // pred_fallthru
          _
        // Predicated region
        $region29: #{tpu_custom_call.1} parent=11 // pred_check
          %p261 = pneg %p150
        $region30: #{tpu_custom_call.1} parent=11 // pred_check_branch
          %263 = sbr.rel (%p261) target = $region32
        $region31: #{tpu_custom_call.1} parent=11 // pred_region
          %s265 = ssub.s32 64, 64
          %266 = vsyncadd [#allocation6], %s265
          %s268 = sshll.u32 [#allocation7], 4
          %s269 = int_to_ptr.vmem [resolvable:$true] %s268
          %271 = dma.hbm_to_vmem [thread:$0]  %s5, 64, %s269, [#allocation6]
        $region32: #{tpu_custom_call.1} parent=11 // pred_fallthru
          _
        // Predicated region
        $region33: #{tpu_custom_call.1} parent=11 // pred_check
          %p272 = pneg %p171
        $region34: #{tpu_custom_call.1} parent=11 // pred_check_branch
          %274 = sbr.rel (%p272) target = $region36
        $region35: #{tpu_custom_call.1} parent=11 // pred_region
          _
        $region36: #{tpu_custom_call.1} parent=11 // pred_fallthru
          _
        // Predicated region
        $region37: #{tpu_custom_call.1} parent=11 // pred_check
          %p275 = pneg %p192
        $region38: #{tpu_custom_call.1} parent=11 // pred_check_branch
          %277 = sbr.rel (%p275) target = $region40
        $region39: #{tpu_custom_call.1} parent=11 // pred_region
          _
        $region40: #{tpu_custom_call.1} parent=11 // pred_fallthru
          _
      $region12: #{tpu_custom_call.1} parent=5 // pred_fallthru
        _
      %p278 = scmp.lt.s32.totalorder %s19, 2
      // Predicated region
      $region41: #{tpu_custom_call.1} parent=5 // pred_check
        %p279 = pneg %p278
      $region42: #{tpu_custom_call.1} parent=5 // pred_check_branch
        %281 = sbr.rel (%p279) target = $region44
      $region43: #{tpu_custom_call.1} parent=5 // pred_region
        // Predicated region
        $region45: #{tpu_custom_call.1} parent=43 // pred_check
          %p282 = pneg %p39
        $region46: #{tpu_custom_call.1} parent=43 // pred_check_branch
          %284 = sbr.rel (%p282) target = $region48
        $region47: #{tpu_custom_call.1} parent=43 // pred_region
          %s285 = smul.u32 2, %s19
          %s286 = ssub.s32 3, %s285
          %p287 = scmp.lt.s32.totalorder %s286, 2
          %s288 = scalar_select %p287, %s286, 2
          %s289 = smul.u32 128, %s288
          %p290 = scmp.lt.s32.totalorder %s285, 2
          %s291 = scalar_select %p290, %s285, 2
          %s292 = smul.addr %s291, 8
          %s293 = scalar_lea.vmem %s0, %s292
          %s294 = smul.u32 2, %s19
          %s295 = ssub.s32 3, %s294
          %p296 = scmp.lt.s32.totalorder %s295, 2
          %s297 = scalar_select %p296, %s295, 2
          %s298 = smul.u32 128, %s297
        $region48: #{tpu_custom_call.1} parent=43 // pred_fallthru
          _
      $region44: #{tpu_custom_call.1} parent=5 // pred_fallthru
        _
      %p299 = scmp.le.s32.totalorder 1, %s19
      %p300 = scmp.lt.s32.totalorder %s19, 3
      %p301 = pnand %p299, %p300
      %p302 = pneg %p301
      // Predicated region
      $region49: #{tpu_custom_call.1} parent=5 // pred_check
        _
      $region50: #{tpu_custom_call.1} parent=5 // pred_check_branch
        %304 = sbr.rel (%p301) target = $region52
      $region51: #{tpu_custom_call.1} parent=5 // pred_region
        %s305 = ssub.s32 %s19, 1
        // Predicated region
        $region53: #{tpu_custom_call.1} parent=51 // pred_check
          %p306 = pneg %p66
        $region54: #{tpu_custom_call.1} parent=51 // pred_check_branch
          %308 = sbr.rel (%p306) target = $region56
        $region55: #{tpu_custom_call.1} parent=51 // pred_region
          %309 = dma.done [#allocation3], 64
        $region56: #{tpu_custom_call.1} parent=51 // pred_fallthru
          _
        // Predicated region
        $region57: #{tpu_custom_call.1} parent=51 // pred_check
          %p310 = pneg %p129
        $region58: #{tpu_custom_call.1} parent=51 // pred_check_branch
          %312 = sbr.rel (%p310) target = $region60
        $region59: #{tpu_custom_call.1} parent=51 // pred_region
          %313 = dma.done [#allocation6], 64
        $region60: #{tpu_custom_call.1} parent=51 // pred_fallthru
          _
        // Predicated region
        $region61: #{tpu_custom_call.1} parent=51 // pred_check
          %p314 = pneg %p150
        $region62: #{tpu_custom_call.1} parent=51 // pred_check_branch
          %316 = sbr.rel (%p314) target = $region64
        $region63: #{tpu_custom_call.1} parent=51 // pred_region
          %317 = dma.done [#allocation6], 64
        $region64: #{tpu_custom_call.1} parent=51 // pred_fallthru
          _
        %s318 = smul.u32 2, %s24
        %s319 = ssub.s32 3, %s318
        %p320 = scmp.lt.s32.totalorder %s319, 2
        %s321 = scalar_select %p320, %s319, 2
        %s322 = smul.u32 128, %s321
        %p323 = scmp.lt.s32.totalorder %s318, 2
        %s324 = scalar_select %p323, %s318, 2
        %s325 = smul.addr %s324, 8
        %s326 = scalar_lea.vmem %s0, %s325
        %p327 = pneg %p45
        %p328 = pneg %p42
        %p329 = pneg %p66
        %p330 = pneg %p63
        %p331 = pneg %p87
        %p332 = pneg %p84
        %p333 = pneg %p108
        %p334 = pneg %p105
        %p335 = pneg %p129
        %p336 = pneg %p126
        %p337 = pneg %p150
        %p338 = pneg %p147
        %p339 = pneg %p171
        %p340 = pneg %p168
        %p341 = pneg %p192
        %p342 = pneg %p189
        %p343 = pneg %p218
        %p344 = pneg %p215
        %s345 = sand.u32 %s205, 1
        %s346 = scalar_lea.sflag [#allocation4], %s345
        %s347 = sand.u32 %s205, 1
        %s348 = smul.addr %s347, 16
        %s349 = scalar_lea.vmem [#allocation8], %s348
        %s350 = smul.u32 2, %s24
        %s351 = ssub.s32 3, %s350
        %p352 = scmp.lt.s32.totalorder %s351, 2
        %s353 = scalar_select %p352, %s351, 2
        %s354 = smul.u32 128, %s353
        %p355 = scmp.lt.s32.totalorder %s350, 2
        %s356 = scalar_select %p355, %s350, 2
        %s357 = smul.addr %s356, 8
        %s358 = scalar_lea.vmem %s0, %s357
        %s359 = smul.u32 2, %s24
        %s360 = ssub.s32 3, %s359
        %p361 = scmp.lt.s32.totalorder %s360, 2
        %s362 = scalar_select %p361, %s360, 2
        %s363 = smul.u32 128, %s362
        %s364 = smul.u32 2, %s24
        %s365 = ssub.s32 3, %s364
        %p366 = scmp.lt.s32.totalorder %s365, 2
        %s367 = scalar_select %p366, %s365, 2
        %s368 = smul.u32 128, %s367
        %v369 = vld [vmem:[%s358] sm:$0xff]
        %v370 = vld [vmem:[%s358 + $0x8] sm:$0xff]
        %371 = vadd.xlane.f32.xlu0 %v369
        %v372 = vpop.xlane.xlu0 %371
        %373 = vadd.xlane.f32.xlu0 %v370
        %v374 = vpop.xlane.xlu0 %373
        %v375 = vmul.f32 %v372, 0.0078125
        %v376 = vmul.f32 %v374, 0.0078125
        %v377 = vsub.f32 %v369, %v375
        %v378 = vsub.f32 %v370, %v376
        %v379 = vmul.f32 %v377, %v377
        %v380 = vmul.f32 %v378, %v378
        %381 = vadd.xlane.f32.xlu0 %v379
        %v382 = vpop.xlane.xlu0 %381
        %383 = vadd.xlane.f32.xlu0 %v380
        %v384 = vpop.xlane.xlu0 %383
        %v385 = vmul.f32 %v382, 0.0078125
        %v386 = vmul.f32 %v384, 0.0078125
        %v387 = vld [vmem:[%s2] sm:$0xff]
        %v388 = vld [vmem:[%s2 + $0x8] sm:$0xff]
        %v389 = vld [vmem:[%s2 + $0x10] sm:$0xff]
        %v390 = vld [vmem:[%s2 + $0x18] sm:$0xff]
        %v391 = vld [vmem:[%s2 + $0x20] sm:$0xff]
        %v392 = vld [vmem:[%s2 + $0x28] sm:$0xff]
        %v393 = vld [vmem:[%s2 + $0x30] sm:$0xff]
        %v394 = vld [vmem:[%s2 + $0x38] sm:$0xff]
        %v395 = vld [vmem:[%s2 + $0x40] sm:$0xff]
        %v396 = vld [vmem:[%s2 + $0x48] sm:$0xff]
        %v397 = vld [vmem:[%s2 + $0x50] sm:$0xff]
        %v398 = vld [vmem:[%s2 + $0x58] sm:$0xff]
        %v399 = vld [vmem:[%s2 + $0x60] sm:$0xff]
        %v400 = vld [vmem:[%s2 + $0x68] sm:$0xff]
        %v401 = vld [vmem:[%s2 + $0x70] sm:$0xff]
        %v402 = vld [vmem:[%s2 + $0x78] sm:$0xff]
        %403 = vmatprep.subr.mxu0 0.0
        %v404 = vand.u32 %v387, 4294901760
        %405 = vmatpush1.msra.mxu0 %v404
        %406 = vmatprep.subr.mxu0 0.0
        %v407 = vand.u32 %v388, 4294901760
        %408 = vmatpush1.msra.mxu0 %v407
        %409 = vmatprep.subr.mxu0 0.0
        %v410 = vand.u32 %v389, 4294901760
        %411 = vmatpush1.msra.mxu0 %v410
        %412 = vmatprep.subr.mxu0 0.0
        %v413 = vand.u32 %v390, 4294901760
        %414 = vmatpush1.msra.mxu0 %v413
        %415 = vmatprep.subr.mxu0 0.0
        %v416 = vand.u32 %v391, 4294901760
        %417 = vmatpush1.msra.mxu0 %v416
        %418 = vmatprep.subr.mxu0 0.0
        %v419 = vand.u32 %v392, 4294901760
        %420 = vmatpush1.msra.mxu0 %v419
        %421 = vmatprep.subr.mxu0 0.0
        %v422 = vand.u32 %v393, 4294901760
        %423 = vmatpush1.msra.mxu0 %v422
        %424 = vmatprep.subr.mxu0 0.0
        %v425 = vand.u32 %v394, 4294901760
        %426 = vmatpush1.msra.mxu0 %v425
        %427 = vmatprep.subr.mxu0 0.0
        %v428 = vand.u32 %v395, 4294901760
        %429 = vmatpush1.msra.mxu0 %v428
        %430 = vmatprep.subr.mxu0 0.0
        %v431 = vand.u32 %v396, 4294901760
        %432 = vmatpush1.msra.mxu0 %v431
        %433 = vmatprep.subr.mxu0 0.0
        %v434 = vand.u32 %v397, 4294901760
        %435 = vmatpush1.msra.mxu0 %v434
        %436 = vmatprep.subr.mxu0 0.0
        %v437 = vand.u32 %v398, 4294901760
        %438 = vmatpush1.msra.mxu0 %v437
        %439 = vmatprep.subr.mxu0 0.0
        %v440 = vand.u32 %v399, 4294901760
        %441 = vmatpush1.msra.mxu0 %v440
        %442 = vmatprep.subr.mxu0 0.0
        %v443 = vand.u32 %v400, 4294901760
        %444 = vmatpush1.msra.mxu0 %v443
        %445 = vmatprep.subr.mxu0 0.0
        %v446 = vand.u32 %v401, 4294901760
        %447 = vmatpush1.msra.mxu0 %v446
        %448 = vmatprep.subr.mxu0 0.0
        %v449 = vand.u32 %v402, 4294901760
        %450 = vmatpush1.msra.mxu0 %v449
        %451 = vmatprep.subr.mxu0 0.0
        %452 = vmatpush1.msra.mxu0 0.0
        %453 = vmatprep.subr.mxu0 0.0
        %454 = vmatpush1.msra.mxu0 0.0
        %455 = vmatprep.subr.mxu0 0.0
        %456 = vmatpush1.msra.mxu0 0.0
        %457 = vmatprep.subr.mxu0 0.0
        %458 = vmatpush1.msra.mxu0 0.0
        %459 = vmatprep.subr.mxu0 0.0
        %460 = vmatpush1.msra.mxu0 0.0
        %461 = vmatprep.subr.mxu0 0.0
        %462 = vmatpush1.msra.mxu0 0.0
        %463 = vmatprep.subr.mxu0 0.0
        %464 = vmatpush1.msra.mxu0 0.0
        %465 = vmatprep.subr.mxu0 0.0
        %466 = vmatpush1.msra.mxu0 0.0
        %467 = vmatprep.subr.mxu0 0.0
        %468 = vmatpush1.msra.mxu0 0.0
        %469 = vmatprep.subr.mxu0 0.0
        %470 = vmatpush1.msra.mxu0 0.0
        %471 = vmatprep.subr.mxu0 0.0
        %472 = vmatpush1.msra.mxu0 0.0
        %473 = vmatprep.subr.mxu0 0.0
        %474 = vmatpush1.msra.mxu0 0.0
        %475 = vmatprep.subr.mxu0 0.0
        %476 = vmatpush1.msra.mxu0 0.0
        %477 = vmatprep.subr.mxu0 0.0
        %478 = vmatpush1.msra.mxu0 0.0
        %479 = vmatprep.subr.mxu0 0.0
        %480 = vmatpush1.msra.mxu0 0.0
        %481 = vmatprep.subr.mxu0 0.0
        %482 = vmatpush1.msra.mxu0 0.0
        %483 = vmatprep.mubr.f32.mxu0 0.0
        %v484 = vand.u32 %v377, 4294901760
        %v485 = vsub.f32 %v377, %v484
        %v486 = vand.u32 %v485, 4294901760
        %v487 = vsub.f32 %v485, %v486
        %v488 = vand.u32 %v487, 4294901760
        %489 = vmatmul.mubr.f32.gmra.mrb[0].mxu0 %v488
        %v490 = vpop.f32.mrb[0].mxu0
        %v491 = vadd.f32 0.0, %v490
        %v492 = vpop.f32.mrb[0].mxu0
        %493 = vmatprep.mubr.f32.mxu0 0.0
        %v494 = vand.u32 %v378, 4294901760
        %v495 = vsub.f32 %v378, %v494
        %v496 = vand.u32 %v495, 4294901760
        %v497 = vsub.f32 %v495, %v496
        %v498 = vand.u32 %v497, 4294901760
        %499 = vmatmul.mubr.f32.gmra.mrb[0].mxu0 %v498
        %v500 = vpop.f32.mrb[0].mxu0
        %v501 = vadd.f32 0.0, %v500
        %v502 = vpop.f32.mrb[0].mxu0
        %503 = vdwg.mxu0
        %504 = vmatprep.subr.mxu0 0.0
        %v505 = vand.u32 %v387, 4294901760
        %v506 = vsub.f32 %v387, %v505
        %v507 = vand.u32 %v506, 4294901760
        %v508 = vsub.f32 %v506, %v507
        %v509 = vand.u32 %v508, 4294901760
        %510 = vmatpush1.msra.mxu0 %v509
        %511 = vmatprep.subr.mxu0 0.0
        %v512 = vand.u32 %v388, 4294901760
        %v513 = vsub.f32 %v388, %v512
        %v514 = vand.u32 %v513, 4294901760
        %v515 = vsub.f32 %v513, %v514
        %v516 = vand.u32 %v515, 4294901760
        %517 = vmatpush1.msra.mxu0 %v516
        %518 = vmatprep.subr.mxu0 0.0
        %v519 = vand.u32 %v389, 4294901760
        %v520 = vsub.f32 %v389, %v519
        %v521 = vand.u32 %v520, 4294901760
        %v522 = vsub.f32 %v520, %v521
        %v523 = vand.u32 %v522, 4294901760
        %524 = vmatpush1.msra.mxu0 %v523
        %525 = vmatprep.subr.mxu0 0.0
        %v526 = vand.u32 %v390, 4294901760
        %v527 = vsub.f32 %v390, %v526
        %v528 = vand.u32 %v527, 4294901760
        %v529 = vsub.f32 %v527, %v528
        %v530 = vand.u32 %v529, 4294901760
        %531 = vmatpush1.msra.mxu0 %v530
        %532 = vmatprep.subr.mxu0 0.0
        %v533 = vand.u32 %v391, 4294901760
        %v534 = vsub.f32 %v391, %v533
        %v535 = vand.u32 %v534, 4294901760
        %v536 = vsub.f32 %v534, %v535
        %v537 = vand.u32 %v536, 4294901760
        %538 = vmatpush1.msra.mxu0 %v537
        %539 = vmatprep.subr.mxu0 0.0
        %v540 = vand.u32 %v392, 4294901760
        %v541 = vsub.f32 %v392, %v540
        %v542 = vand.u32 %v541, 4294901760
        %v543 = vsub.f32 %v541, %v542
        %v544 = vand.u32 %v543, 4294901760
        %545 = vmatpush1.msra.mxu0 %v544
        %546 = vmatprep.subr.mxu0 0.0
        %v547 = vand.u32 %v393, 4294901760
        %v548 = vsub.f32 %v393, %v547
        %v549 = vand.u32 %v548, 4294901760
        %v550 = vsub.f32 %v548, %v549
        %v551 = vand.u32 %v550, 4294901760
        %552 = vmatpush1.msra.mxu0 %v551
        %553 = vmatprep.subr.mxu0 0.0
        %v554 = vand.u32 %v394, 4294901760
        %v555 = vsub.f32 %v394, %v554
        %v556 = vand.u32 %v555, 4294901760
        %v557 = vsub.f32 %v555, %v556
        %v558 = vand.u32 %v557, 4294901760
        %559 = vmatpush1.msra.mxu0 %v558
        %560 = vmatprep.subr.mxu0 0.0
        %v561 = vand.u32 %v395, 4294901760
        %v562 = vsub.f32 %v395, %v561
        %v563 = vand.u32 %v562, 4294901760
        %v564 = vsub.f32 %v562, %v563
        %v565 = vand.u32 %v564, 4294901760
        %566 = vmatpush1.msra.mxu0 %v565
        %567 = vmatprep.subr.mxu0 0.0
        %v568 = vand.u32 %v396, 4294901760
        %v569 = vsub.f32 %v396, %v568
        %v570 = vand.u32 %v569, 4294901760
        %v571 = vsub.f32 %v569, %v570
        %v572 = vand.u32 %v571, 4294901760
        %573 = vmatpush1.msra.mxu0 %v572
        %574 = vmatprep.subr.mxu0 0.0
        %v575 = vand.u32 %v397, 4294901760
        %v576 = vsub.f32 %v397, %v575
        %v577 = vand.u32 %v576, 4294901760
        %v578 = vsub.f32 %v576, %v577
        %v579 = vand.u32 %v578, 4294901760
        %580 = vmatpush1.msra.mxu0 %v579
        %581 = vmatprep.subr.mxu0 0.0
        %v582 = vand.u32 %v398, 4294901760
        %v583 = vsub.f32 %v398, %v582
        %v584 = vand.u32 %v583, 4294901760
        %v585 = vsub.f32 %v583, %v584
        %v586 = vand.u32 %v585, 4294901760
        %587 = vmatpush1.msra.mxu0 %v586
        %588 = vmatprep.subr.mxu0 0.0
        %v589 = vand.u32 %v399, 4294901760
        %v590 = vsub.f32 %v399, %v589
        %v591 = vand.u32 %v590, 4294901760
        %v592 = vsub.f32 %v590, %v591
        %v593 = vand.u32 %v592, 4294901760
        %594 = vmatpush1.msra.mxu0 %v593
        %595 = vmatprep.subr.mxu0 0.0
        %v596 = vand.u32 %v400, 4294901760
        %v597 = vsub.f32 %v400, %v596
        %v598 = vand.u32 %v597, 4294901760
        %v599 = vsub.f32 %v597, %v598
        %v600 = vand.u32 %v599, 4294901760
        %601 = vmatpush1.msra.mxu0 %v600
        %602 = vmatprep.subr.mxu0 0.0
        %v603 = vand.u32 %v401, 4294901760
        %v604 = vsub.f32 %v401, %v603
        %v605 = vand.u32 %v604, 4294901760
        %v606 = vsub.f32 %v604, %v605
        %v607 = vand.u32 %v606, 4294901760
        %608 = vmatpush1.msra.mxu0 %v607
        %609 = vmatprep.subr.mxu0 0.0
        %v610 = vand.u32 %v402, 4294901760
        %v611 = vsub.f32 %v402, %v610
        %v612 = vand.u32 %v611, 4294901760
        %v613 = vsub.f32 %v611, %v612
        %v614 = vand.u32 %v613, 4294901760
        %615 = vmatpush1.msra.mxu0 %v614
        %616 = vmatprep.subr.mxu0 0.0
        %617 = vmatpush1.msra.mxu0 0.0
        %618 = vmatprep.subr.mxu0 0.0
        %619 = vmatpush1.msra.mxu0 0.0
        %620 = vmatprep.subr.mxu0 0.0
        %621 = vmatpush1.msra.mxu0 0.0
        %622 = vmatprep.subr.mxu0 0.0
        %623 = vmatpush1.msra.mxu0 0.0
        %624 = vmatprep.subr.mxu0 0.0
        %625 = vmatpush1.msra.mxu0 0.0
        %626 = vmatprep.subr.mxu0 0.0
        %627 = vmatpush1.msra.mxu0 0.0
        %628 = vmatprep.subr.mxu0 0.0
        %629 = vmatpush1.msra.mxu0 0.0
        %630 = vmatprep.subr.mxu0 0.0
        %631 = vmatpush1.msra.mxu0 0.0
        %632 = vmatprep.subr.mxu0 0.0
        %633 = vmatpush1.msra.mxu0 0.0
        %634 = vmatprep.subr.mxu0 0.0
        %635 = vmatpush1.msra.mxu0 0.0
        %636 = vmatprep.subr.mxu0 0.0
        %637 = vmatpush1.msra.mxu0 0.0
        %638 = vmatprep.subr.mxu0 0.0
        %639 = vmatpush1.msra.mxu0 0.0
        %640 = vmatprep.subr.mxu0 0.0
        %641 = vmatpush1.msra.mxu0 0.0
        %642 = vmatprep.subr.mxu0 0.0
        %643 = vmatpush1.msra.mxu0 0.0
        %644 = vmatprep.subr.mxu0 0.0
        %645 = vmatpush1.msra.mxu0 0.0
        %646 = vmatprep.subr.mxu0 0.0
        %647 = vmatpush1.msra.mxu0 0.0
        %648 = vmatprep.mubr.f32.mxu0 0.0
        %v649 = vand.u32 %v377, 4294901760
        %650 = vmatmul.mubr.f32.gmra.mrb[0].mxu0 %v649
        %v651 = vpop.f32.mrb[0].mxu0
        %v652 = vadd.f32 %v491, %v651
        %v653 = vpop.f32.mrb[0].mxu0
        %654 = vmatprep.mubr.f32.mxu0 0.0
        %v655 = vand.u32 %v378, 4294901760
        %656 = vmatmul.mubr.f32.gmra.mrb[0].mxu0 %v655
        %v657 = vpop.f32.mrb[0].mxu0
        %v658 = vadd.f32 %v501, %v657
        %v659 = vpop.f32.mrb[0].mxu0
        %660 = vdwg.mxu0
        %661 = vmatprep.subr.mxu0 0.0
        %v662 = vand.u32 %v387, 4294901760
        %v663 = vsub.f32 %v387, %v662
        %664 = vmatpush1.msra.mxu0 %v663
        %665 = vmatprep.subr.mxu0 0.0
        %v666 = vand.u32 %v388, 4294901760
        %v667 = vsub.f32 %v388, %v666
        %668 = vmatpush1.msra.mxu0 %v667
        %669 = vmatprep.subr.mxu0 0.0
        %v670 = vand.u32 %v389, 4294901760
        %v671 = vsub.f32 %v389, %v670
        %672 = vmatpush1.msra.mxu0 %v671
        %673 = vmatprep.subr.mxu0 0.0
        %v674 = vand.u32 %v390, 4294901760
        %v675 = vsub.f32 %v390, %v674
        %676 = vmatpush1.msra.mxu0 %v675
        %677 = vmatprep.subr.mxu0 0.0
        %v678 = vand.u32 %v391, 4294901760
        %v679 = vsub.f32 %v391, %v678
        %680 = vmatpush1.msra.mxu0 %v679
        %681 = vmatprep.subr.mxu0 0.0
        %v682 = vand.u32 %v392, 4294901760
        %v683 = vsub.f32 %v392, %v682
        %684 = vmatpush1.msra.mxu0 %v683
        %685 = vmatprep.subr.mxu0 0.0
        %v686 = vand.u32 %v393, 4294901760
        %v687 = vsub.f32 %v393, %v686
        %688 = vmatpush1.msra.mxu0 %v687
        %689 = vmatprep.subr.mxu0 0.0
        %v690 = vand.u32 %v394, 4294901760
        %v691 = vsub.f32 %v394, %v690
        %692 = vmatpush1.msra.mxu0 %v691
        %693 = vmatprep.subr.mxu0 0.0
        %v694 = vand.u32 %v395, 4294901760
        %v695 = vsub.f32 %v395, %v694
        %696 = vmatpush1.msra.mxu0 %v695
        %697 = vmatprep.subr.mxu0 0.0
        %v698 = vand.u32 %v396, 4294901760
        %v699 = vsub.f32 %v396, %v698
        %700 = vmatpush1.msra.mxu0 %v699
        %701 = vmatprep.subr.mxu0 0.0
        %v702 = vand.u32 %v397, 4294901760
        %v703 = vsub.f32 %v397, %v702
        %704 = vmatpush1.msra.mxu0 %v703
        %705 = vmatprep.subr.mxu0 0.0
        %v706 = vand.u32 %v398, 4294901760
        %v707 = vsub.f32 %v398, %v706
        %708 = vmatpush1.msra.mxu0 %v707
        %709 = vmatprep.subr.mxu0 0.0
        %v710 = vand.u32 %v399, 4294901760
        %v711 = vsub.f32 %v399, %v710
        %712 = vmatpush1.msra.mxu0 %v711
        %713 = vmatprep.subr.mxu0 0.0
        %v714 = vand.u32 %v400, 4294901760
        %v715 = vsub.f32 %v400, %v714
        %716 = vmatpush1.msra.mxu0 %v715
        %717 = vmatprep.subr.mxu0 0.0
        %v718 = vand.u32 %v401, 4294901760
        %v719 = vsub.f32 %v401, %v718
        %720 = vmatpush1.msra.mxu0 %v719
        %721 = vmatprep.subr.mxu0 0.0
        %v722 = vand.u32 %v402, 4294901760
        %v723 = vsub.f32 %v402, %v722
        %724 = vmatpush1.msra.mxu0 %v723
        %725 = vmatprep.subr.mxu0 0.0
        %726 = vmatpush1.msra.mxu0 0.0
        %727 = vmatprep.subr.mxu0 0.0
        %728 = vmatpush1.msra.mxu0 0.0
        %729 = vmatprep.subr.mxu0 0.0
        %730 = vmatpush1.msra.mxu0 0.0
        %731 = vmatprep.subr.mxu0 0.0
        %732 = vmatpush1.msra.mxu0 0.0
        %733 = vmatprep.subr.mxu0 0.0
        %734 = vmatpush1.msra.mxu0 0.0
        %735 = vmatprep.subr.mxu0 0.0
        %736 = vmatpush1.msra.mxu0 0.0
        %737 = vmatprep.subr.mxu0 0.0
        %738 = vmatpush1.msra.mxu0 0.0
        %739 = vmatprep.subr.mxu0 0.0
        %740 = vmatpush1.msra.mxu0 0.0
        %741 = vmatprep.subr.mxu0 0.0
        %742 = vmatpush1.msra.mxu0 0.0
        %743 = vmatprep.subr.mxu0 0.0
        %744 = vmatpush1.msra.mxu0 0.0
        %745 = vmatprep.subr.mxu0 0.0
        %746 = vmatpush1.msra.mxu0 0.0
        %747 = vmatprep.subr.mxu0 0.0
        %748 = vmatpush1.msra.mxu0 0.0
        %749 = vmatprep.subr.mxu0 0.0
        %750 = vmatpush1.msra.mxu0 0.0
        %751 = vmatprep.subr.mxu0 0.0
        %752 = vmatpush1.msra.mxu0 0.0
        %753 = vmatprep.subr.mxu0 0.0
        %754 = vmatpush1.msra.mxu0 0.0
        %755 = vmatprep.subr.mxu0 0.0
        %756 = vmatpush1.msra.mxu0 0.0
        %757 = vmatprep.mubr.f32.mxu0 0.0
        %v758 = vand.u32 %v377, 4294901760
        %v759 = vsub.f32 %v377, %v758
        %760 = vmatmul.mubr.f32.gmra.mrb[0].mxu0 %v759
        %v761 = vpop.f32.mrb[0].mxu0
        %v762 = vadd.f32 %v652, %v761
        %v763 = vpop.f32.mrb[0].mxu0
        %764 = vmatprep.mubr.f32.mxu0 0.0
        %v765 = vand.u32 %v378, 4294901760
        %v766 = vsub.f32 %v378, %v765
        %767 = vmatmul.mubr.f32.gmra.mrb[0].mxu0 %v766
        %v768 = vpop.f32.mrb[0].mxu0
        %v769 = vadd.f32 %v658, %v768
        %v770 = vpop.f32.mrb[0].mxu0
        %771 = vdwg.mxu0
        %772 = vmatprep.subr.mxu0 0.0
        %v773 = vand.u32 %v387, 4294901760
        %774 = vmatpush1.msra.mxu0 %v773
        %775 = vmatprep.subr.mxu0 0.0
        %v776 = vand.u32 %v388, 4294901760
        %777 = vmatpush1.msra.mxu0 %v776
        %778 = vmatprep.subr.mxu0 0.0
        %v779 = vand.u32 %v389, 4294901760
        %780 = vmatpush1.msra.mxu0 %v779
        %781 = vmatprep.subr.mxu0 0.0
        %v782 = vand.u32 %v390, 4294901760
        %783 = vmatpush1.msra.mxu0 %v782
        %784 = vmatprep.subr.mxu0 0.0
        %v785 = vand.u32 %v391, 4294901760
        %786 = vmatpush1.msra.mxu0 %v785
        %787 = vmatprep.subr.mxu0 0.0
        %v788 = vand.u32 %v392, 4294901760
        %789 = vmatpush1.msra.mxu0 %v788
        %790 = vmatprep.subr.mxu0 0.0
        %v791 = vand.u32 %v393, 4294901760
        %792 = vmatpush1.msra.mxu0 %v791
        %793 = vmatprep.subr.mxu0 0.0
        %v794 = vand.u32 %v394, 4294901760
        %795 = vmatpush1.msra.mxu0 %v794
        %796 = vmatprep.subr.mxu0 0.0
        %v797 = vand.u32 %v395, 4294901760
        %798 = vmatpush1.msra.mxu0 %v797
        %799 = vmatprep.subr.mxu0 0.0
        %v800 = vand.u32 %v396, 4294901760
        %801 = vmatpush1.msra.mxu0 %v800
        %802 = vmatprep.subr.mxu0 0.0
        %v803 = vand.u32 %v397, 4294901760
        %804 = vmatpush1.msra.mxu0 %v803
        %805 = vmatprep.subr.mxu0 0.0
        %v806 = vand.u32 %v398, 4294901760
        %807 = vmatpush1.msra.mxu0 %v806
        %808 = vmatprep.subr.mxu0 0.0
        %v809 = vand.u32 %v399, 4294901760
        %810 = vmatpush1.msra.mxu0 %v809
        %811 = vmatprep.subr.mxu0 0.0
        %v812 = vand.u32 %v400, 4294901760
        %813 = vmatpush1.msra.mxu0 %v812
        %814 = vmatprep.subr.mxu0 0.0
        %v815 = vand.u32 %v401, 4294901760
        %816 = vmatpush1.msra.mxu0 %v815
        %817 = vmatprep.subr.mxu0 0.0
        %v818 = vand.u32 %v402, 4294901760
        %819 = vmatpush1.msra.mxu0 %v818
        %820 = vmatprep.subr.mxu0 0.0
        %821 = vmatpush1.msra.mxu0 0.0
        %822 = vmatprep.subr.mxu0 0.0
        %823 = vmatpush1.msra.mxu0 0.0
        %824 = vmatprep.subr.mxu0 0.0
        %825 = vmatpush1.msra.mxu0 0.0
        %826 = vmatprep.subr.mxu0 0.0
        %827 = vmatpush1.msra.mxu0 0.0
        %828 = vmatprep.subr.mxu0 0.0
        %829 = vmatpush1.msra.mxu0 0.0
        %830 = vmatprep.subr.mxu0 0.0
        %831 = vmatpush1.msra.mxu0 0.0
        %832 = vmatprep.subr.mxu0 0.0
        %833 = vmatpush1.msra.mxu0 0.0
        %834 = vmatprep.subr.mxu0 0.0
        %835 = vmatpush1.msra.mxu0 0.0
        %836 = vmatprep.subr.mxu0 0.0
        %837 = vmatpush1.msra.mxu0 0.0
        %838 = vmatprep.subr.mxu0 0.0
        %839 = vmatpush1.msra.mxu0 0.0
        %840 = vmatprep.subr.mxu0 0.0
        %841 = vmatpush1.msra.mxu0 0.0
        %842 = vmatprep.subr.mxu0 0.0
        %843 = vmatpush1.msra.mxu0 0.0
        %844 = vmatprep.subr.mxu0 0.0
        %845 = vmatpush1.msra.mxu0 0.0
        %846 = vmatprep.subr.mxu0 0.0
        %847 = vmatpush1.msra.mxu0 0.0
        %848 = vmatprep.subr.mxu0 0.0
        %849 = vmatpush1.msra.mxu0 0.0
        %850 = vmatprep.subr.mxu0 0.0
        %851 = vmatpush1.msra.mxu0 0.0
        %852 = vmatprep.mubr.f32.mxu0 0.0
        %v853 = vand.u32 %v377, 4294901760
        %v854 = vsub.f32 %v377, %v853
        %v855 = vand.u32 %v854, 4294901760
        %856 = vmatmul.mubr.f32.gmra.mrb[0].mxu0 %v855
        %v857 = vpop.f32.mrb[0].mxu0
        %v858 = vadd.f32 %v762, %v857
        %v859 = vpop.f32.mrb[0].mxu0
        %860 = vmatprep.mubr.f32.mxu0 0.0
        %v861 = vand.u32 %v378, 4294901760
        %v862 = vsub.f32 %v378, %v861
        %v863 = vand.u32 %v862, 4294901760
        %864 = vmatmul.mubr.f32.gmra.mrb[0].mxu0 %v863
        %v865 = vpop.f32.mrb[0].mxu0
        %v866 = vadd.f32 %v769, %v865
        %v867 = vpop.f32.mrb[0].mxu0
        %868 = vdwg.mxu0
        %869 = vmatprep.subr.mxu0 0.0
        %v870 = vand.u32 %v387, 4294901760
        %v871 = vsub.f32 %v387, %v870
        %v872 = vand.u32 %v871, 4294901760
        %873 = vmatpush1.msra.mxu0 %v872
        %874 = vmatprep.subr.mxu0 0.0
        %v875 = vand.u32 %v388, 4294901760
        %v876 = vsub.f32 %v388, %v875
        %v877 = vand.u32 %v876, 4294901760
        %878 = vmatpush1.msra.mxu0 %v877
        %879 = vmatprep.subr.mxu0 0.0
        %v880 = vand.u32 %v389, 4294901760
        %v881 = vsub.f32 %v389, %v880
        %v882 = vand.u32 %v881, 4294901760
        %883 = vmatpush1.msra.mxu0 %v882
        %884 = vmatprep.subr.mxu0 0.0
        %v885 = vand.u32 %v390, 4294901760
        %v886 = vsub.f32 %v390, %v885
        %v887 = vand.u32 %v886, 4294901760
        %888 = vmatpush1.msra.mxu0 %v887
        %889 = vmatprep.subr.mxu0 0.0
        %v890 = vand.u32 %v391, 4294901760
        %v891 = vsub.f32 %v391, %v890
        %v892 = vand.u32 %v891, 4294901760
        %893 = vmatpush1.msra.mxu0 %v892
        %894 = vmatprep.subr.mxu0 0.0
        %v895 = vand.u32 %v392, 4294901760
        %v896 = vsub.f32 %v392, %v895
        %v897 = vand.u32 %v896, 4294901760
        %898 = vmatpush1.msra.mxu0 %v897
        %899 = vmatprep.subr.mxu0 0.0
        %v900 = vand.u32 %v393, 4294901760
        %v901 = vsub.f32 %v393, %v900
        %v902 = vand.u32 %v901, 4294901760
        %903 = vmatpush1.msra.mxu0 %v902
        %904 = vmatprep.subr.mxu0 0.0
        %v905 = vand.u32 %v394, 4294901760
        %v906 = vsub.f32 %v394, %v905
        %v907 = vand.u32 %v906, 4294901760
        %908 = vmatpush1.msra.mxu0 %v907
        %909 = vmatprep.subr.mxu0 0.0
        %v910 = vand.u32 %v395, 4294901760
        %v911 = vsub.f32 %v395, %v910
        %v912 = vand.u32 %v911, 4294901760
        %913 = vmatpush1.msra.mxu0 %v912
        %914 = vmatprep.subr.mxu0 0.0
        %v915 = vand.u32 %v396, 4294901760
        %v916 = vsub.f32 %v396, %v915
        %v917 = vand.u32 %v916, 4294901760
        %918 = vmatpush1.msra.mxu0 %v917
        %919 = vmatprep.subr.mxu0 0.0
        %v920 = vand.u32 %v397, 4294901760
        %v921 = vsub.f32 %v397, %v920
        %v922 = vand.u32 %v921, 4294901760
        %923 = vmatpush1.msra.mxu0 %v922
        %924 = vmatprep.subr.mxu0 0.0
        %v925 = vand.u32 %v398, 4294901760
        %v926 = vsub.f32 %v398, %v925
        %v927 = vand.u32 %v926, 4294901760
        %928 = vmatpush1.msra.mxu0 %v927
        %929 = vmatprep.subr.mxu0 0.0
        %v930 = vand.u32 %v399, 4294901760
        %v931 = vsub.f32 %v399, %v930
        %v932 = vand.u32 %v931, 4294901760
        %933 = vmatpush1.msra.mxu0 %v932
        %934 = vmatprep.subr.mxu0 0.0
        %v935 = vand.u32 %v400, 4294901760
        %v936 = vsub.f32 %v400, %v935
        %v937 = vand.u32 %v936, 4294901760
        %938 = vmatpush1.msra.mxu0 %v937
        %939 = vmatprep.subr.mxu0 0.0
        %v940 = vand.u32 %v401, 4294901760
        %v941 = vsub.f32 %v401, %v940
        %v942 = vand.u32 %v941, 4294901760
        %943 = vmatpush1.msra.mxu0 %v942
        %944 = vmatprep.subr.mxu0 0.0
        %v945 = vand.u32 %v402, 4294901760
        %v946 = vsub.f32 %v402, %v945
        %v947 = vand.u32 %v946, 4294901760
        %948 = vmatpush1.msra.mxu0 %v947
        %949 = vmatprep.subr.mxu0 0.0
        %950 = vmatpush1.msra.mxu0 0.0
        %951 = vmatprep.subr.mxu0 0.0
        %952 = vmatpush1.msra.mxu0 0.0
        %953 = vmatprep.subr.mxu0 0.0
        %954 = vmatpush1.msra.mxu0 0.0
        %955 = vmatprep.subr.mxu0 0.0
        %956 = vmatpush1.msra.mxu0 0.0
        %957 = vmatprep.subr.mxu0 0.0
        %958 = vmatpush1.msra.mxu0 0.0
        %959 = vmatprep.subr.mxu0 0.0
        %960 = vmatpush1.msra.mxu0 0.0
        %961 = vmatprep.subr.mxu0 0.0
        %962 = vmatpush1.msra.mxu0 0.0
        %963 = vmatprep.subr.mxu0 0.0
        %964 = vmatpush1.msra.mxu0 0.0
        %965 = vmatprep.subr.mxu0 0.0
        %966 = vmatpush1.msra.mxu0 0.0
        %967 = vmatprep.subr.mxu0 0.0
        %968 = vmatpush1.msra.mxu0 0.0
        %969 = vmatprep.subr.mxu0 0.0
        %970 = vmatpush1.msra.mxu0 0.0
        %971 = vmatprep.subr.mxu0 0.0
        %972 = vmatpush1.msra.mxu0 0.0
        %973 = vmatprep.subr.mxu0 0.0
        %974 = vmatpush1.msra.mxu0 0.0
        %975 = vmatprep.subr.mxu0 0.0
        %976 = vmatpush1.msra.mxu0 0.0
        %977 = vmatprep.subr.mxu0 0.0
        %978 = vmatpush1.msra.mxu0 0.0
        %979 = vmatprep.subr.mxu0 0.0
        %980 = vmatpush1.msra.mxu0 0.0
        %981 = vmatprep.mubr.f32.mxu0 0.0
        %v982 = vand.u32 %v377, 4294901760
        %983 = vmatmul.mubr.f32.gmra.mrb[0].mxu0 %v982
        %v984 = vpop.f32.mrb[0].mxu0
        %v985 = vadd.f32 %v858, %v984
        %v986 = vpop.f32.mrb[0].mxu0
        %987 = vmatprep.mubr.f32.mxu0 0.0
        %v988 = vand.u32 %v378, 4294901760
        %989 = vmatmul.mubr.f32.gmra.mrb[0].mxu0 %v988
        %v990 = vpop.f32.mrb[0].mxu0
        %v991 = vadd.f32 %v866, %v990
        %v992 = vpop.f32.mrb[0].mxu0
        %993 = vdwg.mxu0
        %994 = vmatprep.subr.mxu0 0.0
        %v995 = vand.u32 %v387, 4294901760
        %996 = vmatpush1.msra.mxu0 %v995
        %997 = vmatprep.subr.mxu0 0.0
        %v998 = vand.u32 %v388, 4294901760
        %999 = vmatpush1.msra.mxu0 %v998
        %1000 = vmatprep.subr.mxu0 0.0
        %v1001 = vand.u32 %v389, 4294901760
        %1002 = vmatpush1.msra.mxu0 %v1001
        %1003 = vmatprep.subr.mxu0 0.0
        %v1004 = vand.u32 %v390, 4294901760
        %1005 = vmatpush1.msra.mxu0 %v1004
        %1006 = vmatprep.subr.mxu0 0.0
        %v1007 = vand.u32 %v391, 4294901760
        %1008 = vmatpush1.msra.mxu0 %v1007
        %1009 = vmatprep.subr.mxu0 0.0
        %v1010 = vand.u32 %v392, 4294901760
        %1011 = vmatpush1.msra.mxu0 %v1010
        %1012 = vmatprep.subr.mxu0 0.0
        %v1013 = vand.u32 %v393, 4294901760
        %1014 = vmatpush1.msra.mxu0 %v1013
        %1015 = vmatprep.subr.mxu0 0.0
        %v1016 = vand.u32 %v394, 4294901760
        %1017 = vmatpush1.msra.mxu0 %v1016
        %1018 = vmatprep.subr.mxu0 0.0
        %v1019 = vand.u32 %v395, 4294901760
        %1020 = vmatpush1.msra.mxu0 %v1019
        %1021 = vmatprep.subr.mxu0 0.0
        %v1022 = vand.u32 %v396, 4294901760
        %1023 = vmatpush1.msra.mxu0 %v1022
        %1024 = vmatprep.subr.mxu0 0.0
        %v1025 = vand.u32 %v397, 4294901760
        %1026 = vmatpush1.msra.mxu0 %v1025
        %1027 = vmatprep.subr.mxu0 0.0
        %v1028 = vand.u32 %v398, 4294901760
        %1029 = vmatpush1.msra.mxu0 %v1028
        %1030 = vmatprep.subr.mxu0 0.0
        %v1031 = vand.u32 %v399, 4294901760
        %1032 = vmatpush1.msra.mxu0 %v1031
        %1033 = vmatprep.subr.mxu0 0.0
        %v1034 = vand.u32 %v400, 4294901760
        %1035 = vmatpush1.msra.mxu0 %v1034
        %1036 = vmatprep.subr.mxu0 0.0
        %v1037 = vand.u32 %v401, 4294901760
        %1038 = vmatpush1.msra.mxu0 %v1037
        %1039 = vmatprep.subr.mxu0 0.0
        %v1040 = vand.u32 %v402, 4294901760
        %1041 = vmatpush1.msra.mxu0 %v1040
        %1042 = vmatprep.subr.mxu0 0.0
        %1043 = vmatpush1.msra.mxu0 0.0
        %1044 = vmatprep.subr.mxu0 0.0
        %1045 = vmatpush1.msra.mxu0 0.0
        %1046 = vmatprep.subr.mxu0 0.0
        %1047 = vmatpush1.msra.mxu0 0.0
        %1048 = vmatprep.subr.mxu0 0.0
        %1049 = vmatpush1.msra.mxu0 0.0
        %1050 = vmatprep.subr.mxu0 0.0
        %1051 = vmatpush1.msra.mxu0 0.0
        %1052 = vmatprep.subr.mxu0 0.0
        %1053 = vmatpush1.msra.mxu0 0.0
        %1054 = vmatprep.subr.mxu0 0.0
        %1055 = vmatpush1.msra.mxu0 0.0
        %1056 = vmatprep.subr.mxu0 0.0
        %1057 = vmatpush1.msra.mxu0 0.0
        %1058 = vmatprep.subr.mxu0 0.0
        %1059 = vmatpush1.msra.mxu0 0.0
        %1060 = vmatprep.subr.mxu0 0.0
        %1061 = vmatpush1.msra.mxu0 0.0
        %1062 = vmatprep.subr.mxu0 0.0
        %1063 = vmatpush1.msra.mxu0 0.0
        %1064 = vmatprep.subr.mxu0 0.0
        %1065 = vmatpush1.msra.mxu0 0.0
        %1066 = vmatprep.subr.mxu0 0.0
        %1067 = vmatpush1.msra.mxu0 0.0
        %1068 = vmatprep.subr.mxu0 0.0
        %1069 = vmatpush1.msra.mxu0 0.0
        %1070 = vmatprep.subr.mxu0 0.0
        %1071 = vmatpush1.msra.mxu0 0.0
        %1072 = vmatprep.subr.mxu0 0.0
        %1073 = vmatpush1.msra.mxu0 0.0
        %1074 = vmatprep.mubr.f32.mxu0 0.0
        %v1075 = vand.u32 %v377, 4294901760
        %1076 = vmatmul.mubr.f32.gmra.mrb[0].mxu0 %v1075
        %v1077 = vpop.f32.mrb[0].mxu0
        %v1078 = vadd.f32 %v985, %v1077
        %v1079 = vpop.f32.mrb[0].mxu0
        %1080 = vmatprep.mubr.f32.mxu0 0.0
        %v1081 = vand.u32 %v378, 4294901760
        %1082 = vmatmul.mubr.f32.gmra.mrb[0].mxu0 %v1081
        %v1083 = vpop.f32.mrb[0].mxu0
        %v1084 = vadd.f32 %v991, %v1083
        %v1085 = vpop.f32.mrb[0].mxu0
        %1086 = vdwg.mxu0
        %v1087 = vmul.f32 %v1078, 0.015625
        %v1088 = vmul.f32 %v1084, 0.015625
        %v1089 = vld [vmem:[%s3] sm:$0x1]
        %v1091 = vlaneseq
        %v1092 = vshrl.u32 %v1091, 7
        %v1093 = vsub.s32 0, %v1092
        %v1094 = vrot.slane %v1089, %v1093
        %v1096 = vadd.f32 %v385, %v1094
        %v1097 = vadd.f32 %v386, %v1094
        %v1098 = vsub.f32 %v1096, %v1087
        %v1099 = vsub.f32 %v1097, %v1088
        %v1100 = vmax.f32 %v1098, 0.0
        %v1101 = vmax.f32 %v1099, 0.0
        %v1102 = vadd.f32 %v1100, 1e-05
        %v1103 = vadd.f32 %v1101, 1e-05
        %v1104 = vrsqrt.pop %v1102
        %v1105 = vrsqrt.pop %v1103
        %v1106 = vld [vmem:[#allocation2] sm:$0x1]
        %v1107 = vlaneseq
        %v1108 = vshrl.u32 %v1107, 7
        %v1109 = vsub.s32 0, %v1108
        %v1110 = vrot.slane %v1106, %v1109
        %v1111 = vsub.f32 %v377, %v1110
        %v1112 = vsub.f32 %v378, %v1110
        %1114 = vset.pattern.permute.xlu0 0
        %1115 = vperm.xlu0 %1114, %v1104
        %v1116 = vpop.permute.xlu0 %1115
        %1119 = vset.pattern.permute.xlu0 0
        %1120 = vperm.xlu0 %1119, %v1105
        %v1121 = vpop.permute.xlu0 %1120
        %v1123 = vmul.f32 %v1111, %v1116
        %v1124 = vmul.f32 %v1112, %v1121
        %v1125 = vld [vmem:[#allocation5] sm:$0x1]
        %v1126 = vlaneseq
        %v1127 = vshrl.u32 %v1126, 7
        %v1128 = vsub.s32 0, %v1127
        %v1129 = vrot.slane %v1125, %v1128
        %v1130 = vmul.f32 %v1123, %v1129
        %v1131 = vmul.f32 %v1124, %v1129
        %v1132 = vld [vmem:[#allocation7] sm:$0x1]
        %v1133 = vlaneseq
        %v1134 = vshrl.u32 %v1133, 7
        %v1135 = vsub.s32 0, %v1134
        %v1136 = vrot.slane %v1132, %v1135
        %v1137 = vadd.f32 %v1130, %v1136
        %v1138 = vadd.f32 %v1131, %v1136
        %v1139 = vmul.f32 %v1137, 0.01
        %v1140 = vmul.f32 %v1138, 0.01
        %v1141 = vmax.f32 %v1137, %v1139
        %v1142 = vmax.f32 %v1138, %v1140
        %v1143 = vadd.f32 %v1141, 0.0
        %v1144 = vadd.f32 %v1142, 0.0
        %v1145 = vld [vmem:[#allocation2 + $0x1] sm:$0x1]
        %v1146 = vlaneseq
        %v1147 = vshrl.u32 %v1146, 7
        %v1148 = vsub.s32 0, %v1147
        %v1149 = vrot.slane %v1145, %v1148
        %v1150 = vsub.f32 %v377, %v1149
        %v1151 = vsub.f32 %v378, %v1149
        %1152 = vset.pattern.permute.xlu0 1
        %1153 = vperm.xlu0 %1152, %v1104
        %v1154 = vpop.permute.xlu0 %1153
        %1156 = vset.pattern.permute.xlu0 1
        %1157 = vperm.xlu0 %1156, %v1105
        %v1158 = vpop.permute.xlu0 %1157
        %v1160 = vmul.f32 %v1150, %v1154
        %v1161 = vmul.f32 %v1151, %v1158
        %v1162 = vld [vmem:[#allocation5 + $0x1] sm:$0x1]
        %v1163 = vlaneseq
        %v1164 = vshrl.u32 %v1163, 7
        %v1165 = vsub.s32 0, %v1164
        %v1166 = vrot.slane %v1162, %v1165
        %v1167 = vmul.f32 %v1160, %v1166
        %v1168 = vmul.f32 %v1161, %v1166
        %v1169 = vld [vmem:[#allocation7 + $0x1] sm:$0x1]
        %v1170 = vlaneseq
        %v1171 = vshrl.u32 %v1170, 7
        %v1172 = vsub.s32 0, %v1171
        %v1173 = vrot.slane %v1169, %v1172
        %v1174 = vadd.f32 %v1167, %v1173
        %v1175 = vadd.f32 %v1168, %v1173
        %v1176 = vmul.f32 %v1174, 0.01
        %v1177 = vmul.f32 %v1175, 0.01
        %v1178 = vmax.f32 %v1174, %v1176
        %v1179 = vmax.f32 %v1175, %v1177
        %v1180 = vadd.f32 %v1143, %v1178
        %v1181 = vadd.f32 %v1144, %v1179
        %v1182 = vld [vmem:[#allocation2 + $0x2] sm:$0x1]
        %v1183 = vlaneseq
        %v1184 = vshrl.u32 %v1183, 7
        %v1185 = vsub.s32 0, %v1184
        %v1186 = vrot.slane %v1182, %v1185
        %v1187 = vsub.f32 %v377, %v1186
        %v1188 = vsub.f32 %v378, %v1186
        %1189 = vset.pattern.permute.xlu0 2
        %1190 = vperm.xlu0 %1189, %v1104
        %v1191 = vpop.permute.xlu0 %1190
        %1193 = vset.pattern.permute.xlu0 2
        %1194 = vperm.xlu0 %1193, %v1105
        %v1195 = vpop.permute.xlu0 %1194
        %v1197 = vmul.f32 %v1187, %v1191
        %v1198 = vmul.f32 %v1188, %v1195
        %v1199 = vld [vmem:[#allocation5 + $0x2] sm:$0x1]
        %v1200 = vlaneseq
        %v1201 = vshrl.u32 %v1200, 7
        %v1202 = vsub.s32 0, %v1201
        %v1203 = vrot.slane %v1199, %v1202
        %v1204 = vmul.f32 %v1197, %v1203
        %v1205 = vmul.f32 %v1198, %v1203
        %v1206 = vld [vmem:[#allocation7 + $0x2] sm:$0x1]
        %v1207 = vlaneseq
        %v1208 = vshrl.u32 %v1207, 7
        %v1209 = vsub.s32 0, %v1208
        %v1210 = vrot.slane %v1206, %v1209
        %v1211 = vadd.f32 %v1204, %v1210
        %v1212 = vadd.f32 %v1205, %v1210
        %v1213 = vmul.f32 %v1211, 0.01
        %v1214 = vmul.f32 %v1212, 0.01
        %v1215 = vmax.f32 %v1211, %v1213
        %v1216 = vmax.f32 %v1212, %v1214
        %v1217 = vadd.f32 %v1180, %v1215
        %v1218 = vadd.f32 %v1181, %v1216
        %v1219 = vld [vmem:[#allocation2 + $0x3] sm:$0x1]
        %v1220 = vlaneseq
        %v1221 = vshrl.u32 %v1220, 7
        %v1222 = vsub.s32 0, %v1221
        %v1223 = vrot.slane %v1219, %v1222
        %v1224 = vsub.f32 %v377, %v1223
        %v1225 = vsub.f32 %v378, %v1223
        %1226 = vset.pattern.permute.xlu0 3
        %1227 = vperm.xlu0 %1226, %v1104
        %v1228 = vpop.permute.xlu0 %1227
        %1230 = vset.pattern.permute.xlu0 3
        %1231 = vperm.xlu0 %1230, %v1105
        %v1232 = vpop.permute.xlu0 %1231
        %v1234 = vmul.f32 %v1224, %v1228
        %v1235 = vmul.f32 %v1225, %v1232
        %v1236 = vld [vmem:[#allocation5 + $0x3] sm:$0x1]
        %v1237 = vlaneseq
        %v1238 = vshrl.u32 %v1237, 7
        %v1239 = vsub.s32 0, %v1238
        %v1240 = vrot.slane %v1236, %v1239
        %v1241 = vmul.f32 %v1234, %v1240
        %v1242 = vmul.f32 %v1235, %v1240
        %v1243 = vld [vmem:[#allocation7 + $0x3] sm:$0x1]
        %v1244 = vlaneseq
        %v1245 = vshrl.u32 %v1244, 7
        %v1246 = vsub.s32 0, %v1245
        %v1247 = vrot.slane %v1243, %v1246
        %v1248 = vadd.f32 %v1241, %v1247
        %v1249 = vadd.f32 %v1242, %v1247
        %v1250 = vmul.f32 %v1248, 0.01
        %v1251 = vmul.f32 %v1249, 0.01
        %v1252 = vmax.f32 %v1248, %v1250
        %v1253 = vmax.f32 %v1249, %v1251
        %v1254 = vadd.f32 %v1217, %v1252
        %v1255 = vadd.f32 %v1218, %v1253
        %v1256 = vld [vmem:[%s6] sm:$0xff]
        %v1257 = vld [vmem:[%s6 + $0x8] sm:$0xff]
        %v1258 = vld [vmem:[%s6 + $0x10] sm:$0xff]
        %v1259 = vld [vmem:[%s6 + $0x18] sm:$0xff]
        %v1260 = vld [vmem:[%s6 + $0x20] sm:$0xff]
        %v1261 = vld [vmem:[%s6 + $0x28] sm:$0xff]
        %v1262 = vld [vmem:[%s6 + $0x30] sm:$0xff]
        %v1263 = vld [vmem:[%s6 + $0x38] sm:$0xff]
        %v1264 = vld [vmem:[%s6 + $0x40] sm:$0xff]
        %v1265 = vld [vmem:[%s6 + $0x48] sm:$0xff]
        %v1266 = vld [vmem:[%s6 + $0x50] sm:$0xff]
        %v1267 = vld [vmem:[%s6 + $0x58] sm:$0xff]
        %v1268 = vld [vmem:[%s6 + $0x60] sm:$0xff]
        %v1269 = vld [vmem:[%s6 + $0x68] sm:$0xff]
        %v1270 = vld [vmem:[%s6 + $0x70] sm:$0xff]
        %v1271 = vld [vmem:[%s6 + $0x78] sm:$0xff]
        %v1272 = vld [vmem:[%s7] sm:$0x1]
        %v1274 = vlaneseq
        %v1275 = vshrl.u32 %v1274, 7
        %v1276 = vsub.s32 0, %v1275
        %v1277 = vrot.slane %v1272, %v1276
        %1279 = vmatprep.subr.mxu0 0.0
        %v1280 = vand.u32 %v1256, 4294901760
        %1281 = vmatpush1.msra.mxu0 %v1280
        %1282 = vmatprep.subr.mxu0 0.0
        %v1283 = vand.u32 %v1257, 4294901760
        %1284 = vmatpush1.msra.mxu0 %v1283
        %1285 = vmatprep.subr.mxu0 0.0
        %v1286 = vand.u32 %v1258, 4294901760
        %1287 = vmatpush1.msra.mxu0 %v1286
        %1288 = vmatprep.subr.mxu0 0.0
        %v1289 = vand.u32 %v1259, 4294901760
        %1290 = vmatpush1.msra.mxu0 %v1289
        %1291 = vmatprep.subr.mxu0 0.0
        %v1292 = vand.u32 %v1260, 4294901760
        %1293 = vmatpush1.msra.mxu0 %v1292
        %1294 = vmatprep.subr.mxu0 0.0
        %v1295 = vand.u32 %v1261, 4294901760
        %1296 = vmatpush1.msra.mxu0 %v1295
        %1297 = vmatprep.subr.mxu0 0.0
        %v1298 = vand.u32 %v1262, 4294901760
        %1299 = vmatpush1.msra.mxu0 %v1298
        %1300 = vmatprep.subr.mxu0 0.0
        %v1301 = vand.u32 %v1263, 4294901760
        %1302 = vmatpush1.msra.mxu0 %v1301
        %1303 = vmatprep.subr.mxu0 0.0
        %v1304 = vand.u32 %v1264, 4294901760
        %1305 = vmatpush1.msra.mxu0 %v1304
        %1306 = vmatprep.subr.mxu0 0.0
        %v1307 = vand.u32 %v1265, 4294901760
        %1308 = vmatpush1.msra.mxu0 %v1307
        %1309 = vmatprep.subr.mxu0 0.0
        %v1310 = vand.u32 %v1266, 4294901760
        %1311 = vmatpush1.msra.mxu0 %v1310
        %1312 = vmatprep.subr.mxu0 0.0
        %v1313 = vand.u32 %v1267, 4294901760
        %1314 = vmatpush1.msra.mxu0 %v1313
        %1315 = vmatprep.subr.mxu0 0.0
        %v1316 = vand.u32 %v1268, 4294901760
        %1317 = vmatpush1.msra.mxu0 %v1316
        %1318 = vmatprep.subr.mxu0 0.0
        %v1319 = vand.u32 %v1269, 4294901760
        %1320 = vmatpush1.msra.mxu0 %v1319
        %1321 = vmatprep.subr.mxu0 0.0
        %v1322 = vand.u32 %v1270, 4294901760
        %1323 = vmatpush1.msra.mxu0 %v1322
        %1324 = vmatprep.subr.mxu0 0.0
        %v1325 = vand.u32 %v1271, 4294901760
        %1326 = vmatpush1.msra.mxu0 %v1325
        %1327 = vmatprep.subr.mxu0 0.0
        %1328 = vmatpush1.msra.mxu0 0.0
        %1329 = vmatprep.subr.mxu0 0.0
        %1330 = vmatpush1.msra.mxu0 0.0
        %1331 = vmatprep.subr.mxu0 0.0
        %1332 = vmatpush1.msra.mxu0 0.0
        %1333 = vmatprep.subr.mxu0 0.0
        %1334 = vmatpush1.msra.mxu0 0.0
        %1335 = vmatprep.subr.mxu0 0.0
        %1336 = vmatpush1.msra.mxu0 0.0
        %1337 = vmatprep.subr.mxu0 0.0
        %1338 = vmatpush1.msra.mxu0 0.0
        %1339 = vmatprep.subr.mxu0 0.0
        %1340 = vmatpush1.msra.mxu0 0.0
        %1341 = vmatprep.subr.mxu0 0.0
        %1342 = vmatpush1.msra.mxu0 0.0
        %1343 = vmatprep.subr.mxu0 0.0
        %1344 = vmatpush1.msra.mxu0 0.0
        %1345 = vmatprep.subr.mxu0 0.0
        %1346 = vmatpush1.msra.mxu0 0.0
        %1347 = vmatprep.subr.mxu0 0.0
        %1348 = vmatpush1.msra.mxu0 0.0
        %1349 = vmatprep.subr.mxu0 0.0
        %1350 = vmatpush1.msra.mxu0 0.0
        %1351 = vmatprep.subr.mxu0 0.0
        %1352 = vmatpush1.msra.mxu0 0.0
        %1353 = vmatprep.subr.mxu0 0.0
        %1354 = vmatpush1.msra.mxu0 0.0
        %1355 = vmatprep.subr.mxu0 0.0
        %1356 = vmatpush1.msra.mxu0 0.0
        %1357 = vmatprep.subr.mxu0 0.0
        %1358 = vmatpush1.msra.mxu0 0.0
        %1359 = vmatprep.mubr.f32.mxu0 0.0
        %v1360 = vand.u32 %v1254, 4294901760
        %v1361 = vsub.f32 %v1254, %v1360
        %v1362 = vand.u32 %v1361, 4294901760
        %v1363 = vsub.f32 %v1361, %v1362
        %v1364 = vand.u32 %v1363, 4294901760
        %1365 = vmatmul.mubr.f32.gmra.mrb[0].mxu0 %v1364
        %v1366 = vpop.f32.mrb[0].mxu0
        %v1367 = vadd.f32 %v1277, %v1366
        %v1368 = vpop.f32.mrb[0].mxu0
        %1369 = vmatprep.mubr.f32.mxu0 0.0
        %v1370 = vand.u32 %v1255, 4294901760
        %v1371 = vsub.f32 %v1255, %v1370
        %v1372 = vand.u32 %v1371, 4294901760
        %v1373 = vsub.f32 %v1371, %v1372
        %v1374 = vand.u32 %v1373, 4294901760
        %1375 = vmatmul.mubr.f32.gmra.mrb[0].mxu0 %v1374
        %v1376 = vpop.f32.mrb[0].mxu0
        %v1377 = vadd.f32 %v1277, %v1376
        %v1378 = vpop.f32.mrb[0].mxu0
        %1379 = vdwg.mxu0
        %1380 = vmatprep.subr.mxu0 0.0
        %v1381 = vand.u32 %v1256, 4294901760
        %v1382 = vsub.f32 %v1256, %v1381
        %v1383 = vand.u32 %v1382, 4294901760
        %v1384 = vsub.f32 %v1382, %v1383
        %v1385 = vand.u32 %v1384, 4294901760
        %1386 = vmatpush1.msra.mxu0 %v1385
        %1387 = vmatprep.subr.mxu0 0.0
        %v1388 = vand.u32 %v1257, 4294901760
        %v1389 = vsub.f32 %v1257, %v1388
        %v1390 = vand.u32 %v1389, 4294901760
        %v1391 = vsub.f32 %v1389, %v1390
        %v1392 = vand.u32 %v1391, 4294901760
        %1393 = vmatpush1.msra.mxu0 %v1392
        %1394 = vmatprep.subr.mxu0 0.0
        %v1395 = vand.u32 %v1258, 4294901760
        %v1396 = vsub.f32 %v1258, %v1395
        %v1397 = vand.u32 %v1396, 4294901760
        %v1398 = vsub.f32 %v1396, %v1397
        %v1399 = vand.u32 %v1398, 4294901760
        %1400 = vmatpush1.msra.mxu0 %v1399
        %1401 = vmatprep.subr.mxu0 0.0
        %v1402 = vand.u32 %v1259, 4294901760
        %v1403 = vsub.f32 %v1259, %v1402
        %v1404 = vand.u32 %v1403, 4294901760
        %v1405 = vsub.f32 %v1403, %v1404
        %v1406 = vand.u32 %v1405, 4294901760
        %1407 = vmatpush1.msra.mxu0 %v1406
        %1408 = vmatprep.subr.mxu0 0.0
        %v1409 = vand.u32 %v1260, 4294901760
        %v1410 = vsub.f32 %v1260, %v1409
        %v1411 = vand.u32 %v1410, 4294901760
        %v1412 = vsub.f32 %v1410, %v1411
        %v1413 = vand.u32 %v1412, 4294901760
        %1414 = vmatpush1.msra.mxu0 %v1413
        %1415 = vmatprep.subr.mxu0 0.0
        %v1416 = vand.u32 %v1261, 4294901760
        %v1417 = vsub.f32 %v1261, %v1416
        %v1418 = vand.u32 %v1417, 4294901760
        %v1419 = vsub.f32 %v1417, %v1418
        %v1420 = vand.u32 %v1419, 4294901760
        %1421 = vmatpush1.msra.mxu0 %v1420
        %1422 = vmatprep.subr.mxu0 0.0
        %v1423 = vand.u32 %v1262, 4294901760
        %v1424 = vsub.f32 %v1262, %v1423
        %v1425 = vand.u32 %v1424, 4294901760
        %v1426 = vsub.f32 %v1424, %v1425
        %v1427 = vand.u32 %v1426, 4294901760
        %1428 = vmatpush1.msra.mxu0 %v1427
        %1429 = vmatprep.subr.mxu0 0.0
        %v1430 = vand.u32 %v1263, 4294901760
        %v1431 = vsub.f32 %v1263, %v1430
        %v1432 = vand.u32 %v1431, 4294901760
        %v1433 = vsub.f32 %v1431, %v1432
        %v1434 = vand.u32 %v1433, 4294901760
        %1435 = vmatpush1.msra.mxu0 %v1434
        %1436 = vmatprep.subr.mxu0 0.0
        %v1437 = vand.u32 %v1264, 4294901760
        %v1438 = vsub.f32 %v1264, %v1437
        %v1439 = vand.u32 %v1438, 4294901760
        %v1440 = vsub.f32 %v1438, %v1439
        %v1441 = vand.u32 %v1440, 4294901760
        %1442 = vmatpush1.msra.mxu0 %v1441
        %1443 = vmatprep.subr.mxu0 0.0
        %v1444 = vand.u32 %v1265, 4294901760
        %v1445 = vsub.f32 %v1265, %v1444
        %v1446 = vand.u32 %v1445, 4294901760
        %v1447 = vsub.f32 %v1445, %v1446
        %v1448 = vand.u32 %v1447, 4294901760
        %1449 = vmatpush1.msra.mxu0 %v1448
        %1450 = vmatprep.subr.mxu0 0.0
        %v1451 = vand.u32 %v1266, 4294901760
        %v1452 = vsub.f32 %v1266, %v1451
        %v1453 = vand.u32 %v1452, 4294901760
        %v1454 = vsub.f32 %v1452, %v1453
        %v1455 = vand.u32 %v1454, 4294901760
        %1456 = vmatpush1.msra.mxu0 %v1455
        %1457 = vmatprep.subr.mxu0 0.0
        %v1458 = vand.u32 %v1267, 4294901760
        %v1459 = vsub.f32 %v1267, %v1458
        %v1460 = vand.u32 %v1459, 4294901760
        %v1461 = vsub.f32 %v1459, %v1460
        %v1462 = vand.u32 %v1461, 4294901760
        %1463 = vmatpush1.msra.mxu0 %v1462
        %1464 = vmatprep.subr.mxu0 0.0
        %v1465 = vand.u32 %v1268, 4294901760
        %v1466 = vsub.f32 %v1268, %v1465
        %v1467 = vand.u32 %v1466, 4294901760
        %v1468 = vsub.f32 %v1466, %v1467
        %v1469 = vand.u32 %v1468, 4294901760
        %1470 = vmatpush1.msra.mxu0 %v1469
        %1471 = vmatprep.subr.mxu0 0.0
        %v1472 = vand.u32 %v1269, 4294901760
        %v1473 = vsub.f32 %v1269, %v1472
        %v1474 = vand.u32 %v1473, 4294901760
        %v1475 = vsub.f32 %v1473, %v1474
        %v1476 = vand.u32 %v1475, 4294901760
        %1477 = vmatpush1.msra.mxu0 %v1476
        %1478 = vmatprep.subr.mxu0 0.0
        %v1479 = vand.u32 %v1270, 4294901760
        %v1480 = vsub.f32 %v1270, %v1479
        %v1481 = vand.u32 %v1480, 4294901760
        %v1482 = vsub.f32 %v1480, %v1481
        %v1483 = vand.u32 %v1482, 4294901760
        %1484 = vmatpush1.msra.mxu0 %v1483
        %1485 = vmatprep.subr.mxu0 0.0
        %v1486 = vand.u32 %v1271, 4294901760
        %v1487 = vsub.f32 %v1271, %v1486
        %v1488 = vand.u32 %v1487, 4294901760
        %v1489 = vsub.f32 %v1487, %v1488
        %v1490 = vand.u32 %v1489, 4294901760
        %1491 = vmatpush1.msra.mxu0 %v1490
        %1492 = vmatprep.subr.mxu0 0.0
        %1493 = vmatpush1.msra.mxu0 0.0
        %1494 = vmatprep.subr.mxu0 0.0
        %1495 = vmatpush1.msra.mxu0 0.0
        %1496 = vmatprep.subr.mxu0 0.0
        %1497 = vmatpush1.msra.mxu0 0.0
        %1498 = vmatprep.subr.mxu0 0.0
        %1499 = vmatpush1.msra.mxu0 0.0
        %1500 = vmatprep.subr.mxu0 0.0
        %1501 = vmatpush1.msra.mxu0 0.0
        %1502 = vmatprep.subr.mxu0 0.0
        %1503 = vmatpush1.msra.mxu0 0.0
        %1504 = vmatprep.subr.mxu0 0.0
        %1505 = vmatpush1.msra.mxu0 0.0
        %1506 = vmatprep.subr.mxu0 0.0
        %1507 = vmatpush1.msra.mxu0 0.0
        %1508 = vmatprep.subr.mxu0 0.0
        %1509 = vmatpush1.msra.mxu0 0.0
        %1510 = vmatprep.subr.mxu0 0.0
        %1511 = vmatpush1.msra.mxu0 0.0
        %1512 = vmatprep.subr.mxu0 0.0
        %1513 = vmatpush1.msra.mxu0 0.0
        %1514 = vmatprep.subr.mxu0 0.0
        %1515 = vmatpush1.msra.mxu0 0.0
        %1516 = vmatprep.subr.mxu0 0.0
        %1517 = vmatpush1.msra.mxu0 0.0
        %1518 = vmatprep.subr.mxu0 0.0
        %1519 = vmatpush1.msra.mxu0 0.0
        %1520 = vmatprep.subr.mxu0 0.0
        %1521 = vmatpush1.msra.mxu0 0.0
        %1522 = vmatprep.subr.mxu0 0.0
        %1523 = vmatpush1.msra.mxu0 0.0
        %1524 = vmatprep.mubr.f32.mxu0 0.0
        %v1525 = vand.u32 %v1254, 4294901760
        %1526 = vmatmul.mubr.f32.gmra.mrb[0].mxu0 %v1525
        %v1527 = vpop.f32.mrb[0].mxu0
        %v1528 = vadd.f32 %v1367, %v1527
        %v1529 = vpop.f32.mrb[0].mxu0
        %1530 = vmatprep.mubr.f32.mxu0 0.0
        %v1531 = vand.u32 %v1255, 4294901760
        %1532 = vmatmul.mubr.f32.gmra.mrb[0].mxu0 %v1531
        %v1533 = vpop.f32.mrb[0].mxu0
        %v1534 = vadd.f32 %v1377, %v1533
        %v1535 = vpop.f32.mrb[0].mxu0
        %1536 = vdwg.mxu0
        %1537 = vmatprep.subr.mxu0 0.0
        %v1538 = vand.u32 %v1256, 4294901760
        %v1539 = vsub.f32 %v1256, %v1538
        %1540 = vmatpush1.msra.mxu0 %v1539
        %1541 = vmatprep.subr.mxu0 0.0
        %v1542 = vand.u32 %v1257, 4294901760
        %v1543 = vsub.f32 %v1257, %v1542
        %1544 = vmatpush1.msra.mxu0 %v1543
        %1545 = vmatprep.subr.mxu0 0.0
        %v1546 = vand.u32 %v1258, 4294901760
        %v1547 = vsub.f32 %v1258, %v1546
        %1548 = vmatpush1.msra.mxu0 %v1547
        %1549 = vmatprep.subr.mxu0 0.0
        %v1550 = vand.u32 %v1259, 4294901760
        %v1551 = vsub.f32 %v1259, %v1550
        %1552 = vmatpush1.msra.mxu0 %v1551
        %1553 = vmatprep.subr.mxu0 0.0
        %v1554 = vand.u32 %v1260, 4294901760
        %v1555 = vsub.f32 %v1260, %v1554
        %1556 = vmatpush1.msra.mxu0 %v1555
        %1557 = vmatprep.subr.mxu0 0.0
        %v1558 = vand.u32 %v1261, 4294901760
        %v1559 = vsub.f32 %v1261, %v1558
        %1560 = vmatpush1.msra.mxu0 %v1559
        %1561 = vmatprep.subr.mxu0 0.0
        %v1562 = vand.u32 %v1262, 4294901760
        %v1563 = vsub.f32 %v1262, %v1562
        %1564 = vmatpush1.msra.mxu0 %v1563
        %1565 = vmatprep.subr.mxu0 0.0
        %v1566 = vand.u32 %v1263, 4294901760
        %v1567 = vsub.f32 %v1263, %v1566
        %1568 = vmatpush1.msra.mxu0 %v1567
        %1569 = vmatprep.subr.mxu0 0.0
        %v1570 = vand.u32 %v1264, 4294901760
        %v1571 = vsub.f32 %v1264, %v1570
        %1572 = vmatpush1.msra.mxu0 %v1571
        %1573 = vmatprep.subr.mxu0 0.0
        %v1574 = vand.u32 %v1265, 4294901760
        %v1575 = vsub.f32 %v1265, %v1574
        %1576 = vmatpush1.msra.mxu0 %v1575
        %1577 = vmatprep.subr.mxu0 0.0
        %v1578 = vand.u32 %v1266, 4294901760
        %v1579 = vsub.f32 %v1266, %v1578
        %1580 = vmatpush1.msra.mxu0 %v1579
        %1581 = vmatprep.subr.mxu0 0.0
        %v1582 = vand.u32 %v1267, 4294901760
        %v1583 = vsub.f32 %v1267, %v1582
        %1584 = vmatpush1.msra.mxu0 %v1583
        %1585 = vmatprep.subr.mxu0 0.0
        %v1586 = vand.u32 %v1268, 4294901760
        %v1587 = vsub.f32 %v1268, %v1586
        %1588 = vmatpush1.msra.mxu0 %v1587
        %1589 = vmatprep.subr.mxu0 0.0
        %v1590 = vand.u32 %v1269, 4294901760
        %v1591 = vsub.f32 %v1269, %v1590
        %1592 = vmatpush1.msra.mxu0 %v1591
        %1593 = vmatprep.subr.mxu0 0.0
        %v1594 = vand.u32 %v1270, 4294901760
        %v1595 = vsub.f32 %v1270, %v1594
        %1596 = vmatpush1.msra.mxu0 %v1595
        %1597 = vmatprep.subr.mxu0 0.0
        %v1598 = vand.u32 %v1271, 4294901760
        %v1599 = vsub.f32 %v1271, %v1598
        %1600 = vmatpush1.msra.mxu0 %v1599
        %1601 = vmatprep.subr.mxu0 0.0
        %1602 = vmatpush1.msra.mxu0 0.0
        %1603 = vmatprep.subr.mxu0 0.0
        %1604 = vmatpush1.msra.mxu0 0.0
        %1605 = vmatprep.subr.mxu0 0.0
        %1606 = vmatpush1.msra.mxu0 0.0
        %1607 = vmatprep.subr.mxu0 0.0
        %1608 = vmatpush1.msra.mxu0 0.0
        %1609 = vmatprep.subr.mxu0 0.0
        %1610 = vmatpush1.msra.mxu0 0.0
        %1611 = vmatprep.subr.mxu0 0.0
        %1612 = vmatpush1.msra.mxu0 0.0
        %1613 = vmatprep.subr.mxu0 0.0
        %1614 = vmatpush1.msra.mxu0 0.0
        %1615 = vmatprep.subr.mxu0 0.0
        %1616 = vmatpush1.msra.mxu0 0.0
        %1617 = vmatprep.subr.mxu0 0.0
        %1618 = vmatpush1.msra.mxu0 0.0
        %1619 = vmatprep.subr.mxu0 0.0
        %1620 = vmatpush1.msra.mxu0 0.0
        %1621 = vmatprep.subr.mxu0 0.0
        %1622 = vmatpush1.msra.mxu0 0.0
        %1623 = vmatprep.subr.mxu0 0.0
        %1624 = vmatpush1.msra.mxu0 0.0
        %1625 = vmatprep.subr.mxu0 0.0
        %1626 = vmatpush1.msra.mxu0 0.0
        %1627 = vmatprep.subr.mxu0 0.0
        %1628 = vmatpush1.msra.mxu0 0.0
        %1629 = vmatprep.subr.mxu0 0.0
        %1630 = vmatpush1.msra.mxu0 0.0
        %1631 = vmatprep.subr.mxu0 0.0
        %1632 = vmatpush1.msra.mxu0 0.0
        %1633 = vmatprep.mubr.f32.mxu0 0.0
        %v1634 = vand.u32 %v1254, 4294901760
        %v1635 = vsub.f32 %v1254, %v1634
        %1636 = vmatmul.mubr.f32.gmra.mrb[0].mxu0 %v1635
        %v1637 = vpop.f32.mrb[0].mxu0
        %v1638 = vadd.f32 %v1528, %v1637
        %v1639 = vpop.f32.mrb[0].mxu0
        %1640 = vmatprep.mubr.f32.mxu0 0.0
        %v1641 = vand.u32 %v1255, 4294901760
        %v1642 = vsub.f32 %v1255, %v1641
        %1643 = vmatmul.mubr.f32.gmra.mrb[0].mxu0 %v1642
        %v1644 = vpop.f32.mrb[0].mxu0
        %v1645 = vadd.f32 %v1534, %v1644
        %v1646 = vpop.f32.mrb[0].mxu0
        %1647 = vdwg.mxu0
        %1648 = vmatprep.subr.mxu0 0.0
        %v1649 = vand.u32 %v1256, 4294901760
        %1650 = vmatpush1.msra.mxu0 %v1649
        %1651 = vmatprep.subr.mxu0 0.0
        %v1652 = vand.u32 %v1257, 4294901760
        %1653 = vmatpush1.msra.mxu0 %v1652
        %1654 = vmatprep.subr.mxu0 0.0
        %v1655 = vand.u32 %v1258, 4294901760
        %1656 = vmatpush1.msra.mxu0 %v1655
        %1657 = vmatprep.subr.mxu0 0.0
        %v1658 = vand.u32 %v1259, 4294901760
        %1659 = vmatpush1.msra.mxu0 %v1658
        %1660 = vmatprep.subr.mxu0 0.0
        %v1661 = vand.u32 %v1260, 4294901760
        %1662 = vmatpush1.msra.mxu0 %v1661
        %1663 = vmatprep.subr.mxu0 0.0
        %v1664 = vand.u32 %v1261, 4294901760
        %1665 = vmatpush1.msra.mxu0 %v1664
        %1666 = vmatprep.subr.mxu0 0.0
        %v1667 = vand.u32 %v1262, 4294901760
        %1668 = vmatpush1.msra.mxu0 %v1667
        %1669 = vmatprep.subr.mxu0 0.0
        %v1670 = vand.u32 %v1263, 4294901760
        %1671 = vmatpush1.msra.mxu0 %v1670
        %1672 = vmatprep.subr.mxu0 0.0
        %v1673 = vand.u32 %v1264, 4294901760
        %1674 = vmatpush1.msra.mxu0 %v1673
        %1675 = vmatprep.subr.mxu0 0.0
        %v1676 = vand.u32 %v1265, 4294901760
        %1677 = vmatpush1.msra.mxu0 %v1676
        %1678 = vmatprep.subr.mxu0 0.0
        %v1679 = vand.u32 %v1266, 4294901760
        %1680 = vmatpush1.msra.mxu0 %v1679
        %1681 = vmatprep.subr.mxu0 0.0
        %v1682 = vand.u32 %v1267, 4294901760
        %1683 = vmatpush1.msra.mxu0 %v1682
        %1684 = vmatprep.subr.mxu0 0.0
        %v1685 = vand.u32 %v1268, 4294901760
        %1686 = vmatpush1.msra.mxu0 %v1685
        %1687 = vmatprep.subr.mxu0 0.0
        %v1688 = vand.u32 %v1269, 4294901760
        %1689 = vmatpush1.msra.mxu0 %v1688
        %1690 = vmatprep.subr.mxu0 0.0
        %v1691 = vand.u32 %v1270, 4294901760
        %1692 = vmatpush1.msra.mxu0 %v1691
        %1693 = vmatprep.subr.mxu0 0.0
        %v1694 = vand.u32 %v1271, 4294901760
        %1695 = vmatpush1.msra.mxu0 %v1694
        %1696 = vmatprep.subr.mxu0 0.0
        %1697 = vmatpush1.msra.mxu0 0.0
        %1698 = vmatprep.subr.mxu0 0.0
        %1699 = vmatpush1.msra.mxu0 0.0
        %1700 = vmatprep.subr.mxu0 0.0
        %1701 = vmatpush1.msra.mxu0 0.0
        %1702 = vmatprep.subr.mxu0 0.0
        %1703 = vmatpush1.msra.mxu0 0.0
        %1704 = vmatprep.subr.mxu0 0.0
        %1705 = vmatpush1.msra.mxu0 0.0
        %1706 = vmatprep.subr.mxu0 0.0
        %1707 = vmatpush1.msra.mxu0 0.0
        %1708 = vmatprep.subr.mxu0 0.0
        %1709 = vmatpush1.msra.mxu0 0.0
        %1710 = vmatprep.subr.mxu0 0.0
        %1711 = vmatpush1.msra.mxu0 0.0
        %1712 = vmatprep.subr.mxu0 0.0
        %1713 = vmatpush1.msra.mxu0 0.0
        %1714 = vmatprep.subr.mxu0 0.0
        %1715 = vmatpush1.msra.mxu0 0.0
        %1716 = vmatprep.subr.mxu0 0.0
        %1717 = vmatpush1.msra.mxu0 0.0
        %1718 = vmatprep.subr.mxu0 0.0
        %1719 = vmatpush1.msra.mxu0 0.0
        %1720 = vmatprep.subr.mxu0 0.0
        %1721 = vmatpush1.msra.mxu0 0.0
        %1722 = vmatprep.subr.mxu0 0.0
        %1723 = vmatpush1.msra.mxu0 0.0
        %1724 = vmatprep.subr.mxu0 0.0
        %1725 = vmatpush1.msra.mxu0 0.0
        %1726 = vmatprep.subr.mxu0 0.0
        %1727 = vmatpush1.msra.mxu0 0.0
        %1728 = vmatprep.mubr.f32.mxu0 0.0
        %v1729 = vand.u32 %v1254, 4294901760
        %v1730 = vsub.f32 %v1254, %v1729
        %v1731 = vand.u32 %v1730, 4294901760
        %1732 = vmatmul.mubr.f32.gmra.mrb[0].mxu0 %v1731
        %v1733 = vpop.f32.mrb[0].mxu0
        %v1734 = vadd.f32 %v1638, %v1733
        %v1735 = vpop.f32.mrb[0].mxu0
        %1736 = vmatprep.mubr.f32.mxu0 0.0
        %v1737 = vand.u32 %v1255, 4294901760
        %v1738 = vsub.f32 %v1255, %v1737
        %v1739 = vand.u32 %v1738, 4294901760
        %1740 = vmatmul.mubr.f32.gmra.mrb[0].mxu0 %v1739
        %v1741 = vpop.f32.mrb[0].mxu0
        %v1742 = vadd.f32 %v1645, %v1741
        %v1743 = vpop.f32.mrb[0].mxu0
        %1744 = vdwg.mxu0
        %1745 = vmatprep.subr.mxu0 0.0
        %v1746 = vand.u32 %v1256, 4294901760
        %v1747 = vsub.f32 %v1256, %v1746
        %v1748 = vand.u32 %v1747, 4294901760
        %1749 = vmatpush1.msra.mxu0 %v1748
        %1750 = vmatprep.subr.mxu0 0.0
        %v1751 = vand.u32 %v1257, 4294901760
        %v1752 = vsub.f32 %v1257, %v1751
        %v1753 = vand.u32 %v1752, 4294901760
        %1754 = vmatpush1.msra.mxu0 %v1753
        %1755 = vmatprep.subr.mxu0 0.0
        %v1756 = vand.u32 %v1258, 4294901760
        %v1757 = vsub.f32 %v1258, %v1756
        %v1758 = vand.u32 %v1757, 4294901760
        %1759 = vmatpush1.msra.mxu0 %v1758
        %1760 = vmatprep.subr.mxu0 0.0
        %v1761 = vand.u32 %v1259, 4294901760
        %v1762 = vsub.f32 %v1259, %v1761
        %v1763 = vand.u32 %v1762, 4294901760
        %1764 = vmatpush1.msra.mxu0 %v1763
        %1765 = vmatprep.subr.mxu0 0.0
        %v1766 = vand.u32 %v1260, 4294901760
        %v1767 = vsub.f32 %v1260, %v1766
        %v1768 = vand.u32 %v1767, 4294901760
        %1769 = vmatpush1.msra.mxu0 %v1768
        %1770 = vmatprep.subr.mxu0 0.0
        %v1771 = vand.u32 %v1261, 4294901760
        %v1772 = vsub.f32 %v1261, %v1771
        %v1773 = vand.u32 %v1772, 4294901760
        %1774 = vmatpush1.msra.mxu0 %v1773
        %1775 = vmatprep.subr.mxu0 0.0
        %v1776 = vand.u32 %v1262, 4294901760
        %v1777 = vsub.f32 %v1262, %v1776
        %v1778 = vand.u32 %v1777, 4294901760
        %1779 = vmatpush1.msra.mxu0 %v1778
        %1780 = vmatprep.subr.mxu0 0.0
        %v1781 = vand.u32 %v1263, 4294901760
        %v1782 = vsub.f32 %v1263, %v1781
        %v1783 = vand.u32 %v1782, 4294901760
        %1784 = vmatpush1.msra.mxu0 %v1783
        %1785 = vmatprep.subr.mxu0 0.0
        %v1786 = vand.u32 %v1264, 4294901760
        %v1787 = vsub.f32 %v1264, %v1786
        %v1788 = vand.u32 %v1787, 4294901760
        %1789 = vmatpush1.msra.mxu0 %v1788
        %1790 = vmatprep.subr.mxu0 0.0
        %v1791 = vand.u32 %v1265, 4294901760
        %v1792 = vsub.f32 %v1265, %v1791
        %v1793 = vand.u32 %v1792, 4294901760
        %1794 = vmatpush1.msra.mxu0 %v1793
        %1795 = vmatprep.subr.mxu0 0.0
        %v1796 = vand.u32 %v1266, 4294901760
        %v1797 = vsub.f32 %v1266, %v1796
        %v1798 = vand.u32 %v1797, 4294901760
        %1799 = vmatpush1.msra.mxu0 %v1798
        %1800 = vmatprep.subr.mxu0 0.0
        %v1801 = vand.u32 %v1267, 4294901760
        %v1802 = vsub.f32 %v1267, %v1801
        %v1803 = vand.u32 %v1802, 4294901760
        %1804 = vmatpush1.msra.mxu0 %v1803
        %1805 = vmatprep.subr.mxu0 0.0
        %v1806 = vand.u32 %v1268, 4294901760
        %v1807 = vsub.f32 %v1268, %v1806
        %v1808 = vand.u32 %v1807, 4294901760
        %1809 = vmatpush1.msra.mxu0 %v1808
        %1810 = vmatprep.subr.mxu0 0.0
        %v1811 = vand.u32 %v1269, 4294901760
        %v1812 = vsub.f32 %v1269, %v1811
        %v1813 = vand.u32 %v1812, 4294901760
        %1814 = vmatpush1.msra.mxu0 %v1813
        %1815 = vmatprep.subr.mxu0 0.0
        %v1816 = vand.u32 %v1270, 4294901760
        %v1817 = vsub.f32 %v1270, %v1816
        %v1818 = vand.u32 %v1817, 4294901760
        %1819 = vmatpush1.msra.mxu0 %v1818
        %1820 = vmatprep.subr.mxu0 0.0
        %v1821 = vand.u32 %v1271, 4294901760
        %v1822 = vsub.f32 %v1271, %v1821
        %v1823 = vand.u32 %v1822, 4294901760
        %1824 = vmatpush1.msra.mxu0 %v1823
        %1825 = vmatprep.subr.mxu0 0.0
        %1826 = vmatpush1.msra.mxu0 0.0
        %1827 = vmatprep.subr.mxu0 0.0
        %1828 = vmatpush1.msra.mxu0 0.0
        %1829 = vmatprep.subr.mxu0 0.0
        %1830 = vmatpush1.msra.mxu0 0.0
        %1831 = vmatprep.subr.mxu0 0.0
        %1832 = vmatpush1.msra.mxu0 0.0
        %1833 = vmatprep.subr.mxu0 0.0
        %1834 = vmatpush1.msra.mxu0 0.0
        %1835 = vmatprep.subr.mxu0 0.0
        %1836 = vmatpush1.msra.mxu0 0.0
        %1837 = vmatprep.subr.mxu0 0.0
        %1838 = vmatpush1.msra.mxu0 0.0
        %1839 = vmatprep.subr.mxu0 0.0
        %1840 = vmatpush1.msra.mxu0 0.0
        %1841 = vmatprep.subr.mxu0 0.0
        %1842 = vmatpush1.msra.mxu0 0.0
        %1843 = vmatprep.subr.mxu0 0.0
        %1844 = vmatpush1.msra.mxu0 0.0
        %1845 = vmatprep.subr.mxu0 0.0
        %1846 = vmatpush1.msra.mxu0 0.0
        %1847 = vmatprep.subr.mxu0 0.0
        %1848 = vmatpush1.msra.mxu0 0.0
        %1849 = vmatprep.subr.mxu0 0.0
        %1850 = vmatpush1.msra.mxu0 0.0
        %1851 = vmatprep.subr.mxu0 0.0
        %1852 = vmatpush1.msra.mxu0 0.0
        %1853 = vmatprep.subr.mxu0 0.0
        %1854 = vmatpush1.msra.mxu0 0.0
        %1855 = vmatprep.subr.mxu0 0.0
        %1856 = vmatpush1.msra.mxu0 0.0
        %1857 = vmatprep.mubr.f32.mxu0 0.0
        %v1858 = vand.u32 %v1254, 4294901760
        %1859 = vmatmul.mubr.f32.gmra.mrb[0].mxu0 %v1858
        %v1860 = vpop.f32.mrb[0].mxu0
        %v1861 = vadd.f32 %v1734, %v1860
        %v1862 = vpop.f32.mrb[0].mxu0
        %1863 = vmatprep.mubr.f32.mxu0 0.0
        %v1864 = vand.u32 %v1255, 4294901760
        %1865 = vmatmul.mubr.f32.gmra.mrb[0].mxu0 %v1864
        %v1866 = vpop.f32.mrb[0].mxu0
        %v1867 = vadd.f32 %v1742, %v1866
        %v1868 = vpop.f32.mrb[0].mxu0
        %1869 = vdwg.mxu0
        %1870 = vmatprep.subr.mxu0 0.0
        %v1871 = vand.u32 %v1256, 4294901760
        %1872 = vmatpush1.msra.mxu0 %v1871
        %1873 = vmatprep.subr.mxu0 0.0
        %v1874 = vand.u32 %v1257, 4294901760
        %1875 = vmatpush1.msra.mxu0 %v1874
        %1876 = vmatprep.subr.mxu0 0.0
        %v1877 = vand.u32 %v1258, 4294901760
        %1878 = vmatpush1.msra.mxu0 %v1877
        %1879 = vmatprep.subr.mxu0 0.0
        %v1880 = vand.u32 %v1259, 4294901760
        %1881 = vmatpush1.msra.mxu0 %v1880
        %1882 = vmatprep.subr.mxu0 0.0
        %v1883 = vand.u32 %v1260, 4294901760
        %1884 = vmatpush1.msra.mxu0 %v1883
        %1885 = vmatprep.subr.mxu0 0.0
        %v1886 = vand.u32 %v1261, 4294901760
        %1887 = vmatpush1.msra.mxu0 %v1886
        %1888 = vmatprep.subr.mxu0 0.0
        %v1889 = vand.u32 %v1262, 4294901760
        %1890 = vmatpush1.msra.mxu0 %v1889
        %1891 = vmatprep.subr.mxu0 0.0
        %v1892 = vand.u32 %v1263, 4294901760
        %1893 = vmatpush1.msra.mxu0 %v1892
        %1894 = vmatprep.subr.mxu0 0.0
        %v1895 = vand.u32 %v1264, 4294901760
        %1896 = vmatpush1.msra.mxu0 %v1895
        %1897 = vmatprep.subr.mxu0 0.0
        %v1898 = vand.u32 %v1265, 4294901760
        %1899 = vmatpush1.msra.mxu0 %v1898
        %1900 = vmatprep.subr.mxu0 0.0
        %v1901 = vand.u32 %v1266, 4294901760
        %1902 = vmatpush1.msra.mxu0 %v1901
        %1903 = vmatprep.subr.mxu0 0.0
        %v1904 = vand.u32 %v1267, 4294901760
        %1905 = vmatpush1.msra.mxu0 %v1904
        %1906 = vmatprep.subr.mxu0 0.0
        %v1907 = vand.u32 %v1268, 4294901760
        %1908 = vmatpush1.msra.mxu0 %v1907
        %1909 = vmatprep.subr.mxu0 0.0
        %v1910 = vand.u32 %v1269, 4294901760
        %1911 = vmatpush1.msra.mxu0 %v1910
        %1912 = vmatprep.subr.mxu0 0.0
        %v1913 = vand.u32 %v1270, 4294901760
        %1914 = vmatpush1.msra.mxu0 %v1913
        %1915 = vmatprep.subr.mxu0 0.0
        %v1916 = vand.u32 %v1271, 4294901760
        %1917 = vmatpush1.msra.mxu0 %v1916
        %1918 = vmatprep.subr.mxu0 0.0
        %1919 = vmatpush1.msra.mxu0 0.0
        %1920 = vmatprep.subr.mxu0 0.0
        %1921 = vmatpush1.msra.mxu0 0.0
        %1922 = vmatprep.subr.mxu0 0.0
        %1923 = vmatpush1.msra.mxu0 0.0
        %1924 = vmatprep.subr.mxu0 0.0
        %1925 = vmatpush1.msra.mxu0 0.0
        %1926 = vmatprep.subr.mxu0 0.0
        %1927 = vmatpush1.msra.mxu0 0.0
        %1928 = vmatprep.subr.mxu0 0.0
        %1929 = vmatpush1.msra.mxu0 0.0
        %1930 = vmatprep.subr.mxu0 0.0
        %1931 = vmatpush1.msra.mxu0 0.0
        %1932 = vmatprep.subr.mxu0 0.0
        %1933 = vmatpush1.msra.mxu0 0.0
        %1934 = vmatprep.subr.mxu0 0.0
        %1935 = vmatpush1.msra.mxu0 0.0
        %1936 = vmatprep.subr.mxu0 0.0
        %1937 = vmatpush1.msra.mxu0 0.0
        %1938 = vmatprep.subr.mxu0 0.0
        %1939 = vmatpush1.msra.mxu0 0.0
        %1940 = vmatprep.subr.mxu0 0.0
        %1941 = vmatpush1.msra.mxu0 0.0
        %1942 = vmatprep.subr.mxu0 0.0
        %1943 = vmatpush1.msra.mxu0 0.0
        %1944 = vmatprep.subr.mxu0 0.0
        %1945 = vmatpush1.msra.mxu0 0.0
        %1946 = vmatprep.subr.mxu0 0.0
        %1947 = vmatpush1.msra.mxu0 0.0
        %1948 = vmatprep.subr.mxu0 0.0
        %1949 = vmatpush1.msra.mxu0 0.0
        %1950 = vmatprep.mubr.f32.mxu0 0.0
        %v1951 = vand.u32 %v1254, 4294901760
        %1952 = vmatmul.mubr.f32.gmra.mrb[0].mxu0 %v1951
        %v1953 = vpop.f32.mrb[0].mxu0
        %v1954 = vadd.f32 %v1861, %v1953
        %v1955 = vpop.f32.mrb[0].mxu0
        %1956 = vmatprep.mubr.f32.mxu0 0.0
        %v1957 = vand.u32 %v1255, 4294901760
        %1958 = vmatmul.mubr.f32.gmra.mrb[0].mxu0 %v1957
        %v1959 = vpop.f32.mrb[0].mxu0
        %v1960 = vadd.f32 %v1867, %v1959
        %v1961 = vpop.f32.mrb[0].mxu0
        %1962 = vdwg.mxu0
        %v1963 = vmax.f32 %v1954, 0.0
        %v1964 = vmax.f32 %v1960, 0.0
        %1965 = vst [vmem:[%s349] sm:$0xff] %v1963
        %1966 = vst [vmem:[%s349 + $0x8] sm:$0xff] %v1964
        %s1967 = sand.u32 %s205, 1
        %s1968 = scalar_lea.sflag [#allocation4], %s1967
        %s1969 = sand.u32 %s205, 1
        %s1970 = smul.addr %s1969, 16
        %s1971 = scalar_lea.vmem [#allocation8], %s1970
        // Predicated region
        $region65: #{tpu_custom_call.1} parent=51 // pred_check
          %p1972 = pneg %p215
        $region66: #{tpu_custom_call.1} parent=51 // pred_check_branch
          %1974 = sbr.rel (%p1972) target = $region68
        $region67: #{tpu_custom_call.1} parent=51 // pred_region
          %s1975 = smul.u32 2, %s24
          %s1976 = ssub.s32 3, %s1975
          %p1977 = scmp.lt.s32.totalorder %s1976, 2
          %s1978 = scalar_select %p1977, %s1976, 2
          %s1979 = smul.u32 128, %s1978
          %s1981 = ssub.s32 256, %s1979
          %1982 = vsyncadd %s1968, %s1981
          %p1983 = scmp.ne.s32.totalorder 0, %s1979
          %s1984 = smul.addr %s1975, 128
          %s1985 = scalar_lea.hbm %s8, %s1984
          %s1986 = smul.u32 8, %s1978
          %s1987 = sshll.u32 %s1971, 4
          %s1988 = int_to_ptr.vmem [resolvable:$true] %s1987
          %s1989 = sshll.u32 %s1986, 4
          %1993 = dma.vmem_to_hbm [thread:$0]  (%p1983), %s1988, %s1989, %s1985, %s1968, 128, 128, 8
        $region68: #{tpu_custom_call.1} parent=51 // pred_fallthru
          _
      $region52: #{tpu_custom_call.1} parent=5 // pred_fallthru
        _
      %p1994 = scmp.le.s32.totalorder 2, %s19
      // Predicated region
      $region69: #{tpu_custom_call.1} parent=5 // pred_check
        %p1995 = pneg %p1994
      $region70: #{tpu_custom_call.1} parent=5 // pred_check_branch
        %1997 = sbr.rel (%p1995) target = $region72
      $region71: #{tpu_custom_call.1} parent=5 // pred_region
        %s1998 = ssub.s32 %s19, 2
        // Predicated region
        $region73: #{tpu_custom_call.1} parent=71 // pred_check
          %p1999 = pneg %p221
        $region74: #{tpu_custom_call.1} parent=71 // pred_check_branch
          %2001 = sbr.rel (%p1999) target = $region76
        $region75: #{tpu_custom_call.1} parent=71 // pred_region
          %s2002 = sand.u32 %s206, 1
          %s2003 = scalar_lea.sflag [#allocation4], %s2002
          %s2004 = sand.u32 %s206, 1
          %s2005 = smul.addr %s2004, 16
          %s2006 = scalar_lea.vmem [#allocation8], %s2005
          %2007 = dma.done %s2003, 256
        $region76: #{tpu_custom_call.1} parent=71 // pred_fallthru
          _
      $region72: #{tpu_custom_call.1} parent=5 // pred_fallthru
        _
    $region6: #{tpu_custom_call.1} parent=1 // loop_footer
      %s23 = sadd.s32 1, %s19
    $region7: #{tpu_custom_call.1} parent=1 // loop_footer_branch
      %18 = sbr.rel target = $region3
    $region8: #{tpu_custom_call.1} parent=1 // loop_exit
      _
    %2008 = vsyncpa [#allocation3], 1
    %s2009 = scalar_lea.sflag [#allocation3], 1
    %2010 = vsyncpa %s2009, 1
    %2011 = vsyncpa [#allocation6], 1
    %2012 = vsyncpa [#allocation4], 1
    %s2013 = scalar_lea.sflag [#allocation4], 1
    %2014 = vsyncpa %s2013, 1

// kernel: tpu_custom_call.1
$region0: #{tpu_custom_call.1}
  #allocation0 [shape = 'u32[]', space=smem, size = 0x4, offset = 0x4, fixed_abs, tag = 'smem constant byte address 0x4 - core index']
  #allocation1 [shape = 'u32[144,128]{1,0:T(1,128)}', space=vmem, size = 0x12000, scoped, tag = 'internal scratch']
  %s0 = inlined_call_operand.vmem [shape: f32[20,128], index: 0, kind: input, shape index: {}]
  %s1 = inlined_call_operand.hbm [shape: f32[4,128], index: 1, kind: input, shape index: {}]
  %s2 = inlined_call_operand.vmem [shape: f32[128,4], index: 2, kind: input, shape index: {}]
  %s3 = inlined_call_operand.vmem [shape: f32[1,4], index: 3, kind: input, shape index: {}]
  %s4 = inlined_call_operand.hbm [shape: f32[4,128], index: 4, kind: input, shape index: {}]
  %s5 = inlined_call_operand.hbm [shape: f32[4,128], index: 5, kind: input, shape index: {}]
  %s6 = inlined_call_operand.vmem [shape: f32[128,128], index: 6, kind: input, shape index: {}]
  %s7 = inlined_call_operand.vmem [shape: f32[1,128], index: 7, kind: input, shape index: {}]
  %s8 = inlined_call_operand.hbm [shape: f32[20,128], index: 8, kind: output, shape index: {}]
  %s9 = sld [smem:[#allocation0]]
  $region77: #{tpu_custom_call.1} parent=0
    _
  %s11 = ssub.s32 1, %s9
  %s12 = scalar_select 0, %s11, %s9
  $region1: #{tpu_custom_call.1} parent=0
    #allocation2 [shape = 'u8[2048]{0}', space=vmem, size = 0x800, scoped, tag = 'input window, operand 1, single buffered']
    #allocation3 [shape = 's32[2]{0}', space=sflag, size = 0x8, scoped, tag = 'scoped memory for tpu_custom_call.1']
    #allocation4 [shape = 's32[2]{0}', space=sflag, size = 0x8, scoped, tag = 'scoped memory for tpu_custom_call.1']
    #allocation5 [shape = 'u8[2048]{0}', space=vmem, size = 0x800, scoped, tag = 'input window, operand 4, single buffered']
    #allocation6 [shape = 's32[1]{0}', space=sflag, size = 0x4, scoped, tag = 'scoped memory for tpu_custom_call.1']
    #allocation7 [shape = 'u8[2048]{0}', space=vmem, size = 0x800, scoped, tag = 'input window, operand 5, single buffered']
    #allocation8 [shape = 'u8[16384]{0}', space=vmem, size = 0x4000, scoped, tag = 'output window, operand 0']
    %13 = vsyncpa [#allocation3], 0
    %14 = vsyncpa [#allocation6], 0
    %15 = vsyncpa [#allocation4], 0
    %s16 = scalar_lea.sflag [#allocation4], 1
    %17 = vsyncpa %s16, 0
    loop: start=0, step=1, limit=4
    $region2: #{tpu_custom_call.1} parent=1 // loop_pre_header
      _
    $region3: #{tpu_custom_call.1} parent=1 // loop_header
      %s19 = sphi 0, %s23
      %p20 = scmp.ge.s32.totalorder %s19, 4
      %s29 = sphi 0, %s31
      %s32 = sphi 0, %s29
      %s33 = sphi 0, %s32
      %s49 = sphi 0, %s33
      %s53 = sphi 0, %s53
      %s55 = sphi 0, %s53
      %s56 = sphi 0, %s55
      %s70 = sphi 0, %s56
      %s74 = sphi 0, %s74
      %s76 = sphi 0, %s74
      %s77 = sphi 0, %s76
      %s91 = sphi 0, %s77
      %s95 = sphi 0, %s95
      %s97 = sphi 0, %s95
      %s98 = sphi 0, %s97
      %s112 = sphi 0, %s98
      %s116 = sphi 0, %s116
      %s118 = sphi 0, %s116
      %s119 = sphi 0, %s118
      %s133 = sphi 0, %s119
      %s137 = sphi 0, %s137
      %s139 = sphi 0, %s137
      %s140 = sphi 0, %s139
      %s154 = sphi 0, %s140
      %s158 = sphi 0, %s158
      %s160 = sphi 0, %s158
      %s161 = sphi 0, %s160
      %s175 = sphi 0, %s161
      %s179 = sphi 0, %s179
      %s181 = sphi 0, %s179
      %s182 = sphi 0, %s181
      %s196 = sphi 0, %s182
      %s202 = sphi 0, %s204
      %s205 = sphi 0, %s202
      %s206 = sphi 0, %s205
      %s222 = sphi 0, %s206
    $region4: #{tpu_custom_call.1} parent=1 // loop_header_branch
      %22 = sbr.rel (%p20) target = $region8
    $region5: #{tpu_custom_call.1} parent=1 // loop_body
      %s24 = ssub.s32 %s19, 1
      %s25 = ssub.s32 %s19, 2
      %s26 = sadd.s32 %s19, 1
      %s27 = ssub.s32 %s19, %s26
      %p28 = scmp.eq.s32.totalorder %s27, 0
      %s30 = sadd.s32 %s29, 1
      %s31 = scalar_select %p28, %s29, %s30
      %p34 = pneg %p28
      %p35 = scmp.eq.s32.totalorder %s19, 1
      %p36 = por %p34, %p35
      %p37 = scmp.ne.s32.totalorder %s29, %s32
      %p38 = scmp.eq.s32.totalorder %s19, 0
      %p39 = por %p37, %p38
      %p40 = scmp.ne.s32.totalorder %s29, %s32
      %p41 = scmp.eq.s32.totalorder %s24, 1
      %p42 = por %p40, %p41
      %p43 = scmp.ne.s32.totalorder %s32, %s33
      %p44 = scmp.eq.s32.totalorder %s24, 0
      %p45 = por %p43, %p44
      %p46 = scmp.ne.s32.totalorder %s32, %s33
      %p47 = scmp.eq.s32.totalorder %s25, 1
      %p48 = por %p46, %p47
      %p50 = scmp.ne.s32.totalorder %s33, %s49
      %p51 = scmp.eq.s32.totalorder %s25, 0
      %p52 = por %p50, %p51
      %s54 = sadd.s32 %s53, 1
      %p57 = scmp.eq.s32.totalorder %s19, 1
      %p58 = scmp.ne.s32.totalorder %s53, %s55
      %p59 = scmp.eq.s32.totalorder %s19, 0
      %p60 = por %p58, %p59
      %p61 = scmp.ne.s32.totalorder %s53, %s55
      %p62 = scmp.eq.s32.totalorder %s24, 1
      %p63 = por %p61, %p62
      %p64 = scmp.ne.s32.totalorder %s55, %s56
      %p65 = scmp.eq.s32.totalorder %s24, 0
      %p66 = por %p64, %p65
      %p67 = scmp.ne.s32.totalorder %s55, %s56
      %p68 = scmp.eq.s32.totalorder %s25, 1
      %p69 = por %p67, %p68
      %p71 = scmp.ne.s32.totalorder %s56, %s70
      %p72 = scmp.eq.s32.totalorder %s25, 0
      %p73 = por %p71, %p72
      %s75 = sadd.s32 %s74, 1
      %p78 = scmp.eq.s32.totalorder %s19, 1
      %p79 = scmp.ne.s32.totalorder %s74, %s76
      %p80 = scmp.eq.s32.totalorder %s19, 0
      %p81 = por %p79, %p80
      %p82 = scmp.ne.s32.totalorder %s74, %s76
      %p83 = scmp.eq.s32.totalorder %s24, 1
      %p84 = por %p82, %p83
      %p85 = scmp.ne.s32.totalorder %s76, %s77
      %p86 = scmp.eq.s32.totalorder %s24, 0
      %p87 = por %p85, %p86
      %p88 = scmp.ne.s32.totalorder %s76, %s77
      %p89 = scmp.eq.s32.totalorder %s25, 1
      %p90 = por %p88, %p89
      %p92 = scmp.ne.s32.totalorder %s77, %s91
      %p93 = scmp.eq.s32.totalorder %s25, 0
      %p94 = por %p92, %p93
      %s96 = sadd.s32 %s95, 1
      %p99 = scmp.eq.s32.totalorder %s19, 1
      %p100 = scmp.ne.s32.totalorder %s95, %s97
      %p101 = scmp.eq.s32.totalorder %s19, 0
      %p102 = por %p100, %p101
      %p103 = scmp.ne.s32.totalorder %s95, %s97
      %p104 = scmp.eq.s32.totalorder %s24, 1
      %p105 = por %p103, %p104
      %p106 = scmp.ne.s32.totalorder %s97, %s98
      %p107 = scmp.eq.s32.totalorder %s24, 0
      %p108 = por %p106, %p107
      %p109 = scmp.ne.s32.totalorder %s97, %s98
      %p110 = scmp.eq.s32.totalorder %s25, 1
      %p111 = por %p109, %p110
      %p113 = scmp.ne.s32.totalorder %s98, %s112
      %p114 = scmp.eq.s32.totalorder %s25, 0
      %p115 = por %p113, %p114
      %s117 = sadd.s32 %s116, 1
      %p120 = scmp.eq.s32.totalorder %s19, 1
      %p121 = scmp.ne.s32.totalorder %s116, %s118
      %p122 = scmp.eq.s32.totalorder %s19, 0
      %p123 = por %p121, %p122
      %p124 = scmp.ne.s32.totalorder %s116, %s118
      %p125 = scmp.eq.s32.totalorder %s24, 1
      %p126 = por %p124, %p125
      %p127 = scmp.ne.s32.totalorder %s118, %s119
      %p128 = scmp.eq.s32.totalorder %s24, 0
      %p129 = por %p127, %p128
      %p130 = scmp.ne.s32.totalorder %s118, %s119
      %p131 = scmp.eq.s32.totalorder %s25, 1
      %p132 = por %p130, %p131
      %p134 = scmp.ne.s32.totalorder %s119, %s133
      %p135 = scmp.eq.s32.totalorder %s25, 0
      %p136 = por %p134, %p135
      %s138 = sadd.s32 %s137, 1
      %p141 = scmp.eq.s32.totalorder %s19, 1
      %p142 = scmp.ne.s32.totalorder %s137, %s139
      %p143 = scmp.eq.s32.totalorder %s19, 0
      %p144 = por %p142, %p143
      %p145 = scmp.ne.s32.totalorder %s137, %s139
      %p146 = scmp.eq.s32.totalorder %s24, 1
      %p147 = por %p145, %p146
      %p148 = scmp.ne.s32.totalorder %s139, %s140
      %p149 = scmp.eq.s32.totalorder %s24, 0
      %p150 = por %p148, %p149
      %p151 = scmp.ne.s32.totalorder %s139, %s140
      %p152 = scmp.eq.s32.totalorder %s25, 1
      %p153 = por %p151, %p152
      %p155 = scmp.ne.s32.totalorder %s140, %s154
      %p156 = scmp.eq.s32.totalorder %s25, 0
      %p157 = por %p155, %p156
      %s159 = sadd.s32 %s158, 1
      %p162 = scmp.eq.s32.totalorder %s19, 1
      %p163 = scmp.ne.s32.totalorder %s158, %s160
      %p164 = scmp.eq.s32.totalorder %s19, 0
      %p165 = por %p163, %p164
      %p166 = scmp.ne.s32.totalorder %s158, %s160
      %p167 = scmp.eq.s32.totalorder %s24, 1
      %p168 = por %p166, %p167
      %p169 = scmp.ne.s32.totalorder %s160, %s161
      %p170 = scmp.eq.s32.totalorder %s24, 0
      %p171 = por %p169, %p170
      %p172 = scmp.ne.s32.totalorder %s160, %s161
      %p173 = scmp.eq.s32.totalorder %s25, 1
      %p174 = por %p172, %p173
      %p176 = scmp.ne.s32.totalorder %s161, %s175
      %p177 = scmp.eq.s32.totalorder %s25, 0
      %p178 = por %p176, %p177
      %s180 = sadd.s32 %s179, 1
      %p183 = scmp.eq.s32.totalorder %s19, 1
      %p184 = scmp.ne.s32.totalorder %s179, %s181
      %p185 = scmp.eq.s32.totalorder %s19, 0
      %p186 = por %p184, %p185
      %p187 = scmp.ne.s32.totalorder %s179, %s181
      %p188 = scmp.eq.s32.totalorder %s24, 1
      %p189 = por %p187, %p188
      %p190 = scmp.ne.s32.totalorder %s181, %s182
      %p191 = scmp.eq.s32.totalorder %s24, 0
      %p192 = por %p190, %p191
      %p193 = scmp.ne.s32.totalorder %s181, %s182
      %p194 = scmp.eq.s32.totalorder %s25, 1
      %p195 = por %p193, %p194
      %p197 = scmp.ne.s32.totalorder %s182, %s196
      %p198 = scmp.eq.s32.totalorder %s25, 0
      %p199 = por %p197, %p198
      %s200 = ssub.s32 %s19, %s26
      %p201 = scmp.eq.s32.totalorder %s200, 0
      %s203 = sadd.s32 %s202, 1
      %s204 = scalar_select %p201, %s202, %s203
      %p207 = pneg %p201
      %p208 = scmp.eq.s32.totalorder %s19, 1
      %p209 = por %p207, %p208
      %p210 = scmp.ne.s32.totalorder %s202, %s205
      %p211 = scmp.eq.s32.totalorder %s19, 0
      %p212 = por %p210, %p211
      %p213 = scmp.ne.s32.totalorder %s202, %s205
      %p214 = scmp.eq.s32.totalorder %s24, 1
      %p215 = por %p213, %p214
      %p216 = scmp.ne.s32.totalorder %s205, %s206
      %p217 = scmp.eq.s32.totalorder %s24, 0
      %p218 = por %p216, %p217
      %p219 = scmp.ne.s32.totalorder %s205, %s206
      %p220 = scmp.eq.s32.totalorder %s25, 1
      %p221 = por %p219, %p220
      %p223 = scmp.ne.s32.totalorder %s206, %s222
      %p224 = scmp.eq.s32.totalorder %s25, 0
      %p225 = por %p223, %p224
      %p226 = scmp.le.s32.totalorder 1, %s19
      %p227 = scmp.lt.s32.totalorder %s19, 3
      %p228 = pnand %p226, %p227
      %p229 = pneg %p228
      // Predicated region
      $region9: #{tpu_custom_call.1} parent=5 // pred_check
        _
      $region10: #{tpu_custom_call.1} parent=5 // pred_check_branch
        %231 = sbr.rel (%p228) target = $region12
      $region11: #{tpu_custom_call.1} parent=5 // pred_region
        %s232 = ssub.s32 %s19, 1
        // Predicated region
        $region13: #{tpu_custom_call.1} parent=11 // pred_check
          %p233 = pneg %p66
        $region14: #{tpu_custom_call.1} parent=11 // pred_check_branch
          %235 = sbr.rel (%p233) target = $region16
        $region15: #{tpu_custom_call.1} parent=11 // pred_region
          %s237 = ssub.s32 64, 64
          %238 = vsyncadd [#allocation3], %s237
          %s240 = sshll.u32 [#allocation2], 4
          %s241 = int_to_ptr.vmem [resolvable:$true] %s240
          %243 = dma.hbm_to_vmem [thread:$0]  %s1, 64, %s241, [#allocation3]
        $region16: #{tpu_custom_call.1} parent=11 // pred_fallthru
          _
        // Predicated region
        $region17: #{tpu_custom_call.1} parent=11 // pred_check
          %p244 = pneg %p87
        $region18: #{tpu_custom_call.1} parent=11 // pred_check_branch
          %246 = sbr.rel (%p244) target = $region20
        $region19: #{tpu_custom_call.1} parent=11 // pred_region
          _
        $region20: #{tpu_custom_call.1} parent=11 // pred_fallthru
          _
        // Predicated region
        $region21: #{tpu_custom_call.1} parent=11 // pred_check
          %p247 = pneg %p108
        $region22: #{tpu_custom_call.1} parent=11 // pred_check_branch
          %249 = sbr.rel (%p247) target = $region24
        $region23: #{tpu_custom_call.1} parent=11 // pred_region
          _
        $region24: #{tpu_custom_call.1} parent=11 // pred_fallthru
          _
        // Predicated region
        $region25: #{tpu_custom_call.1} parent=11 // pred_check
          %p250 = pneg %p129
        $region26: #{tpu_custom_call.1} parent=11 // pred_check_branch
          %252 = sbr.rel (%p250) target = $region28
        $region27: #{tpu_custom_call.1} parent=11 // pred_region
          %s254 = ssub.s32 64, 64
          %255 = vsyncadd [#allocation6], %s254
          %s257 = sshll.u32 [#allocation5], 4
          %s258 = int_to_ptr.vmem [resolvable:$true] %s257
          %260 = dma.hbm_to_vmem [thread:$0]  %s4, 64, %s258, [#allocation6]
        $region28: #{tpu_custom_call.1} parent=11 // pred_fallthru
          _
        // Predicated region
        $region29: #{tpu_custom_call.1} parent=11 // pred_check
          %p261 = pneg %p150
        $region30: #{tpu_custom_call.1} parent=11 // pred_check_branch
          %263 = sbr.rel (%p261) target = $region32
        $region31: #{tpu_custom_call.1} parent=11 // pred_region
          %s265 = ssub.s32 64, 64
          %266 = vsyncadd [#allocation6], %s265
          %s268 = sshll.u32 [#allocation7], 4
          %s269 = int_to_ptr.vmem [resolvable:$true] %s268
          %271 = dma.hbm_to_vmem [thread:$0]  %s5, 64, %s269, [#allocation6]
        $region32: #{tpu_custom_call.1} parent=11 // pred_fallthru
          _
        // Predicated region
        $region33: #{tpu_custom_call.1} parent=11 // pred_check
          %p272 = pneg %p171
        $region34: #{tpu_custom_call.1} parent=11 // pred_check_branch
          %274 = sbr.rel (%p272) target = $region36
        $region35: #{tpu_custom_call.1} parent=11 // pred_region
          _
        $region36: #{tpu_custom_call.1} parent=11 // pred_fallthru
          _
        // Predicated region
        $region37: #{tpu_custom_call.1} parent=11 // pred_check
          %p275 = pneg %p192
        $region38: #{tpu_custom_call.1} parent=11 // pred_check_branch
          %277 = sbr.rel (%p275) target = $region40
        $region39: #{tpu_custom_call.1} parent=11 // pred_region
          _
        $region40: #{tpu_custom_call.1} parent=11 // pred_fallthru
          _
      $region12: #{tpu_custom_call.1} parent=5 // pred_fallthru
        _
      %p278 = scmp.lt.s32.totalorder %s19, 2
      // Predicated region
      $region41: #{tpu_custom_call.1} parent=5 // pred_check
        %p279 = pneg %p278
      $region42: #{tpu_custom_call.1} parent=5 // pred_check_branch
        %281 = sbr.rel (%p279) target = $region44
      $region43: #{tpu_custom_call.1} parent=5 // pred_region
        // Predicated region
        $region45: #{tpu_custom_call.1} parent=43 // pred_check
          %p282 = pneg %p39
        $region46: #{tpu_custom_call.1} parent=43 // pred_check_branch
          %284 = sbr.rel (%p282) target = $region48
        $region47: #{tpu_custom_call.1} parent=43 // pred_region
          %s285 = smul.u32 2, %s19
          %s286 = ssub.s32 3, %s285
          %p287 = scmp.lt.s32.totalorder %s286, 2
          %s288 = scalar_select %p287, %s286, 2
          %s289 = smul.u32 128, %s288
          %p290 = scmp.lt.s32.totalorder %s285, 2
          %s291 = scalar_select %p290, %s285, 2
          %s292 = smul.addr %s291, 8
          %s293 = scalar_lea.vmem %s0, %s292
          %s294 = smul.u32 2, %s19
          %s295 = ssub.s32 3, %s294
          %p296 = scmp.lt.s32.totalorder %s295, 2
          %s297 = scalar_select %p296, %s295, 2
          %s298 = smul.u32 128, %s297
        $region48: #{tpu_custom_call.1} parent=43 // pred_fallthru
          _
      $region44: #{tpu_custom_call.1} parent=5 // pred_fallthru
        _
      %p299 = scmp.le.s32.totalorder 1, %s19
      %p300 = scmp.lt.s32.totalorder %s19, 3
      %p301 = pnand %p299, %p300
      %p302 = pneg %p301
      // Predicated region
      $region49: #{tpu_custom_call.1} parent=5 // pred_check
        _
      $region50: #{tpu_custom_call.1} parent=5 // pred_check_branch
        %304 = sbr.rel (%p301) target = $region52
      $region51: #{tpu_custom_call.1} parent=5 // pred_region
        %s305 = ssub.s32 %s19, 1
        // Predicated region
        $region53: #{tpu_custom_call.1} parent=51 // pred_check
          %p306 = pneg %p66
        $region54: #{tpu_custom_call.1} parent=51 // pred_check_branch
          %308 = sbr.rel (%p306) target = $region56
        $region55: #{tpu_custom_call.1} parent=51 // pred_region
          %309 = dma.done [#allocation3], 64
        $region56: #{tpu_custom_call.1} parent=51 // pred_fallthru
          _
        // Predicated region
        $region57: #{tpu_custom_call.1} parent=51 // pred_check
          %p310 = pneg %p129
        $region58: #{tpu_custom_call.1} parent=51 // pred_check_branch
          %312 = sbr.rel (%p310) target = $region60
        $region59: #{tpu_custom_call.1} parent=51 // pred_region
          %313 = dma.done [#allocation6], 64
        $region60: #{tpu_custom_call.1} parent=51 // pred_fallthru
          _
        // Predicated region
        $region61: #{tpu_custom_call.1} parent=51 // pred_check
          %p314 = pneg %p150
        $region62: #{tpu_custom_call.1} parent=51 // pred_check_branch
          %316 = sbr.rel (%p314) target = $region64
        $region63: #{tpu_custom_call.1} parent=51 // pred_region
          %317 = dma.done [#allocation6], 64
        $region64: #{tpu_custom_call.1} parent=51 // pred_fallthru
          _
        %s318 = smul.u32 2, %s24
        %s319 = ssub.s32 3, %s318
        %p320 = scmp.lt.s32.totalorder %s319, 2
        %s321 = scalar_select %p320, %s319, 2
        %s322 = smul.u32 128, %s321
        %p323 = scmp.lt.s32.totalorder %s318, 2
        %s324 = scalar_select %p323, %s318, 2
        %s325 = smul.addr %s324, 8
        %s326 = scalar_lea.vmem %s0, %s325
        %p327 = pneg %p45
        %p328 = pneg %p42
        %p329 = pneg %p66
        %p330 = pneg %p63
        %p331 = pneg %p87
        %p332 = pneg %p84
        %p333 = pneg %p108
        %p334 = pneg %p105
        %p335 = pneg %p129
        %p336 = pneg %p126
        %p337 = pneg %p150
        %p338 = pneg %p147
        %p339 = pneg %p171
        %p340 = pneg %p168
        %p341 = pneg %p192
        %p342 = pneg %p189
        %p343 = pneg %p218
        %p344 = pneg %p215
        %s345 = sand.u32 %s205, 1
        %s346 = scalar_lea.sflag [#allocation4], %s345
        %s347 = sand.u32 %s205, 1
        %s348 = smul.addr %s347, 16
        %s349 = scalar_lea.vmem [#allocation8], %s348
        %s350 = smul.u32 2, %s24
        %s351 = ssub.s32 3, %s350
        %p352 = scmp.lt.s32.totalorder %s351, 2
        %s353 = scalar_select %p352, %s351, 2
        %s354 = smul.u32 128, %s353
        %p355 = scmp.lt.s32.totalorder %s350, 2
        %s356 = scalar_select %p355, %s350, 2
        %s357 = smul.addr %s356, 8
        %s358 = scalar_lea.vmem %s0, %s357
        %s359 = smul.u32 2, %s24
        %s360 = ssub.s32 3, %s359
        %p361 = scmp.lt.s32.totalorder %s360, 2
        %s362 = scalar_select %p361, %s360, 2
        %s363 = smul.u32 128, %s362
        %s364 = smul.u32 2, %s24
        %s365 = ssub.s32 3, %s364
        %p366 = scmp.lt.s32.totalorder %s365, 2
        %s367 = scalar_select %p366, %s365, 2
        %s368 = smul.u32 128, %s367
        %v369 = vld [vmem:[%s358] sm:$0xff]
        %v370 = vld [vmem:[%s358 + $0x8] sm:$0xff]
        %371 = vadd.xlane.f32.xlu0 %v369
        %v372 = vpop.xlane.xlu0 %371
        %373 = vadd.xlane.f32.xlu0 %v370
        %v374 = vpop.xlane.xlu0 %373
        %v375 = vmul.f32 %v372, 0.0078125
        %v376 = vmul.f32 %v374, 0.0078125
        %v377 = vsub.f32 %v369, %v375
        %v378 = vsub.f32 %v370, %v376
        %v379 = vmul.f32 %v377, %v377
        %v380 = vmul.f32 %v378, %v378
        %381 = vadd.xlane.f32.xlu0 %v379
        %v382 = vpop.xlane.xlu0 %381
        %383 = vadd.xlane.f32.xlu0 %v380
        %v384 = vpop.xlane.xlu0 %383
        %v385 = vmul.f32 %v382, 0.0078125
        %v386 = vmul.f32 %v384, 0.0078125
        %v387 = vld [vmem:[%s2] sm:$0xff]
        %v388 = vld [vmem:[%s2 + $0x8] sm:$0xff]
        %v389 = vld [vmem:[%s2 + $0x10] sm:$0xff]
        %v390 = vld [vmem:[%s2 + $0x18] sm:$0xff]
        %v391 = vld [vmem:[%s2 + $0x20] sm:$0xff]
        %v392 = vld [vmem:[%s2 + $0x28] sm:$0xff]
        %v393 = vld [vmem:[%s2 + $0x30] sm:$0xff]
        %v394 = vld [vmem:[%s2 + $0x38] sm:$0xff]
        %v395 = vld [vmem:[%s2 + $0x40] sm:$0xff]
        %v396 = vld [vmem:[%s2 + $0x48] sm:$0xff]
        %v397 = vld [vmem:[%s2 + $0x50] sm:$0xff]
        %v398 = vld [vmem:[%s2 + $0x58] sm:$0xff]
        %v399 = vld [vmem:[%s2 + $0x60] sm:$0xff]
        %v400 = vld [vmem:[%s2 + $0x68] sm:$0xff]
        %v401 = vld [vmem:[%s2 + $0x70] sm:$0xff]
        %v402 = vld [vmem:[%s2 + $0x78] sm:$0xff]
        %403 = vmatprep.subr.mxu0 0.0
        %404 = vmatpush1.msra.mxu0 %v387
        %405 = vmatprep.subr.mxu0 0.0
        %406 = vmatpush1.msra.mxu0 %v388
        %407 = vmatprep.subr.mxu0 0.0
        %408 = vmatpush1.msra.mxu0 %v389
        %409 = vmatprep.subr.mxu0 0.0
        %410 = vmatpush1.msra.mxu0 %v390
        %411 = vmatprep.subr.mxu0 0.0
        %412 = vmatpush1.msra.mxu0 %v391
        %413 = vmatprep.subr.mxu0 0.0
        %414 = vmatpush1.msra.mxu0 %v392
        %415 = vmatprep.subr.mxu0 0.0
        %416 = vmatpush1.msra.mxu0 %v393
        %417 = vmatprep.subr.mxu0 0.0
        %418 = vmatpush1.msra.mxu0 %v394
        %419 = vmatprep.subr.mxu0 0.0
        %420 = vmatpush1.msra.mxu0 %v395
        %421 = vmatprep.subr.mxu0 0.0
        %422 = vmatpush1.msra.mxu0 %v396
        %423 = vmatprep.subr.mxu0 0.0
        %424 = vmatpush1.msra.mxu0 %v397
        %425 = vmatprep.subr.mxu0 0.0
        %426 = vmatpush1.msra.mxu0 %v398
        %427 = vmatprep.subr.mxu0 0.0
        %428 = vmatpush1.msra.mxu0 %v399
        %429 = vmatprep.subr.mxu0 0.0
        %430 = vmatpush1.msra.mxu0 %v400
        %431 = vmatprep.subr.mxu0 0.0
        %432 = vmatpush1.msra.mxu0 %v401
        %433 = vmatprep.subr.mxu0 0.0
        %434 = vmatpush1.msra.mxu0 %v402
        %435 = vmatprep.subr.mxu0 0.0
        %436 = vmatpush1.msra.mxu0 0.0
        %437 = vmatprep.subr.mxu0 0.0
        %438 = vmatpush1.msra.mxu0 0.0
        %439 = vmatprep.subr.mxu0 0.0
        %440 = vmatpush1.msra.mxu0 0.0
        %441 = vmatprep.subr.mxu0 0.0
        %442 = vmatpush1.msra.mxu0 0.0
        %443 = vmatprep.subr.mxu0 0.0
        %444 = vmatpush1.msra.mxu0 0.0
        %445 = vmatprep.subr.mxu0 0.0
        %446 = vmatpush1.msra.mxu0 0.0
        %447 = vmatprep.subr.mxu0 0.0
        %448 = vmatpush1.msra.mxu0 0.0
        %449 = vmatprep.subr.mxu0 0.0
        %450 = vmatpush1.msra.mxu0 0.0
        %451 = vmatprep.subr.mxu0 0.0
        %452 = vmatpush1.msra.mxu0 0.0
        %453 = vmatprep.subr.mxu0 0.0
        %454 = vmatpush1.msra.mxu0 0.0
        %455 = vmatprep.subr.mxu0 0.0
        %456 = vmatpush1.msra.mxu0 0.0
        %457 = vmatprep.subr.mxu0 0.0
        %458 = vmatpush1.msra.mxu0 0.0
        %459 = vmatprep.subr.mxu0 0.0
        %460 = vmatpush1.msra.mxu0 0.0
        %461 = vmatprep.subr.mxu0 0.0
        %462 = vmatpush1.msra.mxu0 0.0
        %463 = vmatprep.subr.mxu0 0.0
        %464 = vmatpush1.msra.mxu0 0.0
        %465 = vmatprep.subr.mxu0 0.0
        %466 = vmatpush1.msra.mxu0 0.0
        %467 = vmatprep.mubr.f32.mxu0 0.0
        %468 = vmatmul.mubr.f32.gmra.mrb[0].mxu0 %v377
        %v469 = vpop.f32.mrb[0].mxu0
        %v470 = vadd.f32 0.0, %v469
        %v471 = vpop.f32.mrb[0].mxu0
        %472 = vmatprep.mubr.f32.mxu0 0.0
        %473 = vmatmul.mubr.f32.gmra.mrb[0].mxu0 %v378
        %v474 = vpop.f32.mrb[0].mxu0
        %v475 = vadd.f32 0.0, %v474
        %v476 = vpop.f32.mrb[0].mxu0
        %477 = vdwg.mxu0
        %v478 = vmul.f32 %v470, 0.015625
        %v479 = vmul.f32 %v475, 0.015625
        %v480 = vld [vmem:[%s3] sm:$0x1]
        %v482 = vlaneseq
        %v483 = vshrl.u32 %v482, 7
        %v484 = vsub.s32 0, %v483
        %v485 = vrot.slane %v480, %v484
        %v487 = vadd.f32 %v385, %v485
        %v488 = vadd.f32 %v386, %v485
        %v489 = vsub.f32 %v487, %v478
        %v490 = vsub.f32 %v488, %v479
        %v491 = vmax.f32 %v489, 0.0
        %v492 = vmax.f32 %v490, 0.0
        %v493 = vadd.f32 %v491, 1e-05
        %v494 = vadd.f32 %v492, 1e-05
        %v495 = vrsqrt.pop %v493
        %v496 = vrsqrt.pop %v494
        %v497 = vld [vmem:[#allocation2] sm:$0x1]
        %v498 = vlaneseq
        %v499 = vshrl.u32 %v498, 7
        %v500 = vsub.s32 0, %v499
        %v501 = vrot.slane %v497, %v500
        %v502 = vsub.f32 %v377, %v501
        %v503 = vsub.f32 %v378, %v501
        %505 = vset.pattern.permute.xlu0 0
        %506 = vperm.xlu0 %505, %v495
        %v507 = vpop.permute.xlu0 %506
        %510 = vset.pattern.permute.xlu0 0
        %511 = vperm.xlu0 %510, %v496
        %v512 = vpop.permute.xlu0 %511
        %v514 = vmul.f32 %v502, %v507
        %v515 = vmul.f32 %v503, %v512
        %v516 = vld [vmem:[#allocation5] sm:$0x1]
        %v517 = vlaneseq
        %v518 = vshrl.u32 %v517, 7
        %v519 = vsub.s32 0, %v518
        %v520 = vrot.slane %v516, %v519
        %v521 = vmul.f32 %v514, %v520
        %v522 = vmul.f32 %v515, %v520
        %v523 = vld [vmem:[#allocation7] sm:$0x1]
        %v524 = vlaneseq
        %v525 = vshrl.u32 %v524, 7
        %v526 = vsub.s32 0, %v525
        %v527 = vrot.slane %v523, %v526
        %v528 = vadd.f32 %v521, %v527
        %v529 = vadd.f32 %v522, %v527
        %v530 = vmul.f32 %v528, 0.01
        %v531 = vmul.f32 %v529, 0.01
        %v532 = vmax.f32 %v528, %v530
        %v533 = vmax.f32 %v529, %v531
        %v534 = vadd.f32 %v532, 0.0
        %v535 = vadd.f32 %v533, 0.0
        %v536 = vld [vmem:[#allocation2 + $0x1] sm:$0x1]
        %v537 = vlaneseq
        %v538 = vshrl.u32 %v537, 7
        %v539 = vsub.s32 0, %v538
        %v540 = vrot.slane %v536, %v539
        %v541 = vsub.f32 %v377, %v540
        %v542 = vsub.f32 %v378, %v540
        %543 = vset.pattern.permute.xlu0 1
        %544 = vperm.xlu0 %543, %v495
        %v545 = vpop.permute.xlu0 %544
        %547 = vset.pattern.permute.xlu0 1
        %548 = vperm.xlu0 %547, %v496
        %v549 = vpop.permute.xlu0 %548
        %v551 = vmul.f32 %v541, %v545
        %v552 = vmul.f32 %v542, %v549
        %v553 = vld [vmem:[#allocation5 + $0x1] sm:$0x1]
        %v554 = vlaneseq
        %v555 = vshrl.u32 %v554, 7
        %v556 = vsub.s32 0, %v555
        %v557 = vrot.slane %v553, %v556
        %v558 = vmul.f32 %v551, %v557
        %v559 = vmul.f32 %v552, %v557
        %v560 = vld [vmem:[#allocation7 + $0x1] sm:$0x1]
        %v561 = vlaneseq
        %v562 = vshrl.u32 %v561, 7
        %v563 = vsub.s32 0, %v562
        %v564 = vrot.slane %v560, %v563
        %v565 = vadd.f32 %v558, %v564
        %v566 = vadd.f32 %v559, %v564
        %v567 = vmul.f32 %v565, 0.01
        %v568 = vmul.f32 %v566, 0.01
        %v569 = vmax.f32 %v565, %v567
        %v570 = vmax.f32 %v566, %v568
        %v571 = vadd.f32 %v534, %v569
        %v572 = vadd.f32 %v535, %v570
        %v573 = vld [vmem:[#allocation2 + $0x2] sm:$0x1]
        %v574 = vlaneseq
        %v575 = vshrl.u32 %v574, 7
        %v576 = vsub.s32 0, %v575
        %v577 = vrot.slane %v573, %v576
        %v578 = vsub.f32 %v377, %v577
        %v579 = vsub.f32 %v378, %v577
        %580 = vset.pattern.permute.xlu0 2
        %581 = vperm.xlu0 %580, %v495
        %v582 = vpop.permute.xlu0 %581
        %584 = vset.pattern.permute.xlu0 2
        %585 = vperm.xlu0 %584, %v496
        %v586 = vpop.permute.xlu0 %585
        %v588 = vmul.f32 %v578, %v582
        %v589 = vmul.f32 %v579, %v586
        %v590 = vld [vmem:[#allocation5 + $0x2] sm:$0x1]
        %v591 = vlaneseq
        %v592 = vshrl.u32 %v591, 7
        %v593 = vsub.s32 0, %v592
        %v594 = vrot.slane %v590, %v593
        %v595 = vmul.f32 %v588, %v594
        %v596 = vmul.f32 %v589, %v594
        %v597 = vld [vmem:[#allocation7 + $0x2] sm:$0x1]
        %v598 = vlaneseq
        %v599 = vshrl.u32 %v598, 7
        %v600 = vsub.s32 0, %v599
        %v601 = vrot.slane %v597, %v600
        %v602 = vadd.f32 %v595, %v601
        %v603 = vadd.f32 %v596, %v601
        %v604 = vmul.f32 %v602, 0.01
        %v605 = vmul.f32 %v603, 0.01
        %v606 = vmax.f32 %v602, %v604
        %v607 = vmax.f32 %v603, %v605
        %v608 = vadd.f32 %v571, %v606
        %v609 = vadd.f32 %v572, %v607
        %v610 = vld [vmem:[#allocation2 + $0x3] sm:$0x1]
        %v611 = vlaneseq
        %v612 = vshrl.u32 %v611, 7
        %v613 = vsub.s32 0, %v612
        %v614 = vrot.slane %v610, %v613
        %v615 = vsub.f32 %v377, %v614
        %v616 = vsub.f32 %v378, %v614
        %617 = vset.pattern.permute.xlu0 3
        %618 = vperm.xlu0 %617, %v495
        %v619 = vpop.permute.xlu0 %618
        %621 = vset.pattern.permute.xlu0 3
        %622 = vperm.xlu0 %621, %v496
        %v623 = vpop.permute.xlu0 %622
        %v625 = vmul.f32 %v615, %v619
        %v626 = vmul.f32 %v616, %v623
        %v627 = vld [vmem:[#allocation5 + $0x3] sm:$0x1]
        %v628 = vlaneseq
        %v629 = vshrl.u32 %v628, 7
        %v630 = vsub.s32 0, %v629
        %v631 = vrot.slane %v627, %v630
        %v632 = vmul.f32 %v625, %v631
        %v633 = vmul.f32 %v626, %v631
        %v634 = vld [vmem:[#allocation7 + $0x3] sm:$0x1]
        %v635 = vlaneseq
        %v636 = vshrl.u32 %v635, 7
        %v637 = vsub.s32 0, %v636
        %v638 = vrot.slane %v634, %v637
        %v639 = vadd.f32 %v632, %v638
        %v640 = vadd.f32 %v633, %v638
        %v641 = vmul.f32 %v639, 0.01
        %v642 = vmul.f32 %v640, 0.01
        %v643 = vmax.f32 %v639, %v641
        %v644 = vmax.f32 %v640, %v642
        %v645 = vadd.f32 %v608, %v643
        %v646 = vadd.f32 %v609, %v644
        %v647 = vld [vmem:[%s6] sm:$0xff]
        %v648 = vld [vmem:[%s6 + $0x8] sm:$0xff]
        %v649 = vld [vmem:[%s6 + $0x10] sm:$0xff]
        %v650 = vld [vmem:[%s6 + $0x18] sm:$0xff]
        %v651 = vld [vmem:[%s6 + $0x20] sm:$0xff]
        %v652 = vld [vmem:[%s6 + $0x28] sm:$0xff]
        %v653 = vld [vmem:[%s6 + $0x30] sm:$0xff]
        %v654 = vld [vmem:[%s6 + $0x38] sm:$0xff]
        %v655 = vld [vmem:[%s6 + $0x40] sm:$0xff]
        %v656 = vld [vmem:[%s6 + $0x48] sm:$0xff]
        %v657 = vld [vmem:[%s6 + $0x50] sm:$0xff]
        %v658 = vld [vmem:[%s6 + $0x58] sm:$0xff]
        %v659 = vld [vmem:[%s6 + $0x60] sm:$0xff]
        %v660 = vld [vmem:[%s6 + $0x68] sm:$0xff]
        %v661 = vld [vmem:[%s6 + $0x70] sm:$0xff]
        %v662 = vld [vmem:[%s6 + $0x78] sm:$0xff]
        %v663 = vld [vmem:[%s7] sm:$0x1]
        %v665 = vlaneseq
        %v666 = vshrl.u32 %v665, 7
        %v667 = vsub.s32 0, %v666
        %v668 = vrot.slane %v663, %v667
        %670 = vmatprep.subr.mxu0 0.0
        %671 = vmatpush1.msra.mxu0 %v647
        %672 = vmatprep.subr.mxu0 0.0
        %673 = vmatpush1.msra.mxu0 %v648
        %674 = vmatprep.subr.mxu0 0.0
        %675 = vmatpush1.msra.mxu0 %v649
        %676 = vmatprep.subr.mxu0 0.0
        %677 = vmatpush1.msra.mxu0 %v650
        %678 = vmatprep.subr.mxu0 0.0
        %679 = vmatpush1.msra.mxu0 %v651
        %680 = vmatprep.subr.mxu0 0.0
        %681 = vmatpush1.msra.mxu0 %v652
        %682 = vmatprep.subr.mxu0 0.0
        %683 = vmatpush1.msra.mxu0 %v653
        %684 = vmatprep.subr.mxu0 0.0
        %685 = vmatpush1.msra.mxu0 %v654
        %686 = vmatprep.subr.mxu0 0.0
        %687 = vmatpush1.msra.mxu0 %v655
        %688 = vmatprep.subr.mxu0 0.0
        %689 = vmatpush1.msra.mxu0 %v656
        %690 = vmatprep.subr.mxu0 0.0
        %691 = vmatpush1.msra.mxu0 %v657
        %692 = vmatprep.subr.mxu0 0.0
        %693 = vmatpush1.msra.mxu0 %v658
        %694 = vmatprep.subr.mxu0 0.0
        %695 = vmatpush1.msra.mxu0 %v659
        %696 = vmatprep.subr.mxu0 0.0
        %697 = vmatpush1.msra.mxu0 %v660
        %698 = vmatprep.subr.mxu0 0.0
        %699 = vmatpush1.msra.mxu0 %v661
        %700 = vmatprep.subr.mxu0 0.0
        %701 = vmatpush1.msra.mxu0 %v662
        %702 = vmatprep.subr.mxu0 0.0
        %703 = vmatpush1.msra.mxu0 0.0
        %704 = vmatprep.subr.mxu0 0.0
        %705 = vmatpush1.msra.mxu0 0.0
        %706 = vmatprep.subr.mxu0 0.0
        %707 = vmatpush1.msra.mxu0 0.0
        %708 = vmatprep.subr.mxu0 0.0
        %709 = vmatpush1.msra.mxu0 0.0
        %710 = vmatprep.subr.mxu0 0.0
        %711 = vmatpush1.msra.mxu0 0.0
        %712 = vmatprep.subr.mxu0 0.0
        %713 = vmatpush1.msra.mxu0 0.0
        %714 = vmatprep.subr.mxu0 0.0
        %715 = vmatpush1.msra.mxu0 0.0
        %716 = vmatprep.subr.mxu0 0.0
        %717 = vmatpush1.msra.mxu0 0.0
        %718 = vmatprep.subr.mxu0 0.0
        %719 = vmatpush1.msra.mxu0 0.0
        %720 = vmatprep.subr.mxu0 0.0
        %721 = vmatpush1.msra.mxu0 0.0
        %722 = vmatprep.subr.mxu0 0.0
        %723 = vmatpush1.msra.mxu0 0.0
        %724 = vmatprep.subr.mxu0 0.0
        %725 = vmatpush1.msra.mxu0 0.0
        %726 = vmatprep.subr.mxu0 0.0
        %727 = vmatpush1.msra.mxu0 0.0
        %728 = vmatprep.subr.mxu0 0.0
        %729 = vmatpush1.msra.mxu0 0.0
        %730 = vmatprep.subr.mxu0 0.0
        %731 = vmatpush1.msra.mxu0 0.0
        %732 = vmatprep.subr.mxu0 0.0
        %733 = vmatpush1.msra.mxu0 0.0
        %734 = vmatprep.mubr.f32.mxu0 0.0
        %735 = vmatmul.mubr.f32.gmra.mrb[0].mxu0 %v645
        %v736 = vpop.f32.mrb[0].mxu0
        %v737 = vadd.f32 %v668, %v736
        %v738 = vpop.f32.mrb[0].mxu0
        %739 = vmatprep.mubr.f32.mxu0 0.0
        %740 = vmatmul.mubr.f32.gmra.mrb[0].mxu0 %v646
        %v741 = vpop.f32.mrb[0].mxu0
        %v742 = vadd.f32 %v668, %v741
        %v743 = vpop.f32.mrb[0].mxu0
        %744 = vdwg.mxu0
        %v745 = vmax.f32 %v737, 0.0
        %v746 = vmax.f32 %v742, 0.0
        %747 = vst [vmem:[%s349] sm:$0xff] %v745
        %748 = vst [vmem:[%s349 + $0x8] sm:$0xff] %v746
        %s749 = sand.u32 %s205, 1
        %s750 = scalar_lea.sflag [#allocation4], %s749
        %s751 = sand.u32 %s205, 1
        %s752 = smul.addr %s751, 16
        %s753 = scalar_lea.vmem [#allocation8], %s752
        // Predicated region
        $region65: #{tpu_custom_call.1} parent=51 // pred_check
          %p754 = pneg %p215
        $region66: #{tpu_custom_call.1} parent=51 // pred_check_branch
          %756 = sbr.rel (%p754) target = $region68
        $region67: #{tpu_custom_call.1} parent=51 // pred_region
          %s757 = smul.u32 2, %s24
          %s758 = ssub.s32 3, %s757
          %p759 = scmp.lt.s32.totalorder %s758, 2
          %s760 = scalar_select %p759, %s758, 2
          %s761 = smul.u32 128, %s760
          %s763 = ssub.s32 256, %s761
          %764 = vsyncadd %s750, %s763
          %p765 = scmp.ne.s32.totalorder 0, %s761
          %s766 = smul.addr %s757, 128
          %s767 = scalar_lea.hbm %s8, %s766
          %s768 = smul.u32 8, %s760
          %s769 = sshll.u32 %s753, 4
          %s770 = int_to_ptr.vmem [resolvable:$true] %s769
          %s771 = sshll.u32 %s768, 4
          %775 = dma.vmem_to_hbm [thread:$0]  (%p765), %s770, %s771, %s767, %s750, 128, 128, 8
        $region68: #{tpu_custom_call.1} parent=51 // pred_fallthru
          _
      $region52: #{tpu_custom_call.1} parent=5 // pred_fallthru
        _
      %p776 = scmp.le.s32.totalorder 2, %s19
      // Predicated region
      $region69: #{tpu_custom_call.1} parent=5 // pred_check
        %p777 = pneg %p776
      $region70: #{tpu_custom_call.1} parent=5 // pred_check_branch
        %779 = sbr.rel (%p777) target = $region72
      $region71: #{tpu_custom_call.1} parent=5 // pred_region
        %s780 = ssub.s32 %s19, 2
        // Predicated region
        $region73: #{tpu_custom_call.1} parent=71 // pred_check
          %p781 = pneg %p221
        $region74: #{tpu_custom_call.1} parent=71 // pred_check_branch
          %783 = sbr.rel (%p781) target = $region76
        $region75: #{tpu_custom_call.1} parent=71 // pred_region
          %s784 = sand.u32 %s206, 1
          %s785 = scalar_lea.sflag [#allocation4], %s784
          %s786 = sand.u32 %s206, 1
          %s787 = smul.addr %s786, 16
          %s788 = scalar_lea.vmem [#allocation8], %s787
          %789 = dma.done %s785, 256
        $region76: #{tpu_custom_call.1} parent=71 // pred_fallthru
          _
      $region72: #{tpu_custom_call.1} parent=5 // pred_fallthru
        _
    $region6: #{tpu_custom_call.1} parent=1 // loop_footer
      %s23 = sadd.s32 1, %s19
    $region7: #{tpu_custom_call.1} parent=1 // loop_footer_branch
      %18 = sbr.rel target = $region3
    $region8: #{tpu_custom_call.1} parent=1 // loop_exit
      _
    %790 = vsyncpa [#allocation3], 1
    %s791 = scalar_lea.sflag [#allocation3], 1
    %792 = vsyncpa %s791, 1
    %793 = vsyncpa [#allocation6], 1
    %794 = vsyncpa [#allocation4], 1
    %s795 = scalar_lea.sflag [#allocation4], 1
    %796 = vsyncpa %s795, 1

</llo_original>
